<compile_context>
chip_gen: v7x
topology: tpu7x:2x2x1
jax: 0.10.0
libtpu: 0.0.40
codegen_flags: <defaults>
</compile_context>

<pallas_src>
import functools

import jax
import jax.numpy as jnp
from jax.experimental import pallas as pl
from jax.experimental.pallas import tpu as pltpu

GN_EPS = 1e-5


def _round_up(x, m):
    return (x + m - 1) // m * m


# ----------------------------------------------------------------------------
# Pallas kernel: one `Att` layer, tiled over (target tile i, context tile j).
# ----------------------------------------------------------------------------
def make_att_kernel(dist_th, mm_dtype):
    th2 = float(dist_th) * float(dist_th)

    def att_kernel(
        flags_ref,                                   # [ni, nj] int32 (SMEM prefetch)
        ai_ref, aj_ref, ci_ref, cj_ref, bi_ref, bj_ref,
        wd1_ref, bd1_ref, wd2_ref, gd2_ref, bd2_ref,
        wqa_ref, gq_ref, bq_ref,
        wc1d_ref, wc1q_ref, wc1c_ref, gc1_ref, bc1_ref,
        wc2_ref, gn_g_ref, gn_b_ref,
        wlin_ref, glin_ref, blin_ref,
        out_ref,
        acc_ref, qc_ref, abase_ref,
    ):
        i = pl.program_id(0)
        j = pl.program_id(1)
        nj = pl.num_programs(1)

        tm, D = out_ref.shape
        tn = aj_ref.shape[0]
        C = wd2_ref.shape[0]

        def relu(x):
            return jnp.maximum(x, 0.0)

        def gn1(x, g, b):
            # Single-group GroupNorm == per-row norm; one-pass statistics.
            m = jnp.mean(x, axis=-1, keepdims=True)
            m2 = jnp.mean(x * x, axis=-1, keepdims=True)
            var = jnp.maximum(m2 - m * m, 0.0)
            return (x - m) * (jax.lax.rsqrt(var + GN_EPS) * g) + b

        def mm(x, w):
            # Native MXU path: bf16 operands, f32 accumulation.
            return jnp.dot(x.astype(mm_dtype), w,
                           preferred_element_type=jnp.float32)

        # ---- j == 0: init accumulator, target-only projections (once / i) --
        @pl.when(j == 0)
        def _():
            acc_ref[...] = jnp.zeros_like(acc_ref)
            ai = ai_ref[...]
            t = mm(ai, wqa_ref[...])                     # fused [wq | wagt] -> [tm, C+D]
            q = relu(gn1(t[:, :C], gq_ref[...], bq_ref[...]))   # self.query
            qc_ref[...] = mm(q, wc1q_ref[...])           # query slice of wc1
            abase_ref[...] = t[:, C:]                    # self.agt(agts), no bias

        # ---- edge block: only if this (i, j) tile has at least one edge ----
        @pl.when(flags_ref[i, j] > 0)
        def _():
            ci = ci_ref[...]                             # [tm, 2]
            cj = cj_ref[...]                             # [tn, 2]
            dx = ci[:, 0:1] - jnp.transpose(cj[:, 0:1])  # [tm, tn] (agt - ctx)
            dy = ci[:, 1:2] - jnp.transpose(cj[:, 1:2])
            d2 = dx * dx + dy * dy                       # squared distance (no sqrt)
            same = (bi_ref[...] - jnp.transpose(bj_ref[...])) == 0.0
            mask = jnp.where(jnp.logical_and(d2 <= th2, same), 1.0, 0.0)

            # self.dist : Linear(2,C)+b -> ReLU -> Linear(C,C,GN) -> ReLU
            wd1 = wd1_ref[...]
            h = (dx[:, :, None] * wd1[0:1, :][None, :, :]
                 + dy[:, :, None] * wd1[1:2, :][None, :, :]
                 + bd1_ref[...][None, :, :])             # [tm, tn, C]  (f32 VPU)
            h = relu(h).reshape(tm * tn, C)
            h = relu(gn1(mm(h, wd2_ref[...]), gd2_ref[...], bd2_ref[...]))

            # self.ctx first Linear(3C,D,GN): concat(dist,query,ctx) @ wc1
            pre = mm(h, wc1d_ref[...]).reshape(tm, tn, D)
            pre = (pre
                   + qc_ref[...][:, None, :]
                   + mm(aj_ref[...], wc1c_ref[...])[None, :, :])
            e = relu(gn1(pre.reshape(tm * tn, D), gc1_ref[...], bc1_ref[...]))
            e = e.reshape(tm, tn, D)

            # Masked reduce over context BEFORE wc2 (wc2 has no bias, so
            # sum_j mask*(x @ wc2) == (sum_j mask*x) @ wc2).  This is the
            # index_add_ over the selected edges.
            acc_ref[...] += jnp.sum(e * mask[:, :, None], axis=1)

        # ---- j == last: wc2, agt + aggregate, norm, relu, linear, residual -
        @pl.when(j == nj - 1)
        def _():
            a = abase_ref[...] + mm(acc_ref[...], wc2_ref[...])
            a = relu(gn1(a, gn_g_ref[...], gn_b_ref[...]))
            a = gn1(mm(a, wlin_ref[...]), glin_ref[...], blin_ref[...])
            out_ref[...] = (a + ai_ref[...]).astype(out_ref.dtype)

    return att_kernel


# ----------------------------------------------------------------------------
# Wrapper: padding, block-sparsity flags, grid/BlockSpec setup.
# ----------------------------------------------------------------------------
def att_layer(actors, ctrs, bid, p, dist_th, *, tile=128,
              mm_dtype=jnp.bfloat16):
    N, D = actors.shape

    tm = tn = min(tile, _round_up(N, 8))
    Np = _round_up(N, tm)
    ni, nj = Np // tm, Np // tn

    pad = Np - N
    if pad:
        actors_p = jnp.pad(actors, ((0, pad), (0, 0)))
        ctrs_p = jnp.pad(ctrs, ((0, pad), (0, 0)))
        bid_p = jnp.pad(bid, ((0, pad), (0, 0)), constant_values=-1.0)
    else:
        actors_p, ctrs_p, bid_p = actors, ctrs, bid

    # Block-sparsity map: does tile (i, j) contain at least one edge?
    # (slightly inflated threshold keeps the skip strictly conservative)
    dvec = ctrs_p[:, None, :] - ctrs_p[None, :, :]
    d2 = jnp.sum(dvec * dvec, axis=-1)
    same = bid_p[:, 0][:, None] == bid_p[:, 0][None, :]
    emask = jnp.logical_and(d2 <= dist_th * dist_th + 1e-4, same)
    tile_flags = emask.reshape(ni, tm, nj, tn).any(axis=(1, 3)).astype(jnp.int32)

    cast = lambda w: w.astype(mm_dtype)
    # Fused target-side weight: actors @ [wq | wagt] in one MXU pass.
    wqa = jnp.concatenate([p["wq"], p["wagt"]], axis=1)
    weights = (
        p["wd1"], p["bd1"], cast(p["wd2"]), p["gd2"], p["bd2"],
        cast(wqa), p["gq"], p["bq"],
        cast(p["wc1d"]), cast(p["wc1q"]), cast(p["wc1c"]), p["gc1"], p["bc1"],
        cast(p["wc2"]), p["gn_g"], p["gn_b"],
        cast(p["wlin"]), p["glin"], p["blin"],
    )

    def wspec(w):
        return pl.BlockSpec(w.shape, lambda i, j, flags: (0, 0))

    in_specs = [
        pl.BlockSpec((tm, D), lambda i, j, flags: (i, 0)),   # target actors
        pl.BlockSpec((tn, D), lambda i, j, flags: (j, 0)),   # context actors
        pl.BlockSpec((tm, 2), lambda i, j, flags: (i, 0)),   # target centers
        pl.BlockSpec((tn, 2), lambda i, j, flags: (j, 0)),   # context centers
        pl.BlockSpec((tm, 1), lambda i, j, flags: (i, 0)),   # target batch id
        pl.BlockSpec((tn, 1), lambda i, j, flags: (j, 0)),   # context batch id
    ] + [wspec(w) for w in weights]

    grid_spec = pltpu.PrefetchScalarGridSpec(
        num_scalar_prefetch=1,
        grid=(ni, nj),
        in_specs=in_specs,
        out_specs=pl.BlockSpec((tm, D), lambda i, j, flags: (i, 0)),
        scratch_shapes=[pltpu.VMEM((tm, D), jnp.float32)] * 3,
    )

    out = pl.pallas_call(
        make_att_kernel(dist_th, mm_dtype),
        grid_spec=grid_spec,
        out_shape=jax.ShapeDtypeStruct((Np, D), actors.dtype),
        compiler_params=pltpu.CompilerParams(
            dimension_semantics=("parallel", "arbitrary"),
            vmem_limit_bytes=32 * 1024 * 1024,
        ),
    )(tile_flags, actors_p, actors_p, ctrs_p, ctrs_p, bid_p, bid_p, *weights)

    return out[:N]


def net_forward(actors, ctrs, bid, params_list, dist_th):
    # A2A: two Att layers, same centers / batch ids each time.
    # TODO(synk): fusing both layers into one pallas_call (keeping actors
    # VMEM-resident) needs a cross-tile barrier between layers; kept as two calls.
    for p in params_list:
        actors = att_layer(actors, ctrs, bid, p, dist_th)
    return actors


# ----------------------------------------------------------------------------
# Deterministic parameter construction (shapes from Att.__init__, ng=1, GN).
# ----------------------------------------------------------------------------
def init_att_params(key, n_agt, n_ctx):
    ks = jax.random.split(key, 16)
    s = 0.2

    def w(k, shape):
        return jax.random.normal(k, shape, jnp.float32) * s

    def gamma(k, n):
        return 1.0 + 0.05 * jax.random.normal(k, (1, n), jnp.float32)

    def beta(k, n):
        return 0.05 * jax.random.normal(k, (1, n), jnp.float32)

    wc1 = w(ks[6], (3 * n_ctx, n_agt))
    p = {
        # self.dist
        "wd1": w(ks[0], (2, n_ctx)),
        "bd1": 0.05 * jax.random.normal(ks[1], (1, n_ctx), jnp.float32),
        "wd2": w(ks[2], (n_ctx, n_ctx)),
        "gd2": gamma(ks[3], n_ctx),
        "bd2": beta(ks[3], n_ctx),
        # self.query
        "wq": w(ks[4], (n_agt, n_ctx)),
        "gq": gamma(ks[5], n_ctx),
        "bq": beta(ks[5], n_ctx),
        # self.ctx
        "wc1": wc1,
        "wc1d": wc1[:n_ctx],
        "wc1q": wc1[n_ctx:2 * n_ctx],
        "wc1c": wc1[2 * n_ctx:],
        "gc1": gamma(ks[7], n_agt),
        "bc1": beta(ks[7], n_agt),
        "wc2": w(ks[8], (n_agt, n_agt)),
        # self.agt / self.norm / self.linear
        "wagt": w(ks[9], (n_agt, n_agt)),
        "gn_g": gamma(ks[10], n_agt),
        "gn_b": beta(ks[10], n_agt),
        "wlin": w(ks[11], (n_agt, n_agt)),
        "glin": gamma(ks[12], n_agt),
        "blin": beta(ks[12], n_agt),
    }
    return p


# ----------------------------------------------------------------------------
# Pure-JAX reference, faithful to the PyTorch gather / index_add_ formulation.
# mm_dtype=None  -> full f32 matmuls;
# mm_dtype=bf16  -> same operand quantization as the kernel (isolates kernel
#                   logic errors from MXU precision).
# ----------------------------------------------------------------------------
def ref_att(actors, ctrs, batch_id, p, dist_th, mm_dtype=None):
    if mm_dtype is None:
        def mmr(x, w):
            return jnp.dot(x, w, precision=jax.lax.Precision.HIGHEST)
    else:
        def mmr(x, w):
            return jnp.dot(x.astype(mm_dtype), w.astype(mm_dtype),
                           preferred_element_type=jnp.float32)

    def gn(x, g, b):
        mu = x.mean(-1, keepdims=True)
        var = ((x - mu) ** 2).mean(-1, keepdims=True)
        return (x - mu) / jnp.sqrt(var + GN_EPS) * g + b

    res = actors
    d = ctrs[:, None, :] - ctrs[None, :, :]
    dist = jnp.sqrt(jnp.sum(d ** 2, axis=2))
    same = batch_id[:, None] == batch_id[None, :]
    mask = (dist <= dist_th) & same
    hi, wi = jnp.nonzero(mask)                       # concrete (not jitted)

    dvec = ctrs[hi] - ctrs[wi]
    h = jnp.maximum(
        jnp.dot(dvec, p["wd1"], precision=jax.lax.Precision.HIGHEST) + p["bd1"],
        0.0)
    h = jnp.maximum(gn(mmr(h, p["wd2"]), p["gd2"], p["bd2"]), 0.0)
    q = jnp.maximum(gn(mmr(actors[hi], p["wq"]), p["gq"], p["bq"]), 0.0)
    c = actors[wi]
    cat = jnp.concatenate([h, q, c], axis=1)
    e = mmr(jnp.maximum(gn(mmr(cat, p["wc1"]), p["gc1"], p["bc1"]), 0.0),
            p["wc2"])

    a = mmr(actors, p["wagt"])
    a = a.at[hi].add(e)                              # index_add_
    a = jnp.maximum(gn(a, p["gn_g"], p["gn_b"]), 0.0)
    a = gn(mmr(a, p["wlin"]), p["glin"], p["blin"])
    return a + res


def ref_net(actors, ctrs, batch_id, params_list, dist_th, mm_dtype=None):
    for p in params_list:
        actors = ref_att(actors, ctrs, batch_id, p, dist_th, mm_dtype)
    return actors


# ----------------------------------------------------------------------------
if __name__ == "__main__":
    config = {"n_actor": 32, "n_map": 32, "actor2actor_dist": 6.0}
    n_actor = config["n_actor"]
    dist_th = config["actor2actor_dist"]

    # 2 scenes, 4 actors each -> 8 actors total.
    N = 8
    key = jax.random.PRNGKey(0)
    k_act, k_ctr, k_p0, k_p1 = jax.random.split(key, 4)

    actors = jax.random.normal(k_act, (N, n_actor), jnp.float32)
    actor_ctrs = 10.0 * jax.random.uniform(k_ctr, (N, 2), jnp.float32)
    batch_id = jnp.array([0, 0, 0, 0, 1, 1, 1, 1], dtype=jnp.int32)
    bid_f = batch_id.astype(jnp.float32).reshape(N, 1)

    # Two Att layers (A2A has 2), each with its own weights.
    params_list = [
        init_att_params(k_p0, n_actor, n_actor),
        init_att_params(k_p1, n_actor, n_actor),
    ]

    fwd = jax.jit(functools.partial(net_forward, dist_th=dist_th))
    out = jax.block_until_ready(fwd(actors, actor_ctrs, bid_f, params_list))

    # Reference with matched operand quantization (bf16 matmul inputs, f32
    # accumulation) isolates kernel-logic errors from MXU precision ...
    ref_b = ref_net(actors, actor_ctrs, batch_id, params_list, dist_th,
                    mm_dtype=jnp.bfloat16)
    # ... plus a loose sanity bound against the pure-f32 reference.
    ref_f = ref_net(actors, actor_ctrs, batch_id, params_list, dist_th)

    assert out.shape == (N, n_actor)
    err_b = float(jnp.max(jnp.abs(out - ref_b)))
    assert jnp.allclose(out, ref_b, atol=5e-2, rtol=5e-2), err_b
    err_f = float(jnp.max(jnp.abs(out - ref_f)))
    assert err_f < 0.5, err_f
    print("KERNEL_OK")
</pallas_src>

<mosaic_0001>
module attributes {stable_mosaic.version = 11 : i64} {
  func.func @att_kernel(%arg0: i32, %arg1: i32, %arg2: memref<1x1xi32, #tpu.memory_space<smem>>, %arg3: memref<8x32xf32, #tpu.memory_space<vmem>>, %arg4: memref<8x32xf32, #tpu.memory_space<vmem>>, %arg5: memref<8x2xf32, #tpu.memory_space<vmem>>, %arg6: memref<8x2xf32, #tpu.memory_space<vmem>>, %arg7: memref<8x1xf32, #tpu.memory_space<vmem>>, %arg8: memref<8x1xf32, #tpu.memory_space<vmem>>, %arg9: memref<2x32xf32, #tpu.memory_space<vmem>>, %arg10: memref<1x32xf32, #tpu.memory_space<vmem>>, %arg11: memref<32x32xbf16, #tpu.memory_space<vmem>>, %arg12: memref<1x32xf32, #tpu.memory_space<vmem>>, %arg13: memref<1x32xf32, #tpu.memory_space<vmem>>, %arg14: memref<32x64xbf16, #tpu.memory_space<vmem>>, %arg15: memref<1x32xf32, #tpu.memory_space<vmem>>, %arg16: memref<1x32xf32, #tpu.memory_space<vmem>>, %arg17: memref<32x32xbf16, #tpu.memory_space<vmem>>, %arg18: memref<32x32xbf16, #tpu.memory_space<vmem>>, %arg19: memref<32x32xbf16, #tpu.memory_space<vmem>>, %arg20: memref<1x32xf32, #tpu.memory_space<vmem>>, %arg21: memref<1x32xf32, #tpu.memory_space<vmem>>, %arg22: memref<32x32xbf16, #tpu.memory_space<vmem>>, %arg23: memref<1x32xf32, #tpu.memory_space<vmem>>, %arg24: memref<1x32xf32, #tpu.memory_space<vmem>>, %arg25: memref<32x32xbf16, #tpu.memory_space<vmem>>, %arg26: memref<1x32xf32, #tpu.memory_space<vmem>>, %arg27: memref<1x32xf32, #tpu.memory_space<vmem>>, %arg28: memref<8x32xf32, #tpu.memory_space<vmem>>, %arg29: memref<8x32xf32, #tpu.memory_space<vmem>>, %arg30: memref<8x32xf32, #tpu.memory_space<vmem>>, %arg31: memref<8x32xf32, #tpu.memory_space<vmem>>) attributes {dimension_semantics = [#tpu.dimension_semantics<parallel>, #tpu.dimension_semantics<arbitrary>], iteration_bounds = array<i64: 1, 1>, scalar_prefetch = 1 : i64, scratch_operands = 3 : i64, tpu.core_type = #tpu.core_type<tc>, window_params = [{transform_indices = @transform_0, window_bounds = array<i64: 8, 32>}, {transform_indices = @transform_1, window_bounds = array<i64: 8, 32>}, {transform_indices = @transform_2, window_bounds = array<i64: 8, 2>}, {transform_indices = @transform_3, window_bounds = array<i64: 8, 2>}, {transform_indices = @transform_4, window_bounds = array<i64: 8, 1>}, {transform_indices = @transform_5, window_bounds = array<i64: 8, 1>}, {pipeline_mode = #tpu.pipeline_mode<synchronous>, transform_indices = @transform_6, window_bounds = array<i64: 2, 32>}, {pipeline_mode = #tpu.pipeline_mode<synchronous>, transform_indices = @transform_7, window_bounds = array<i64: 1, 32>}, {pipeline_mode = #tpu.pipeline_mode<synchronous>, transform_indices = @transform_8, window_bounds = array<i64: 32, 32>}, {pipeline_mode = #tpu.pipeline_mode<synchronous>, transform_indices = @transform_9, window_bounds = array<i64: 1, 32>}, {pipeline_mode = #tpu.pipeline_mode<synchronous>, transform_indices = @transform_10, window_bounds = array<i64: 1, 32>}, {pipeline_mode = #tpu.pipeline_mode<synchronous>, transform_indices = @transform_11, window_bounds = array<i64: 32, 64>}, {pipeline_mode = #tpu.pipeline_mode<synchronous>, transform_indices = @transform_12, window_bounds = array<i64: 1, 32>}, {pipeline_mode = #tpu.pipeline_mode<synchronous>, transform_indices = @transform_13, window_bounds = array<i64: 1, 32>}, {pipeline_mode = #tpu.pipeline_mode<synchronous>, transform_indices = @transform_14, window_bounds = array<i64: 32, 32>}, {pipeline_mode = #tpu.pipeline_mode<synchronous>, transform_indices = @transform_15, window_bounds = array<i64: 32, 32>}, {pipeline_mode = #tpu.pipeline_mode<synchronous>, transform_indices = @transform_16, window_bounds = array<i64: 32, 32>}, {pipeline_mode = #tpu.pipeline_mode<synchronous>, transform_indices = @transform_17, window_bounds = array<i64: 1, 32>}, {pipeline_mode = #tpu.pipeline_mode<synchronous>, transform_indices = @transform_18, window_bounds = array<i64: 1, 32>}, {pipeline_mode = #tpu.pipeline_mode<synchronous>, transform_indices = @transform_19, window_bounds = array<i64: 32, 32>}, {pipeline_mode = #tpu.pipeline_mode<synchronous>, transform_indices = @transform_20, window_bounds = array<i64: 1, 32>}, {pipeline_mode = #tpu.pipeline_mode<synchronous>, transform_indices = @transform_21, window_bounds = array<i64: 1, 32>}, {pipeline_mode = #tpu.pipeline_mode<synchronous>, transform_indices = @transform_22, window_bounds = array<i64: 32, 32>}, {pipeline_mode = #tpu.pipeline_mode<synchronous>, transform_indices = @transform_23, window_bounds = array<i64: 1, 32>}, {pipeline_mode = #tpu.pipeline_mode<synchronous>, transform_indices = @transform_24, window_bounds = array<i64: 1, 32>}, {transform_indices = @transform_25, window_bounds = array<i64: 8, 32>}]} {
    %c0_i32 = arith.constant 0 : i32
    %0 = arith.cmpi eq, %arg1, %c0_i32 : i32
    %1 = arith.extui %0 : i1 to i32
    %c0_i32_0 = arith.constant 0 : i32
    %2 = arith.cmpi ne, %1, %c0_i32_0 : i32
    scf.if %2 {
      %cst = arith.constant 0.000000e+00 : f32
      %12 = vector.broadcast %cst : f32 to vector<8x32xf32>
      %c0 = arith.constant 0 : index
      %c0_5 = arith.constant 0 : index
      %13 = vector.load %arg29[%c0, %c0_5] : memref<8x32xf32, #tpu.memory_space<vmem>>, vector<8x32xf32>
      tpu.vector_store %arg29[%c0, %c0_5], %12 {strides = array<i32>} : memref<8x32xf32, #tpu.memory_space<vmem>>, vector<8x32xf32>,
      %c0_6 = arith.constant 0 : index
      %c0_7 = arith.constant 0 : index
      %14 = vector.load %arg3[%c0_6, %c0_7] : memref<8x32xf32, #tpu.memory_space<vmem>>, vector<8x32xf32>
      %c0_8 = arith.constant 0 : index
      %c0_9 = arith.constant 0 : index
      %15 = vector.load %arg14[%c0_8, %c0_9] : memref<32x64xbf16, #tpu.memory_space<vmem>>, vector<32x64xbf16>
      %16 = arith.truncf %14 : vector<8x32xf32> to vector<8x32xbf16>
      %cst_10 = arith.constant dense<0.000000e+00> : vector<8x64xf32>
      %17 = tpu.matmul %16, %15, %cst_10 {dimension_numbers = #tpu.dot_dimension_numbers<[1], [0], [0], [1], [0, 0, 1, 1], [], []>} : vector<8x32xbf16>, vector<32x64xbf16>, vector<8x64xf32> -> vector<8x64xf32>
      %18 = vector.extract_strided_slice %17 {offsets = [0, 0], sizes = [8, 32], strides = [1, 1]} : vector<8x64xf32> to vector<8x32xf32>
      %c0_11 = arith.constant 0 : index
      %c0_12 = arith.constant 0 : index
      %19 = vector.load %arg15[%c0_11, %c0_12] : memref<1x32xf32, #tpu.memory_space<vmem>>, vector<1x32xf32>
      %c0_13 = arith.constant 0 : index
      %c0_14 = arith.constant 0 : index
      %20 = vector.load %arg16[%c0_13, %c0_14] : memref<1x32xf32, #tpu.memory_space<vmem>>, vector<1x32xf32>
      %cst_15 = arith.constant dense<0.000000e+00> : vector<8xf32>
      %21 = vector.multi_reduction <add>, %18, %cst_15 [1] : vector<8x32xf32> to vector<8xf32>
      %22 = vector.shape_cast %21 : vector<8xf32> to vector<8x1xf32>
      %cst_16 = arith.constant 3.200000e+01 : f32
      %23 = vector.broadcast %cst_16 : f32 to vector<8x1xf32>
      %24 = arith.divf %22, %23 : vector<8x1xf32>
      %25 = arith.mulf %18, %18 : vector<8x32xf32>
      %cst_17 = arith.constant dense<0.000000e+00> : vector<8xf32>
      %26 = vector.multi_reduction <add>, %25, %cst_17 [1] : vector<8x32xf32> to vector<8xf32>
      %27 = vector.shape_cast %26 : vector<8xf32> to vector<8x1xf32>
      %cst_18 = arith.constant 3.200000e+01 : f32
      %28 = vector.broadcast %cst_18 : f32 to vector<8x1xf32>
      %29 = arith.divf %27, %28 : vector<8x1xf32>
      %30 = arith.mulf %24, %24 : vector<8x1xf32>
      %31 = arith.subf %29, %30 : vector<8x1xf32>
      %cst_19 = arith.constant 0.000000e+00 : f32
      %32 = vector.broadcast %cst_19 : f32 to vector<8x1xf32>
      %33 = arith.maximumf %31, %32 : vector<8x1xf32>
      %34 = vector.broadcast %24 : vector<8x1xf32> to vector<8x32xf32>
      %35 = arith.subf %18, %34 : vector<8x32xf32>
      %cst_20 = arith.constant 9.99999974E-6 : f32
      %36 = vector.broadcast %cst_20 : f32 to vector<8x1xf32>
      %37 = arith.addf %33, %36 : vector<8x1xf32>
      %38 = math.rsqrt %37 : vector<8x1xf32>
      %39 = vector.broadcast %38 : vector<8x1xf32> to vector<8x32xf32>
      %40 = vector.broadcast %19 : vector<1x32xf32> to vector<8x32xf32>
      %41 = arith.mulf %39, %40 : vector<8x32xf32>
      %42 = arith.mulf %35, %41 : vector<8x32xf32>
      %43 = vector.broadcast %20 : vector<1x32xf32> to vector<8x32xf32>
      %44 = arith.addf %42, %43 : vector<8x32xf32>
      %cst_21 = arith.constant 0.000000e+00 : f32
      %45 = vector.broadcast %cst_21 : f32 to vector<8x32xf32>
      %46 = arith.maximumf %44, %45 : vector<8x32xf32>
      %c0_22 = arith.constant 0 : index
      %c0_23 = arith.constant 0 : index
      %47 = vector.load %arg18[%c0_22, %c0_23] : memref<32x32xbf16, #tpu.memory_space<vmem>>, vector<32x32xbf16>
      %48 = arith.truncf %46 : vector<8x32xf32> to vector<8x32xbf16>
      %cst_24 = arith.constant dense<0.000000e+00> : vector<8x32xf32>
      %49 = tpu.matmul %48, %47, %cst_24 {dimension_numbers = #tpu.dot_dimension_numbers<[1], [0], [0], [1], [0, 0, 1, 1], [], []>} : vector<8x32xbf16>, vector<32x32xbf16>, vector<8x32xf32> -> vector<8x32xf32>
      %c0_25 = arith.constant 0 : index
      %c0_26 = arith.constant 0 : index
      %50 = vector.load %arg30[%c0_25, %c0_26] : memref<8x32xf32, #tpu.memory_space<vmem>>, vector<8x32xf32>
      tpu.vector_store %arg30[%c0_25, %c0_26], %49 {strides = array<i32>} : memref<8x32xf32, #tpu.memory_space<vmem>>, vector<8x32xf32>,
      %51 = vector.extract_strided_slice %17 {offsets = [0, 32], sizes = [8, 32], strides = [1, 1]} : vector<8x64xf32> to vector<8x32xf32>
      %c0_27 = arith.constant 0 : index
      %c0_28 = arith.constant 0 : index
      %52 = vector.load %arg31[%c0_27, %c0_28] : memref<8x32xf32, #tpu.memory_space<vmem>>, vector<8x32xf32>
      tpu.vector_store %arg31[%c0_27, %c0_28], %51 {strides = array<i32>} : memref<8x32xf32, #tpu.memory_space<vmem>>, vector<8x32xf32>,
    } else {
    }
    %3 = arith.index_cast %arg0 : i32 to index
    %4 = arith.index_cast %arg1 : i32 to index
    %5 = memref.load %arg2[%3, %4] : memref<1x1xi32, #tpu.memory_space<smem>>
    %c0_i32_1 = arith.constant 0 : i32
    %6 = arith.cmpi sgt, %5, %c0_i32_1 : i32
    %7 = arith.extui %6 : i1 to i32
    %c0_i32_2 = arith.constant 0 : i32
    %8 = arith.cmpi ne, %7, %c0_i32_2 : i32
    scf.if %8 {
      %c0 = arith.constant 0 : index
      %c0_5 = arith.constant 0 : index
      %12 = vector.load %arg5[%c0, %c0_5] : memref<8x2xf32, #tpu.memory_space<vmem>>, vector<8x2xf32>
      %c0_6 = arith.constant 0 : index
      %c0_7 = arith.constant 0 : index
      %13 = vector.load %arg6[%c0_6, %c0_7] : memref<8x2xf32, #tpu.memory_space<vmem>>, vector<8x2xf32>
      %14 = vector.extract_strided_slice %12 {offsets = [0, 0], sizes = [8, 1], strides = [1, 1]} : vector<8x2xf32> to vector<8x1xf32>
      %15 = vector.extract_strided_slice %13 {offsets = [0, 0], sizes = [8, 1], strides = [1, 1]} : vector<8x2xf32> to vector<8x1xf32>
      %16 = tpu.transpose %15, [1, 0] : vector<8x1xf32> -> vector<1x8xf32>
      %17 = vector.broadcast %14 : vector<8x1xf32> to vector<8x8xf32>
      %18 = vector.broadcast %16 : vector<1x8xf32> to vector<8x8xf32>
      %19 = arith.subf %17, %18 : vector<8x8xf32>
      %20 = vector.extract_strided_slice %12 {offsets = [0, 1], sizes = [8, 1], strides = [1, 1]} : vector<8x2xf32> to vector<8x1xf32>
      %21 = vector.extract_strided_slice %13 {offsets = [0, 1], sizes = [8, 1], strides = [1, 1]} : vector<8x2xf32> to vector<8x1xf32>
      %22 = tpu.transpose %21, [1, 0] : vector<8x1xf32> -> vector<1x8xf32>
      %23 = vector.broadcast %20 : vector<8x1xf32> to vector<8x8xf32>
      %24 = vector.broadcast %22 : vector<1x8xf32> to vector<8x8xf32>
      %25 = arith.subf %23, %24 : vector<8x8xf32>
      %26 = arith.mulf %19, %19 : vector<8x8xf32>
      %27 = arith.mulf %25, %25 : vector<8x8xf32>
      %28 = arith.addf %26, %27 : vector<8x8xf32>
      %c0_8 = arith.constant 0 : index
      %c0_9 = arith.constant 0 : index
      %29 = vector.load %arg7[%c0_8, %c0_9] : memref<8x1xf32, #tpu.memory_space<vmem>>, vector<8x1xf32>
      %c0_10 = arith.constant 0 : index
      %c0_11 = arith.constant 0 : index
      %30 = vector.load %arg8[%c0_10, %c0_11] : memref<8x1xf32, #tpu.memory_space<vmem>>, vector<8x1xf32>
      %31 = tpu.transpose %30, [1, 0] : vector<8x1xf32> -> vector<1x8xf32>
      %32 = vector.broadcast %29 : vector<8x1xf32> to vector<8x8xf32>
      %33 = vector.broadcast %31 : vector<1x8xf32> to vector<8x8xf32>
      %34 = arith.subf %32, %33 : vector<8x8xf32>
      %cst = arith.constant 0.000000e+00 : f32
      %35 = vector.broadcast %cst : f32 to vector<8x8xf32>
      %36 = arith.cmpf oeq, %34, %35 : vector<8x8xf32>
      %cst_12 = arith.constant 3.600000e+01 : f32
      %37 = vector.broadcast %cst_12 : f32 to vector<8x8xf32>
      %38 = arith.cmpf ole, %28, %37 : vector<8x8xf32>
      %39 = arith.andi %38, %36 : vector<8x8xi1>
      %cst_13 = arith.constant 1.000000e+00 : f32
      %cst_14 = arith.constant 0.000000e+00 : f32
      %40 = vector.broadcast %cst_13 : f32 to vector<8x8xf32>
      %41 = vector.broadcast %cst_14 : f32 to vector<8x8xf32>
      %42 = arith.select %39, %40, %41 : vector<8x8xi1>, vector<8x8xf32>
      %c0_15 = arith.constant 0 : index
      %c0_16 = arith.constant 0 : index
      %43 = vector.load %arg9[%c0_15, %c0_16] : memref<2x32xf32, #tpu.memory_space<vmem>>, vector<2x32xf32>
      %44 = vector.shape_cast %19 : vector<8x8xf32> to vector<8x8x1xf32>
      %45 = vector.extract_strided_slice %43 {offsets = [0, 0], sizes = [1, 32], strides = [1, 1]} : vector<2x32xf32> to vector<1x32xf32>
      %46 = vector.shape_cast %45 : vector<1x32xf32> to vector<1x1x32xf32>
      %47 = vector.broadcast %44 : vector<8x8x1xf32> to vector<8x8x32xf32>
      %48 = vector.broadcast %46 : vector<1x1x32xf32> to vector<8x8x32xf32>
      %49 = arith.mulf %47, %48 : vector<8x8x32xf32>
      %50 = vector.shape_cast %25 : vector<8x8xf32> to vector<8x8x1xf32>
      %51 = vector.extract_strided_slice %43 {offsets = [1, 0], sizes = [1, 32], strides = [1, 1]} : vector<2x32xf32> to vector<1x32xf32>
      %52 = vector.shape_cast %51 : vector<1x32xf32> to vector<1x1x32xf32>
      %53 = vector.broadcast %50 : vector<8x8x1xf32> to vector<8x8x32xf32>
      %54 = vector.broadcast %52 : vector<1x1x32xf32> to vector<8x8x32xf32>
      %55 = arith.mulf %53, %54 : vector<8x8x32xf32>
      %56 = arith.addf %49, %55 : vector<8x8x32xf32>
      %c0_17 = arith.constant 0 : index
      %c0_18 = arith.constant 0 : index
      %57 = vector.load %arg10[%c0_17, %c0_18] : memref<1x32xf32, #tpu.memory_space<vmem>>, vector<1x32xf32>
      %58 = vector.shape_cast %57 : vector<1x32xf32> to vector<1x1x32xf32>
      %59 = vector.broadcast %58 : vector<1x1x32xf32> to vector<8x8x32xf32>
      %60 = arith.addf %56, %59 : vector<8x8x32xf32>
      %cst_19 = arith.constant 0.000000e+00 : f32
      %61 = vector.broadcast %cst_19 : f32 to vector<8x8x32xf32>
      %62 = arith.maximumf %60, %61 : vector<8x8x32xf32>
      %63 = vector.shape_cast %62 : vector<8x8x32xf32> to vector<64x32xf32>
      %c0_20 = arith.constant 0 : index
      %c0_21 = arith.constant 0 : index
      %64 = vector.load %arg11[%c0_20, %c0_21] : memref<32x32xbf16, #tpu.memory_space<vmem>>, vector<32x32xbf16>
      %65 = arith.truncf %63 : vector<64x32xf32> to vector<64x32xbf16>
      %cst_22 = arith.constant dense<0.000000e+00> : vector<64x32xf32>
      %66 = tpu.matmul %65, %64, %cst_22 {dimension_numbers = #tpu.dot_dimension_numbers<[1], [0], [0], [1], [0, 0, 1, 1], [], []>} : vector<64x32xbf16>, vector<32x32xbf16>, vector<64x32xf32> -> vector<64x32xf32>
      %c0_23 = arith.constant 0 : index
      %c0_24 = arith.constant 0 : index
      %67 = vector.load %arg12[%c0_23, %c0_24] : memref<1x32xf32, #tpu.memory_space<vmem>>, vector<1x32xf32>
      %c0_25 = arith.constant 0 : index
      %c0_26 = arith.constant 0 : index
      %68 = vector.load %arg13[%c0_25, %c0_26] : memref<1x32xf32, #tpu.memory_space<vmem>>, vector<1x32xf32>
      %cst_27 = arith.constant dense<0.000000e+00> : vector<64xf32>
      %69 = vector.multi_reduction <add>, %66, %cst_27 [1] : vector<64x32xf32> to vector<64xf32>
      %70 = vector.shape_cast %69 : vector<64xf32> to vector<64x1xf32>
      %cst_28 = arith.constant 3.200000e+01 : f32
      %71 = vector.broadcast %cst_28 : f32 to vector<64x1xf32>
      %72 = arith.divf %70, %71 : vector<64x1xf32>
      %73 = arith.mulf %66, %66 : vector<64x32xf32>
      %cst_29 = arith.constant dense<0.000000e+00> : vector<64xf32>
      %74 = vector.multi_reduction <add>, %73, %cst_29 [1] : vector<64x32xf32> to vector<64xf32>
      %75 = vector.shape_cast %74 : vector<64xf32> to vector<64x1xf32>
      %cst_30 = arith.constant 3.200000e+01 : f32
      %76 = vector.broadcast %cst_30 : f32 to vector<64x1xf32>
      %77 = arith.divf %75, %76 : vector<64x1xf32>
      %78 = arith.mulf %72, %72 : vector<64x1xf32>
      %79 = arith.subf %77, %78 : vector<64x1xf32>
      %cst_31 = arith.constant 0.000000e+00 : f32
      %80 = vector.broadcast %cst_31 : f32 to vector<64x1xf32>
      %81 = arith.maximumf %79, %80 : vector<64x1xf32>
      %82 = vector.broadcast %72 : vector<64x1xf32> to vector<64x32xf32>
      %83 = arith.subf %66, %82 : vector<64x32xf32>
      %cst_32 = arith.constant 9.99999974E-6 : f32
      %84 = vector.broadcast %cst_32 : f32 to vector<64x1xf32>
      %85 = arith.addf %81, %84 : vector<64x1xf32>
      %86 = math.rsqrt %85 : vector<64x1xf32>
      %87 = vector.broadcast %86 : vector<64x1xf32> to vector<64x32xf32>
      %88 = vector.broadcast %67 : vector<1x32xf32> to vector<64x32xf32>
      %89 = arith.mulf %87, %88 : vector<64x32xf32>
      %90 = arith.mulf %83, %89 : vector<64x32xf32>
      %91 = vector.broadcast %68 : vector<1x32xf32> to vector<64x32xf32>
      %92 = arith.addf %90, %91 : vector<64x32xf32>
      %cst_33 = arith.constant 0.000000e+00 : f32
      %93 = vector.broadcast %cst_33 : f32 to vector<64x32xf32>
      %94 = arith.maximumf %92, %93 : vector<64x32xf32>
      %c0_34 = arith.constant 0 : index
      %c0_35 = arith.constant 0 : index
      %95 = vector.load %arg17[%c0_34, %c0_35] : memref<32x32xbf16, #tpu.memory_space<vmem>>, vector<32x32xbf16>
      %96 = arith.truncf %94 : vector<64x32xf32> to vector<64x32xbf16>
      %cst_36 = arith.constant dense<0.000000e+00> : vector<64x32xf32>
      %97 = tpu.matmul %96, %95, %cst_36 {dimension_numbers = #tpu.dot_dimension_numbers<[1], [0], [0], [1], [0, 0, 1, 1], [], []>} : vector<64x32xbf16>, vector<32x32xbf16>, vector<64x32xf32> -> vector<64x32xf32>
      %98 = vector.shape_cast %97 : vector<64x32xf32> to vector<8x8x32xf32>
      %c0_37 = arith.constant 0 : index
      %c0_38 = arith.constant 0 : index
      %99 = vector.load %arg30[%c0_37, %c0_38] : memref<8x32xf32, #tpu.memory_space<vmem>>, vector<8x32xf32>
      %100 = vector.shape_cast %99 : vector<8x32xf32> to vector<8x1x32xf32>
      %101 = vector.broadcast %100 : vector<8x1x32xf32> to vector<8x8x32xf32>
      %102 = arith.addf %98, %101 : vector<8x8x32xf32>
      %c0_39 = arith.constant 0 : index
      %c0_40 = arith.constant 0 : index
      %103 = vector.load %arg4[%c0_39, %c0_40] : memref<8x32xf32, #tpu.memory_space<vmem>>, vector<8x32xf32>
      %c0_41 = arith.constant 0 : index
      %c0_42 = arith.constant 0 : index
      %104 = vector.load %arg19[%c0_41, %c0_42] : memref<32x32xbf16, #tpu.memory_space<vmem>>, vector<32x32xbf16>
      %105 = arith.truncf %103 : vector<8x32xf32> to vector<8x32xbf16>
      %cst_43 = arith.constant dense<0.000000e+00> : vector<8x32xf32>
      %106 = tpu.matmul %105, %104, %cst_43 {dimension_numbers = #tpu.dot_dimension_numbers<[1], [0], [0], [1], [0, 0, 1, 1], [], []>} : vector<8x32xbf16>, vector<32x32xbf16>, vector<8x32xf32> -> vector<8x32xf32>
      %107 = vector.shape_cast %106 : vector<8x32xf32> to vector<1x8x32xf32>
      %108 = vector.broadcast %107 : vector<1x8x32xf32> to vector<8x8x32xf32>
      %109 = arith.addf %102, %108 : vector<8x8x32xf32>
      %110 = vector.shape_cast %109 : vector<8x8x32xf32> to vector<64x32xf32>
      %c0_44 = arith.constant 0 : index
      %c0_45 = arith.constant 0 : index
      %111 = vector.load %arg20[%c0_44, %c0_45] : memref<1x32xf32, #tpu.memory_space<vmem>>, vector<1x32xf32>
      %c0_46 = arith.constant 0 : index
      %c0_47 = arith.constant 0 : index
      %112 = vector.load %arg21[%c0_46, %c0_47] : memref<1x32xf32, #tpu.memory_space<vmem>>, vector<1x32xf32>
      %cst_48 = arith.constant dense<0.000000e+00> : vector<64xf32>
      %113 = vector.multi_reduction <add>, %110, %cst_48 [1] : vector<64x32xf32> to vector<64xf32>
      %114 = vector.shape_cast %113 : vector<64xf32> to vector<64x1xf32>
      %cst_49 = arith.constant 3.200000e+01 : f32
      %115 = vector.broadcast %cst_49 : f32 to vector<64x1xf32>
      %116 = arith.divf %114, %115 : vector<64x1xf32>
      %117 = arith.mulf %110, %110 : vector<64x32xf32>
      %cst_50 = arith.constant dense<0.000000e+00> : vector<64xf32>
      %118 = vector.multi_reduction <add>, %117, %cst_50 [1] : vector<64x32xf32> to vector<64xf32>
      %119 = vector.shape_cast %118 : vector<64xf32> to vector<64x1xf32>
      %cst_51 = arith.constant 3.200000e+01 : f32
      %120 = vector.broadcast %cst_51 : f32 to vector<64x1xf32>
      %121 = arith.divf %119, %120 : vector<64x1xf32>
      %122 = arith.mulf %116, %116 : vector<64x1xf32>
      %123 = arith.subf %121, %122 : vector<64x1xf32>
      %cst_52 = arith.constant 0.000000e+00 : f32
      %124 = vector.broadcast %cst_52 : f32 to vector<64x1xf32>
      %125 = arith.maximumf %123, %124 : vector<64x1xf32>
      %126 = vector.broadcast %116 : vector<64x1xf32> to vector<64x32xf32>
      %127 = arith.subf %110, %126 : vector<64x32xf32>
      %cst_53 = arith.constant 9.99999974E-6 : f32
      %128 = vector.broadcast %cst_53 : f32 to vector<64x1xf32>
      %129 = arith.addf %125, %128 : vector<64x1xf32>
      %130 = math.rsqrt %129 : vector<64x1xf32>
      %131 = vector.broadcast %130 : vector<64x1xf32> to vector<64x32xf32>
      %132 = vector.broadcast %111 : vector<1x32xf32> to vector<64x32xf32>
      %133 = arith.mulf %131, %132 : vector<64x32xf32>
      %134 = arith.mulf %127, %133 : vector<64x32xf32>
      %135 = vector.broadcast %112 : vector<1x32xf32> to vector<64x32xf32>
      %136 = arith.addf %134, %135 : vector<64x32xf32>
      %cst_54 = arith.constant 0.000000e+00 : f32
      %137 = vector.broadcast %cst_54 : f32 to vector<64x32xf32>
      %138 = arith.maximumf %136, %137 : vector<64x32xf32>
      %139 = vector.shape_cast %138 : vector<64x32xf32> to vector<8x8x32xf32>
      %c0_55 = arith.constant 0 : index
      %c0_56 = arith.constant 0 : index
      %140 = vector.load %arg29[%c0_55, %c0_56] : memref<8x32xf32, #tpu.memory_space<vmem>>, vector<8x32xf32>
      %141 = vector.shape_cast %42 : vector<8x8xf32> to vector<8x8x1xf32>
      %142 = vector.broadcast %141 : vector<8x8x1xf32> to vector<8x8x32xf32>
      %143 = arith.mulf %139, %142 : vector<8x8x32xf32>
      %cst_57 = arith.constant dense<0.000000e+00> : vector<8x32xf32>
      %144 = vector.multi_reduction <add>, %143, %cst_57 [1] : vector<8x8x32xf32> to vector<8x32xf32>
      %145 = arith.addf %140, %144 : vector<8x32xf32>
      %c0_58 = arith.constant 0 : index
      %c0_59 = arith.constant 0 : index
      %146 = vector.load %arg29[%c0_58, %c0_59] : memref<8x32xf32, #tpu.memory_space<vmem>>, vector<8x32xf32>
      tpu.vector_store %arg29[%c0_58, %c0_59], %145 {strides = array<i32>} : memref<8x32xf32, #tpu.memory_space<vmem>>, vector<8x32xf32>,
    } else {
    }
    %c0_i32_3 = arith.constant 0 : i32
    %9 = arith.cmpi eq, %arg1, %c0_i32_3 : i32
    %10 = arith.extui %9 : i1 to i32
    %c0_i32_4 = arith.constant 0 : i32
    %11 = arith.cmpi ne, %10, %c0_i32_4 : i32
    scf.if %11 {
      %c0 = arith.constant 0 : index
      %c0_5 = arith.constant 0 : index
      %12 = vector.load %arg31[%c0, %c0_5] : memref<8x32xf32, #tpu.memory_space<vmem>>, vector<8x32xf32>
      %c0_6 = arith.constant 0 : index
      %c0_7 = arith.constant 0 : index
      %13 = vector.load %arg29[%c0_6, %c0_7] : memref<8x32xf32, #tpu.memory_space<vmem>>, vector<8x32xf32>
      %c0_8 = arith.constant 0 : index
      %c0_9 = arith.constant 0 : index
      %14 = vector.load %arg22[%c0_8, %c0_9] : memref<32x32xbf16, #tpu.memory_space<vmem>>, vector<32x32xbf16>
      %15 = arith.truncf %13 : vector<8x32xf32> to vector<8x32xbf16>
      %cst = arith.constant dense<0.000000e+00> : vector<8x32xf32>
      %16 = tpu.matmul %15, %14, %cst {dimension_numbers = #tpu.dot_dimension_numbers<[1], [0], [0], [1], [0, 0, 1, 1], [], []>} : vector<8x32xbf16>, vector<32x32xbf16>, vector<8x32xf32> -> vector<8x32xf32>
      %17 = arith.addf %12, %16 : vector<8x32xf32>
      %c0_10 = arith.constant 0 : index
      %c0_11 = arith.constant 0 : index
      %18 = vector.load %arg23[%c0_10, %c0_11] : memref<1x32xf32, #tpu.memory_space<vmem>>, vector<1x32xf32>
      %c0_12 = arith.constant 0 : index
      %c0_13 = arith.constant 0 : index
      %19 = vector.load %arg24[%c0_12, %c0_13] : memref<1x32xf32, #tpu.memory_space<vmem>>, vector<1x32xf32>
      %cst_14 = arith.constant dense<0.000000e+00> : vector<8xf32>
      %20 = vector.multi_reduction <add>, %17, %cst_14 [1] : vector<8x32xf32> to vector<8xf32>
      %21 = vector.shape_cast %20 : vector<8xf32> to vector<8x1xf32>
      %cst_15 = arith.constant 3.200000e+01 : f32
      %22 = vector.broadcast %cst_15 : f32 to vector<8x1xf32>
      %23 = arith.divf %21, %22 : vector<8x1xf32>
      %24 = arith.mulf %17, %17 : vector<8x32xf32>
      %cst_16 = arith.constant dense<0.000000e+00> : vector<8xf32>
      %25 = vector.multi_reduction <add>, %24, %cst_16 [1] : vector<8x32xf32> to vector<8xf32>
      %26 = vector.shape_cast %25 : vector<8xf32> to vector<8x1xf32>
      %cst_17 = arith.constant 3.200000e+01 : f32
      %27 = vector.broadcast %cst_17 : f32 to vector<8x1xf32>
      %28 = arith.divf %26, %27 : vector<8x1xf32>
      %29 = arith.mulf %23, %23 : vector<8x1xf32>
      %30 = arith.subf %28, %29 : vector<8x1xf32>
      %cst_18 = arith.constant 0.000000e+00 : f32
      %31 = vector.broadcast %cst_18 : f32 to vector<8x1xf32>
      %32 = arith.maximumf %30, %31 : vector<8x1xf32>
      %33 = vector.broadcast %23 : vector<8x1xf32> to vector<8x32xf32>
      %34 = arith.subf %17, %33 : vector<8x32xf32>
      %cst_19 = arith.constant 9.99999974E-6 : f32
      %35 = vector.broadcast %cst_19 : f32 to vector<8x1xf32>
      %36 = arith.addf %32, %35 : vector<8x1xf32>
      %37 = math.rsqrt %36 : vector<8x1xf32>
      %38 = vector.broadcast %37 : vector<8x1xf32> to vector<8x32xf32>
      %39 = vector.broadcast %18 : vector<1x32xf32> to vector<8x32xf32>
      %40 = arith.mulf %38, %39 : vector<8x32xf32>
      %41 = arith.mulf %34, %40 : vector<8x32xf32>
      %42 = vector.broadcast %19 : vector<1x32xf32> to vector<8x32xf32>
      %43 = arith.addf %41, %42 : vector<8x32xf32>
      %cst_20 = arith.constant 0.000000e+00 : f32
      %44 = vector.broadcast %cst_20 : f32 to vector<8x32xf32>
      %45 = arith.maximumf %43, %44 : vector<8x32xf32>
      %c0_21 = arith.constant 0 : index
      %c0_22 = arith.constant 0 : index
      %46 = vector.load %arg25[%c0_21, %c0_22] : memref<32x32xbf16, #tpu.memory_space<vmem>>, vector<32x32xbf16>
      %47 = arith.truncf %45 : vector<8x32xf32> to vector<8x32xbf16>
      %cst_23 = arith.constant dense<0.000000e+00> : vector<8x32xf32>
      %48 = tpu.matmul %47, %46, %cst_23 {dimension_numbers = #tpu.dot_dimension_numbers<[1], [0], [0], [1], [0, 0, 1, 1], [], []>} : vector<8x32xbf16>, vector<32x32xbf16>, vector<8x32xf32> -> vector<8x32xf32>
      %c0_24 = arith.constant 0 : index
      %c0_25 = arith.constant 0 : index
      %49 = vector.load %arg26[%c0_24, %c0_25] : memref<1x32xf32, #tpu.memory_space<vmem>>, vector<1x32xf32>
      %c0_26 = arith.constant 0 : index
      %c0_27 = arith.constant 0 : index
      %50 = vector.load %arg27[%c0_26, %c0_27] : memref<1x32xf32, #tpu.memory_space<vmem>>, vector<1x32xf32>
      %cst_28 = arith.constant dense<0.000000e+00> : vector<8xf32>
      %51 = vector.multi_reduction <add>, %48, %cst_28 [1] : vector<8x32xf32> to vector<8xf32>
      %52 = vector.shape_cast %51 : vector<8xf32> to vector<8x1xf32>
      %cst_29 = arith.constant 3.200000e+01 : f32
      %53 = vector.broadcast %cst_29 : f32 to vector<8x1xf32>
      %54 = arith.divf %52, %53 : vector<8x1xf32>
      %55 = arith.mulf %48, %48 : vector<8x32xf32>
      %cst_30 = arith.constant dense<0.000000e+00> : vector<8xf32>
      %56 = vector.multi_reduction <add>, %55, %cst_30 [1] : vector<8x32xf32> to vector<8xf32>
      %57 = vector.shape_cast %56 : vector<8xf32> to vector<8x1xf32>
      %cst_31 = arith.constant 3.200000e+01 : f32
      %58 = vector.broadcast %cst_31 : f32 to vector<8x1xf32>
      %59 = arith.divf %57, %58 : vector<8x1xf32>
      %60 = arith.mulf %54, %54 : vector<8x1xf32>
      %61 = arith.subf %59, %60 : vector<8x1xf32>
      %cst_32 = arith.constant 0.000000e+00 : f32
      %62 = vector.broadcast %cst_32 : f32 to vector<8x1xf32>
      %63 = arith.maximumf %61, %62 : vector<8x1xf32>
      %64 = vector.broadcast %54 : vector<8x1xf32> to vector<8x32xf32>
      %65 = arith.subf %48, %64 : vector<8x32xf32>
      %cst_33 = arith.constant 9.99999974E-6 : f32
      %66 = vector.broadcast %cst_33 : f32 to vector<8x1xf32>
      %67 = arith.addf %63, %66 : vector<8x1xf32>
      %68 = math.rsqrt %67 : vector<8x1xf32>
      %69 = vector.broadcast %68 : vector<8x1xf32> to vector<8x32xf32>
      %70 = vector.broadcast %49 : vector<1x32xf32> to vector<8x32xf32>
      %71 = arith.mulf %69, %70 : vector<8x32xf32>
      %72 = arith.mulf %65, %71 : vector<8x32xf32>
      %73 = vector.broadcast %50 : vector<1x32xf32> to vector<8x32xf32>
      %74 = arith.addf %72, %73 : vector<8x32xf32>
      %c0_34 = arith.constant 0 : index
      %c0_35 = arith.constant 0 : index
      %75 = vector.load %arg3[%c0_34, %c0_35] : memref<8x32xf32, #tpu.memory_space<vmem>>, vector<8x32xf32>
      %76 = arith.addf %74, %75 : vector<8x32xf32>
      %c0_36 = arith.constant 0 : index
      %c0_37 = arith.constant 0 : index
      %77 = vector.load %arg28[%c0_36, %c0_37] : memref<8x32xf32, #tpu.memory_space<vmem>>, vector<8x32xf32>
      tpu.vector_store %arg28[%c0_36, %c0_37], %76 {strides = array<i32>} : memref<8x32xf32, #tpu.memory_space<vmem>>, vector<8x32xf32>,
    } else {
    }
    return
  }
  func.func @transform_0(%arg0: i32, %arg1: i32, %arg2: memref<1x1xi32, #tpu.memory_space<smem>>) -> (i32, i32) {
    %c0_i32 = arith.constant 0 : i32
    %c0_i32_0 = arith.constant 0 : i32
    return %arg0, %c0_i32 : i32, i32
  }
  func.func @transform_1(%arg0: i32, %arg1: i32, %arg2: memref<1x1xi32, #tpu.memory_space<smem>>) -> (i32, i32) {
    %c0_i32 = arith.constant 0 : i32
    %c0_i32_0 = arith.constant 0 : i32
    return %arg1, %c0_i32 : i32, i32
  }
  func.func @transform_2(%arg0: i32, %arg1: i32, %arg2: memref<1x1xi32, #tpu.memory_space<smem>>) -> (i32, i32) {
    %c0_i32 = arith.constant 0 : i32
    %c0_i32_0 = arith.constant 0 : i32
    return %arg0, %c0_i32 : i32, i32
  }
  func.func @transform_3(%arg0: i32, %arg1: i32, %arg2: memref<1x1xi32, #tpu.memory_space<smem>>) -> (i32, i32) {
    %c0_i32 = arith.constant 0 : i32
    %c0_i32_0 = arith.constant 0 : i32
    return %arg1, %c0_i32 : i32, i32
  }
  func.func @transform_4(%arg0: i32, %arg1: i32, %arg2: memref<1x1xi32, #tpu.memory_space<smem>>) -> (i32, i32) {
    %c0_i32 = arith.constant 0 : i32
    %c0_i32_0 = arith.constant 0 : i32
    return %arg0, %c0_i32 : i32, i32
  }
  func.func @transform_5(%arg0: i32, %arg1: i32, %arg2: memref<1x1xi32, #tpu.memory_space<smem>>) -> (i32, i32) {
    %c0_i32 = arith.constant 0 : i32
    %c0_i32_0 = arith.constant 0 : i32
    return %arg1, %c0_i32 : i32, i32
  }
  func.func @transform_6(%arg0: i32, %arg1: i32, %arg2: memref<1x1xi32, #tpu.memory_space<smem>>) -> (i32, i32) {
    %c0_i32 = arith.constant 0 : i32
    %c0_i32_0 = arith.constant 0 : i32
    %c0_i32_1 = arith.constant 0 : i32
    return %c0_i32, %c0_i32_0 : i32, i32
  }
  func.func @transform_7(%arg0: i32, %arg1: i32, %arg2: memref<1x1xi32, #tpu.memory_space<smem>>) -> (i32, i32) {
    %c0_i32 = arith.constant 0 : i32
    %c0_i32_0 = arith.constant 0 : i32
    %c0_i32_1 = arith.constant 0 : i32
    return %c0_i32, %c0_i32_0 : i32, i32
  }
  func.func @transform_8(%arg0: i32, %arg1: i32, %arg2: memref<1x1xi32, #tpu.memory_space<smem>>) -> (i32, i32) {
    %c0_i32 = arith.constant 0 : i32
    %c0_i32_0 = arith.constant 0 : i32
    %c0_i32_1 = arith.constant 0 : i32
    return %c0_i32, %c0_i32_0 : i32, i32
  }
  func.func @transform_9(%arg0: i32, %arg1: i32, %arg2: memref<1x1xi32, #tpu.memory_space<smem>>) -> (i32, i32) {
    %c0_i32 = arith.constant 0 : i32
    %c0_i32_0 = arith.constant 0 : i32
    %c0_i32_1 = arith.constant 0 : i32
    return %c0_i32, %c0_i32_0 : i32, i32
  }
  func.func @transform_10(%arg0: i32, %arg1: i32, %arg2: memref<1x1xi32, #tpu.memory_space<smem>>) -> (i32, i32) {
    %c0_i32 = arith.constant 0 : i32
    %c0_i32_0 = arith.constant 0 : i32
    %c0_i32_1 = arith.constant 0 : i32
    return %c0_i32, %c0_i32_0 : i32, i32
  }
  func.func @transform_11(%arg0: i32, %arg1: i32, %arg2: memref<1x1xi32, #tpu.memory_space<smem>>) -> (i32, i32) {
    %c0_i32 = arith.constant 0 : i32
    %c0_i32_0 = arith.constant 0 : i32
    %c0_i32_1 = arith.constant 0 : i32
    return %c0_i32, %c0_i32_0 : i32, i32
  }
  func.func @transform_12(%arg0: i32, %arg1: i32, %arg2: memref<1x1xi32, #tpu.memory_space<smem>>) -> (i32, i32) {
    %c0_i32 = arith.constant 0 : i32
    %c0_i32_0 = arith.constant 0 : i32
    %c0_i32_1 = arith.constant 0 : i32
    return %c0_i32, %c0_i32_0 : i32, i32
  }
  func.func @transform_13(%arg0: i32, %arg1: i32, %arg2: memref<1x1xi32, #tpu.memory_space<smem>>) -> (i32, i32) {
    %c0_i32 = arith.constant 0 : i32
    %c0_i32_0 = arith.constant 0 : i32
    %c0_i32_1 = arith.constant 0 : i32
    return %c0_i32, %c0_i32_0 : i32, i32
  }
  func.func @transform_14(%arg0: i32, %arg1: i32, %arg2: memref<1x1xi32, #tpu.memory_space<smem>>) -> (i32, i32) {
    %c0_i32 = arith.constant 0 : i32
    %c0_i32_0 = arith.constant 0 : i32
    %c0_i32_1 = arith.constant 0 : i32
    return %c0_i32, %c0_i32_0 : i32, i32
  }
  func.func @transform_15(%arg0: i32, %arg1: i32, %arg2: memref<1x1xi32, #tpu.memory_space<smem>>) -> (i32, i32) {
    %c0_i32 = arith.constant 0 : i32
    %c0_i32_0 = arith.constant 0 : i32
    %c0_i32_1 = arith.constant 0 : i32
    return %c0_i32, %c0_i32_0 : i32, i32
  }
  func.func @transform_16(%arg0: i32, %arg1: i32, %arg2: memref<1x1xi32, #tpu.memory_space<smem>>) -> (i32, i32) {
    %c0_i32 = arith.constant 0 : i32
    %c0_i32_0 = arith.constant 0 : i32
    %c0_i32_1 = arith.constant 0 : i32
    return %c0_i32, %c0_i32_0 : i32, i32
  }
  func.func @transform_17(%arg0: i32, %arg1: i32, %arg2: memref<1x1xi32, #tpu.memory_space<smem>>) -> (i32, i32) {
    %c0_i32 = arith.constant 0 : i32
    %c0_i32_0 = arith.constant 0 : i32
    %c0_i32_1 = arith.constant 0 : i32
    return %c0_i32, %c0_i32_0 : i32, i32
  }
  func.func @transform_18(%arg0: i32, %arg1: i32, %arg2: memref<1x1xi32, #tpu.memory_space<smem>>) -> (i32, i32) {
    %c0_i32 = arith.constant 0 : i32
    %c0_i32_0 = arith.constant 0 : i32
    %c0_i32_1 = arith.constant 0 : i32
    return %c0_i32, %c0_i32_0 : i32, i32
  }
  func.func @transform_19(%arg0: i32, %arg1: i32, %arg2: memref<1x1xi32, #tpu.memory_space<smem>>) -> (i32, i32) {
    %c0_i32 = arith.constant 0 : i32
    %c0_i32_0 = arith.constant 0 : i32
    %c0_i32_1 = arith.constant 0 : i32
    return %c0_i32, %c0_i32_0 : i32, i32
  }
  func.func @transform_20(%arg0: i32, %arg1: i32, %arg2: memref<1x1xi32, #tpu.memory_space<smem>>) -> (i32, i32) {
    %c0_i32 = arith.constant 0 : i32
    %c0_i32_0 = arith.constant 0 : i32
    %c0_i32_1 = arith.constant 0 : i32
    return %c0_i32, %c0_i32_0 : i32, i32
  }
  func.func @transform_21(%arg0: i32, %arg1: i32, %arg2: memref<1x1xi32, #tpu.memory_space<smem>>) -> (i32, i32) {
    %c0_i32 = arith.constant 0 : i32
    %c0_i32_0 = arith.constant 0 : i32
    %c0_i32_1 = arith.constant 0 : i32
    return %c0_i32, %c0_i32_0 : i32, i32
  }
  func.func @transform_22(%arg0: i32, %arg1: i32, %arg2: memref<1x1xi32, #tpu.memory_space<smem>>) -> (i32, i32) {
    %c0_i32 = arith.constant 0 : i32
    %c0_i32_0 = arith.constant 0 : i32
    %c0_i32_1 = arith.constant 0 : i32
    return %c0_i32, %c0_i32_0 : i32, i32
  }
  func.func @transform_23(%arg0: i32, %arg1: i32, %arg2: memref<1x1xi32, #tpu.memory_space<smem>>) -> (i32, i32) {
    %c0_i32 = arith.constant 0 : i32
    %c0_i32_0 = arith.constant 0 : i32
    %c0_i32_1 = arith.constant 0 : i32
    return %c0_i32, %c0_i32_0 : i32, i32
  }
  func.func @transform_24(%arg0: i32, %arg1: i32, %arg2: memref<1x1xi32, #tpu.memory_space<smem>>) -> (i32, i32) {
    %c0_i32 = arith.constant 0 : i32
    %c0_i32_0 = arith.constant 0 : i32
    %c0_i32_1 = arith.constant 0 : i32
    return %c0_i32, %c0_i32_0 : i32, i32
  }
  func.func @transform_25(%arg0: i32, %arg1: i32, %arg2: memref<1x1xi32, #tpu.memory_space<smem>>) -> (i32, i32) {
    %c0_i32 = arith.constant 0 : i32
    %c0_i32_0 = arith.constant 0 : i32
    return %arg0, %c0_i32 : i32, i32
  }
}

module attributes {stable_mosaic.version = 11 : i64} {
  func.func @att_kernel(%arg0: i32, %arg1: i32, %arg2: memref<1x1xi32, #tpu.memory_space<smem>>, %arg3: memref<8x32xf32, #tpu.memory_space<vmem>>, %arg4: memref<8x32xf32, #tpu.memory_space<vmem>>, %arg5: memref<8x2xf32, #tpu.memory_space<vmem>>, %arg6: memref<8x2xf32, #tpu.memory_space<vmem>>, %arg7: memref<8x1xf32, #tpu.memory_space<vmem>>, %arg8: memref<8x1xf32, #tpu.memory_space<vmem>>, %arg9: memref<2x32xf32, #tpu.memory_space<vmem>>, %arg10: memref<1x32xf32, #tpu.memory_space<vmem>>, %arg11: memref<32x32xbf16, #tpu.memory_space<vmem>>, %arg12: memref<1x32xf32, #tpu.memory_space<vmem>>, %arg13: memref<1x32xf32, #tpu.memory_space<vmem>>, %arg14: memref<32x64xbf16, #tpu.memory_space<vmem>>, %arg15: memref<1x32xf32, #tpu.memory_space<vmem>>, %arg16: memref<1x32xf32, #tpu.memory_space<vmem>>, %arg17: memref<32x32xbf16, #tpu.memory_space<vmem>>, %arg18: memref<32x32xbf16, #tpu.memory_space<vmem>>, %arg19: memref<32x32xbf16, #tpu.memory_space<vmem>>, %arg20: memref<1x32xf32, #tpu.memory_space<vmem>>, %arg21: memref<1x32xf32, #tpu.memory_space<vmem>>, %arg22: memref<32x32xbf16, #tpu.memory_space<vmem>>, %arg23: memref<1x32xf32, #tpu.memory_space<vmem>>, %arg24: memref<1x32xf32, #tpu.memory_space<vmem>>, %arg25: memref<32x32xbf16, #tpu.memory_space<vmem>>, %arg26: memref<1x32xf32, #tpu.memory_space<vmem>>, %arg27: memref<1x32xf32, #tpu.memory_space<vmem>>, %arg28: memref<8x32xf32, #tpu.memory_space<vmem>>, %arg29: memref<8x32xf32, #tpu.memory_space<vmem>>, %arg30: memref<8x32xf32, #tpu.memory_space<vmem>>, %arg31: memref<8x32xf32, #tpu.memory_space<vmem>>) attributes {dimension_semantics = [#tpu.dimension_semantics<parallel>, #tpu.dimension_semantics<arbitrary>], iteration_bounds = array<i64: 1, 1>, scalar_prefetch = 1 : i64, scratch_operands = 3 : i64, tpu.core_type = #tpu.core_type<tc>, window_params = [{transform_indices = @transform_0, window_bounds = array<i64: 8, 32>}, {transform_indices = @transform_1, window_bounds = array<i64: 8, 32>}, {transform_indices = @transform_2, window_bounds = array<i64: 8, 2>}, {transform_indices = @transform_3, window_bounds = array<i64: 8, 2>}, {transform_indices = @transform_4, window_bounds = array<i64: 8, 1>}, {transform_indices = @transform_5, window_bounds = array<i64: 8, 1>}, {pipeline_mode = #tpu.pipeline_mode<synchronous>, transform_indices = @transform_6, window_bounds = array<i64: 2, 32>}, {pipeline_mode = #tpu.pipeline_mode<synchronous>, transform_indices = @transform_7, window_bounds = array<i64: 1, 32>}, {pipeline_mode = #tpu.pipeline_mode<synchronous>, transform_indices = @transform_8, window_bounds = array<i64: 32, 32>}, {pipeline_mode = #tpu.pipeline_mode<synchronous>, transform_indices = @transform_9, window_bounds = array<i64: 1, 32>}, {pipeline_mode = #tpu.pipeline_mode<synchronous>, transform_indices = @transform_10, window_bounds = array<i64: 1, 32>}, {pipeline_mode = #tpu.pipeline_mode<synchronous>, transform_indices = @transform_11, window_bounds = array<i64: 32, 64>}, {pipeline_mode = #tpu.pipeline_mode<synchronous>, transform_indices = @transform_12, window_bounds = array<i64: 1, 32>}, {pipeline_mode = #tpu.pipeline_mode<synchronous>, transform_indices = @transform_13, window_bounds = array<i64: 1, 32>}, {pipeline_mode = #tpu.pipeline_mode<synchronous>, transform_indices = @transform_14, window_bounds = array<i64: 32, 32>}, {pipeline_mode = #tpu.pipeline_mode<synchronous>, transform_indices = @transform_15, window_bounds = array<i64: 32, 32>}, {pipeline_mode = #tpu.pipeline_mode<synchronous>, transform_indices = @transform_16, window_bounds = array<i64: 32, 32>}, {pipeline_mode = #tpu.pipeline_mode<synchronous>, transform_indices = @transform_17, window_bounds = array<i64: 1, 32>}, {pipeline_mode = #tpu.pipeline_mode<synchronous>, transform_indices = @transform_18, window_bounds = array<i64: 1, 32>}, {pipeline_mode = #tpu.pipeline_mode<synchronous>, transform_indices = @transform_19, window_bounds = array<i64: 32, 32>}, {pipeline_mode = #tpu.pipeline_mode<synchronous>, transform_indices = @transform_20, window_bounds = array<i64: 1, 32>}, {pipeline_mode = #tpu.pipeline_mode<synchronous>, transform_indices = @transform_21, window_bounds = array<i64: 1, 32>}, {pipeline_mode = #tpu.pipeline_mode<synchronous>, transform_indices = @transform_22, window_bounds = array<i64: 32, 32>}, {pipeline_mode = #tpu.pipeline_mode<synchronous>, transform_indices = @transform_23, window_bounds = array<i64: 1, 32>}, {pipeline_mode = #tpu.pipeline_mode<synchronous>, transform_indices = @transform_24, window_bounds = array<i64: 1, 32>}, {transform_indices = @transform_25, window_bounds = array<i64: 8, 32>}]} {
    %c0_i32 = arith.constant 0 : i32
    %0 = arith.cmpi eq, %arg1, %c0_i32 : i32
    %1 = arith.extui %0 : i1 to i32
    %c0_i32_0 = arith.constant 0 : i32
    %2 = arith.cmpi ne, %1, %c0_i32_0 : i32
    scf.if %2 {
      %cst = arith.constant 0.000000e+00 : f32
      %12 = vector.broadcast %cst : f32 to vector<8x32xf32>
      %c0 = arith.constant 0 : index
      %c0_5 = arith.constant 0 : index
      %13 = vector.load %arg29[%c0, %c0_5] : memref<8x32xf32, #tpu.memory_space<vmem>>, vector<8x32xf32>
      tpu.vector_store %arg29[%c0, %c0_5], %12 {strides = array<i32>} : memref<8x32xf32, #tpu.memory_space<vmem>>, vector<8x32xf32>,
      %c0_6 = arith.constant 0 : index
      %c0_7 = arith.constant 0 : index
      %14 = vector.load %arg3[%c0_6, %c0_7] : memref<8x32xf32, #tpu.memory_space<vmem>>, vector<8x32xf32>
      %c0_8 = arith.constant 0 : index
      %c0_9 = arith.constant 0 : index
      %15 = vector.load %arg14[%c0_8, %c0_9] : memref<32x64xbf16, #tpu.memory_space<vmem>>, vector<32x64xbf16>
      %16 = arith.truncf %14 : vector<8x32xf32> to vector<8x32xbf16>
      %cst_10 = arith.constant dense<0.000000e+00> : vector<8x64xf32>
      %17 = tpu.matmul %16, %15, %cst_10 {dimension_numbers = #tpu.dot_dimension_numbers<[1], [0], [0], [1], [0, 0, 1, 1], [], []>} : vector<8x32xbf16>, vector<32x64xbf16>, vector<8x64xf32> -> vector<8x64xf32>
      %18 = vector.extract_strided_slice %17 {offsets = [0, 0], sizes = [8, 32], strides = [1, 1]} : vector<8x64xf32> to vector<8x32xf32>
      %c0_11 = arith.constant 0 : index
      %c0_12 = arith.constant 0 : index
      %19 = vector.load %arg15[%c0_11, %c0_12] : memref<1x32xf32, #tpu.memory_space<vmem>>, vector<1x32xf32>
      %c0_13 = arith.constant 0 : index
      %c0_14 = arith.constant 0 : index
      %20 = vector.load %arg16[%c0_13, %c0_14] : memref<1x32xf32, #tpu.memory_space<vmem>>, vector<1x32xf32>
      %cst_15 = arith.constant dense<0.000000e+00> : vector<8xf32>
      %21 = vector.multi_reduction <add>, %18, %cst_15 [1] : vector<8x32xf32> to vector<8xf32>
      %22 = vector.shape_cast %21 : vector<8xf32> to vector<8x1xf32>
      %cst_16 = arith.constant 3.200000e+01 : f32
      %23 = vector.broadcast %cst_16 : f32 to vector<8x1xf32>
      %24 = arith.divf %22, %23 : vector<8x1xf32>
      %25 = arith.mulf %18, %18 : vector<8x32xf32>
      %cst_17 = arith.constant dense<0.000000e+00> : vector<8xf32>
      %26 = vector.multi_reduction <add>, %25, %cst_17 [1] : vector<8x32xf32> to vector<8xf32>
      %27 = vector.shape_cast %26 : vector<8xf32> to vector<8x1xf32>
      %cst_18 = arith.constant 3.200000e+01 : f32
      %28 = vector.broadcast %cst_18 : f32 to vector<8x1xf32>
      %29 = arith.divf %27, %28 : vector<8x1xf32>
      %30 = arith.mulf %24, %24 : vector<8x1xf32>
      %31 = arith.subf %29, %30 : vector<8x1xf32>
      %cst_19 = arith.constant 0.000000e+00 : f32
      %32 = vector.broadcast %cst_19 : f32 to vector<8x1xf32>
      %33 = arith.maximumf %31, %32 : vector<8x1xf32>
      %34 = vector.broadcast %24 : vector<8x1xf32> to vector<8x32xf32>
      %35 = arith.subf %18, %34 : vector<8x32xf32>
      %cst_20 = arith.constant 9.99999974E-6 : f32
      %36 = vector.broadcast %cst_20 : f32 to vector<8x1xf32>
      %37 = arith.addf %33, %36 : vector<8x1xf32>
      %38 = math.rsqrt %37 : vector<8x1xf32>
      %39 = vector.broadcast %38 : vector<8x1xf32> to vector<8x32xf32>
      %40 = vector.broadcast %19 : vector<1x32xf32> to vector<8x32xf32>
      %41 = arith.mulf %39, %40 : vector<8x32xf32>
      %42 = arith.mulf %35, %41 : vector<8x32xf32>
      %43 = vector.broadcast %20 : vector<1x32xf32> to vector<8x32xf32>
      %44 = arith.addf %42, %43 : vector<8x32xf32>
      %cst_21 = arith.constant 0.000000e+00 : f32
      %45 = vector.broadcast %cst_21 : f32 to vector<8x32xf32>
      %46 = arith.maximumf %44, %45 : vector<8x32xf32>
      %c0_22 = arith.constant 0 : index
      %c0_23 = arith.constant 0 : index
      %47 = vector.load %arg18[%c0_22, %c0_23] : memref<32x32xbf16, #tpu.memory_space<vmem>>, vector<32x32xbf16>
      %48 = arith.truncf %46 : vector<8x32xf32> to vector<8x32xbf16>
      %cst_24 = arith.constant dense<0.000000e+00> : vector<8x32xf32>
      %49 = tpu.matmul %48, %47, %cst_24 {dimension_numbers = #tpu.dot_dimension_numbers<[1], [0], [0], [1], [0, 0, 1, 1], [], []>} : vector<8x32xbf16>, vector<32x32xbf16>, vector<8x32xf32> -> vector<8x32xf32>
      %c0_25 = arith.constant 0 : index
      %c0_26 = arith.constant 0 : index
      %50 = vector.load %arg30[%c0_25, %c0_26] : memref<8x32xf32, #tpu.memory_space<vmem>>, vector<8x32xf32>
      tpu.vector_store %arg30[%c0_25, %c0_26], %49 {strides = array<i32>} : memref<8x32xf32, #tpu.memory_space<vmem>>, vector<8x32xf32>,
      %51 = vector.extract_strided_slice %17 {offsets = [0, 32], sizes = [8, 32], strides = [1, 1]} : vector<8x64xf32> to vector<8x32xf32>
      %c0_27 = arith.constant 0 : index
      %c0_28 = arith.constant 0 : index
      %52 = vector.load %arg31[%c0_27, %c0_28] : memref<8x32xf32, #tpu.memory_space<vmem>>, vector<8x32xf32>
      tpu.vector_store %arg31[%c0_27, %c0_28], %51 {strides = array<i32>} : memref<8x32xf32, #tpu.memory_space<vmem>>, vector<8x32xf32>,
    } else {
    }
    %3 = arith.index_cast %arg0 : i32 to index
    %4 = arith.index_cast %arg1 : i32 to index
    %5 = memref.load %arg2[%3, %4] : memref<1x1xi32, #tpu.memory_space<smem>>
    %c0_i32_1 = arith.constant 0 : i32
    %6 = arith.cmpi sgt, %5, %c0_i32_1 : i32
    %7 = arith.extui %6 : i1 to i32
    %c0_i32_2 = arith.constant 0 : i32
    %8 = arith.cmpi ne, %7, %c0_i32_2 : i32
    scf.if %8 {
      %c0 = arith.constant 0 : index
      %c0_5 = arith.constant 0 : index
      %12 = vector.load %arg5[%c0, %c0_5] : memref<8x2xf32, #tpu.memory_space<vmem>>, vector<8x2xf32>
      %c0_6 = arith.constant 0 : index
      %c0_7 = arith.constant 0 : index
      %13 = vector.load %arg6[%c0_6, %c0_7] : memref<8x2xf32, #tpu.memory_space<vmem>>, vector<8x2xf32>
      %14 = vector.extract_strided_slice %12 {offsets = [0, 0], sizes = [8, 1], strides = [1, 1]} : vector<8x2xf32> to vector<8x1xf32>
      %15 = vector.extract_strided_slice %13 {offsets = [0, 0], sizes = [8, 1], strides = [1, 1]} : vector<8x2xf32> to vector<8x1xf32>
      %16 = tpu.transpose %15, [1, 0] : vector<8x1xf32> -> vector<1x8xf32>
      %17 = vector.broadcast %14 : vector<8x1xf32> to vector<8x8xf32>
      %18 = vector.broadcast %16 : vector<1x8xf32> to vector<8x8xf32>
      %19 = arith.subf %17, %18 : vector<8x8xf32>
      %20 = vector.extract_strided_slice %12 {offsets = [0, 1], sizes = [8, 1], strides = [1, 1]} : vector<8x2xf32> to vector<8x1xf32>
      %21 = vector.extract_strided_slice %13 {offsets = [0, 1], sizes = [8, 1], strides = [1, 1]} : vector<8x2xf32> to vector<8x1xf32>
      %22 = tpu.transpose %21, [1, 0] : vector<8x1xf32> -> vector<1x8xf32>
      %23 = vector.broadcast %20 : vector<8x1xf32> to vector<8x8xf32>
      %24 = vector.broadcast %22 : vector<1x8xf32> to vector<8x8xf32>
      %25 = arith.subf %23, %24 : vector<8x8xf32>
      %26 = arith.mulf %19, %19 : vector<8x8xf32>
      %27 = arith.mulf %25, %25 : vector<8x8xf32>
      %28 = arith.addf %26, %27 : vector<8x8xf32>
      %c0_8 = arith.constant 0 : index
      %c0_9 = arith.constant 0 : index
      %29 = vector.load %arg7[%c0_8, %c0_9] : memref<8x1xf32, #tpu.memory_space<vmem>>, vector<8x1xf32>
      %c0_10 = arith.constant 0 : index
      %c0_11 = arith.constant 0 : index
      %30 = vector.load %arg8[%c0_10, %c0_11] : memref<8x1xf32, #tpu.memory_space<vmem>>, vector<8x1xf32>
      %31 = tpu.transpose %30, [1, 0] : vector<8x1xf32> -> vector<1x8xf32>
      %32 = vector.broadcast %29 : vector<8x1xf32> to vector<8x8xf32>
      %33 = vector.broadcast %31 : vector<1x8xf32> to vector<8x8xf32>
      %34 = arith.subf %32, %33 : vector<8x8xf32>
      %cst = arith.constant 0.000000e+00 : f32
      %35 = vector.broadcast %cst : f32 to vector<8x8xf32>
      %36 = arith.cmpf oeq, %34, %35 : vector<8x8xf32>
      %cst_12 = arith.constant 3.600000e+01 : f32
      %37 = vector.broadcast %cst_12 : f32 to vector<8x8xf32>
      %38 = arith.cmpf ole, %28, %37 : vector<8x8xf32>
      %39 = arith.andi %38, %36 : vector<8x8xi1>
      %cst_13 = arith.constant 1.000000e+00 : f32
      %cst_14 = arith.constant 0.000000e+00 : f32
      %40 = vector.broadcast %cst_13 : f32 to vector<8x8xf32>
      %41 = vector.broadcast %cst_14 : f32 to vector<8x8xf32>
      %42 = arith.select %39, %40, %41 : vector<8x8xi1>, vector<8x8xf32>
      %c0_15 = arith.constant 0 : index
      %c0_16 = arith.constant 0 : index
      %43 = vector.load %arg9[%c0_15, %c0_16] : memref<2x32xf32, #tpu.memory_space<vmem>>, vector<2x32xf32>
      %44 = vector.shape_cast %19 : vector<8x8xf32> to vector<8x8x1xf32>
      %45 = vector.extract_strided_slice %43 {offsets = [0, 0], sizes = [1, 32], strides = [1, 1]} : vector<2x32xf32> to vector<1x32xf32>
      %46 = vector.shape_cast %45 : vector<1x32xf32> to vector<1x1x32xf32>
      %47 = vector.broadcast %44 : vector<8x8x1xf32> to vector<8x8x32xf32>
      %48 = vector.broadcast %46 : vector<1x1x32xf32> to vector<8x8x32xf32>
      %49 = arith.mulf %47, %48 : vector<8x8x32xf32>
      %50 = vector.shape_cast %25 : vector<8x8xf32> to vector<8x8x1xf32>
      %51 = vector.extract_strided_slice %43 {offsets = [1, 0], sizes = [1, 32], strides = [1, 1]} : vector<2x32xf32> to vector<1x32xf32>
      %52 = vector.shape_cast %51 : vector<1x32xf32> to vector<1x1x32xf32>
      %53 = vector.broadcast %50 : vector<8x8x1xf32> to vector<8x8x32xf32>
      %54 = vector.broadcast %52 : vector<1x1x32xf32> to vector<8x8x32xf32>
      %55 = arith.mulf %53, %54 : vector<8x8x32xf32>
      %56 = arith.addf %49, %55 : vector<8x8x32xf32>
      %c0_17 = arith.constant 0 : index
      %c0_18 = arith.constant 0 : index
      %57 = vector.load %arg10[%c0_17, %c0_18] : memref<1x32xf32, #tpu.memory_space<vmem>>, vector<1x32xf32>
      %58 = vector.shape_cast %57 : vector<1x32xf32> to vector<1x1x32xf32>
      %59 = vector.broadcast %58 : vector<1x1x32xf32> to vector<8x8x32xf32>
      %60 = arith.addf %56, %59 : vector<8x8x32xf32>
      %cst_19 = arith.constant 0.000000e+00 : f32
      %61 = vector.broadcast %cst_19 : f32 to vector<8x8x32xf32>
      %62 = arith.maximumf %60, %61 : vector<8x8x32xf32>
      %63 = vector.shape_cast %62 : vector<8x8x32xf32> to vector<64x32xf32>
      %c0_20 = arith.constant 0 : index
      %c0_21 = arith.constant 0 : index
      %64 = vector.load %arg11[%c0_20, %c0_21] : memref<32x32xbf16, #tpu.memory_space<vmem>>, vector<32x32xbf16>
      %65 = arith.truncf %63 : vector<64x32xf32> to vector<64x32xbf16>
      %cst_22 = arith.constant dense<0.000000e+00> : vector<64x32xf32>
      %66 = tpu.matmul %65, %64, %cst_22 {dimension_numbers = #tpu.dot_dimension_numbers<[1], [0], [0], [1], [0, 0, 1, 1], [], []>} : vector<64x32xbf16>, vector<32x32xbf16>, vector<64x32xf32> -> vector<64x32xf32>
      %c0_23 = arith.constant 0 : index
      %c0_24 = arith.constant 0 : index
      %67 = vector.load %arg12[%c0_23, %c0_24] : memref<1x32xf32, #tpu.memory_space<vmem>>, vector<1x32xf32>
      %c0_25 = arith.constant 0 : index
      %c0_26 = arith.constant 0 : index
      %68 = vector.load %arg13[%c0_25, %c0_26] : memref<1x32xf32, #tpu.memory_space<vmem>>, vector<1x32xf32>
      %cst_27 = arith.constant dense<0.000000e+00> : vector<64xf32>
      %69 = vector.multi_reduction <add>, %66, %cst_27 [1] : vector<64x32xf32> to vector<64xf32>
      %70 = vector.shape_cast %69 : vector<64xf32> to vector<64x1xf32>
      %cst_28 = arith.constant 3.200000e+01 : f32
      %71 = vector.broadcast %cst_28 : f32 to vector<64x1xf32>
      %72 = arith.divf %70, %71 : vector<64x1xf32>
      %73 = arith.mulf %66, %66 : vector<64x32xf32>
      %cst_29 = arith.constant dense<0.000000e+00> : vector<64xf32>
      %74 = vector.multi_reduction <add>, %73, %cst_29 [1] : vector<64x32xf32> to vector<64xf32>
      %75 = vector.shape_cast %74 : vector<64xf32> to vector<64x1xf32>
      %cst_30 = arith.constant 3.200000e+01 : f32
      %76 = vector.broadcast %cst_30 : f32 to vector<64x1xf32>
      %77 = arith.divf %75, %76 : vector<64x1xf32>
      %78 = arith.mulf %72, %72 : vector<64x1xf32>
      %79 = arith.subf %77, %78 : vector<64x1xf32>
      %cst_31 = arith.constant 0.000000e+00 : f32
      %80 = vector.broadcast %cst_31 : f32 to vector<64x1xf32>
      %81 = arith.maximumf %79, %80 : vector<64x1xf32>
      %82 = vector.broadcast %72 : vector<64x1xf32> to vector<64x32xf32>
      %83 = arith.subf %66, %82 : vector<64x32xf32>
      %cst_32 = arith.constant 9.99999974E-6 : f32
      %84 = vector.broadcast %cst_32 : f32 to vector<64x1xf32>
      %85 = arith.addf %81, %84 : vector<64x1xf32>
      %86 = math.rsqrt %85 : vector<64x1xf32>
      %87 = vector.broadcast %86 : vector<64x1xf32> to vector<64x32xf32>
      %88 = vector.broadcast %67 : vector<1x32xf32> to vector<64x32xf32>
      %89 = arith.mulf %87, %88 : vector<64x32xf32>
      %90 = arith.mulf %83, %89 : vector<64x32xf32>
      %91 = vector.broadcast %68 : vector<1x32xf32> to vector<64x32xf32>
      %92 = arith.addf %90, %91 : vector<64x32xf32>
      %cst_33 = arith.constant 0.000000e+00 : f32
      %93 = vector.broadcast %cst_33 : f32 to vector<64x32xf32>
      %94 = arith.maximumf %92, %93 : vector<64x32xf32>
      %c0_34 = arith.constant 0 : index
      %c0_35 = arith.constant 0 : index
      %95 = vector.load %arg17[%c0_34, %c0_35] : memref<32x32xbf16, #tpu.memory_space<vmem>>, vector<32x32xbf16>
      %96 = arith.truncf %94 : vector<64x32xf32> to vector<64x32xbf16>
      %cst_36 = arith.constant dense<0.000000e+00> : vector<64x32xf32>
      %97 = tpu.matmul %96, %95, %cst_36 {dimension_numbers = #tpu.dot_dimension_numbers<[1], [0], [0], [1], [0, 0, 1, 1], [], []>} : vector<64x32xbf16>, vector<32x32xbf16>, vector<64x32xf32> -> vector<64x32xf32>
      %98 = vector.shape_cast %97 : vector<64x32xf32> to vector<8x8x32xf32>
      %c0_37 = arith.constant 0 : index
      %c0_38 = arith.constant 0 : index
      %99 = vector.load %arg30[%c0_37, %c0_38] : memref<8x32xf32, #tpu.memory_space<vmem>>, vector<8x32xf32>
      %100 = vector.shape_cast %99 : vector<8x32xf32> to vector<8x1x32xf32>
      %101 = vector.broadcast %100 : vector<8x1x32xf32> to vector<8x8x32xf32>
      %102 = arith.addf %98, %101 : vector<8x8x32xf32>
      %c0_39 = arith.constant 0 : index
      %c0_40 = arith.constant 0 : index
      %103 = vector.load %arg4[%c0_39, %c0_40] : memref<8x32xf32, #tpu.memory_space<vmem>>, vector<8x32xf32>
      %c0_41 = arith.constant 0 : index
      %c0_42 = arith.constant 0 : index
      %104 = vector.load %arg19[%c0_41, %c0_42] : memref<32x32xbf16, #tpu.memory_space<vmem>>, vector<32x32xbf16>
      %105 = arith.truncf %103 : vector<8x32xf32> to vector<8x32xbf16>
      %cst_43 = arith.constant dense<0.000000e+00> : vector<8x32xf32>
      %106 = tpu.matmul %105, %104, %cst_43 {dimension_numbers = #tpu.dot_dimension_numbers<[1], [0], [0], [1], [0, 0, 1, 1], [], []>} : vector<8x32xbf16>, vector<32x32xbf16>, vector<8x32xf32> -> vector<8x32xf32>
      %107 = vector.shape_cast %106 : vector<8x32xf32> to vector<1x8x32xf32>
      %108 = vector.broadcast %107 : vector<1x8x32xf32> to vector<8x8x32xf32>
      %109 = arith.addf %102, %108 : vector<8x8x32xf32>
      %110 = vector.shape_cast %109 : vector<8x8x32xf32> to vector<64x32xf32>
      %c0_44 = arith.constant 0 : index
      %c0_45 = arith.constant 0 : index
      %111 = vector.load %arg20[%c0_44, %c0_45] : memref<1x32xf32, #tpu.memory_space<vmem>>, vector<1x32xf32>
      %c0_46 = arith.constant 0 : index
      %c0_47 = arith.constant 0 : index
      %112 = vector.load %arg21[%c0_46, %c0_47] : memref<1x32xf32, #tpu.memory_space<vmem>>, vector<1x32xf32>
      %cst_48 = arith.constant dense<0.000000e+00> : vector<64xf32>
      %113 = vector.multi_reduction <add>, %110, %cst_48 [1] : vector<64x32xf32> to vector<64xf32>
      %114 = vector.shape_cast %113 : vector<64xf32> to vector<64x1xf32>
      %cst_49 = arith.constant 3.200000e+01 : f32
      %115 = vector.broadcast %cst_49 : f32 to vector<64x1xf32>
      %116 = arith.divf %114, %115 : vector<64x1xf32>
      %117 = arith.mulf %110, %110 : vector<64x32xf32>
      %cst_50 = arith.constant dense<0.000000e+00> : vector<64xf32>
      %118 = vector.multi_reduction <add>, %117, %cst_50 [1] : vector<64x32xf32> to vector<64xf32>
      %119 = vector.shape_cast %118 : vector<64xf32> to vector<64x1xf32>
      %cst_51 = arith.constant 3.200000e+01 : f32
      %120 = vector.broadcast %cst_51 : f32 to vector<64x1xf32>
      %121 = arith.divf %119, %120 : vector<64x1xf32>
      %122 = arith.mulf %116, %116 : vector<64x1xf32>
      %123 = arith.subf %121, %122 : vector<64x1xf32>
      %cst_52 = arith.constant 0.000000e+00 : f32
      %124 = vector.broadcast %cst_52 : f32 to vector<64x1xf32>
      %125 = arith.maximumf %123, %124 : vector<64x1xf32>
      %126 = vector.broadcast %116 : vector<64x1xf32> to vector<64x32xf32>
      %127 = arith.subf %110, %126 : vector<64x32xf32>
      %cst_53 = arith.constant 9.99999974E-6 : f32
      %128 = vector.broadcast %cst_53 : f32 to vector<64x1xf32>
      %129 = arith.addf %125, %128 : vector<64x1xf32>
      %130 = math.rsqrt %129 : vector<64x1xf32>
      %131 = vector.broadcast %130 : vector<64x1xf32> to vector<64x32xf32>
      %132 = vector.broadcast %111 : vector<1x32xf32> to vector<64x32xf32>
      %133 = arith.mulf %131, %132 : vector<64x32xf32>
      %134 = arith.mulf %127, %133 : vector<64x32xf32>
      %135 = vector.broadcast %112 : vector<1x32xf32> to vector<64x32xf32>
      %136 = arith.addf %134, %135 : vector<64x32xf32>
      %cst_54 = arith.constant 0.000000e+00 : f32
      %137 = vector.broadcast %cst_54 : f32 to vector<64x32xf32>
      %138 = arith.maximumf %136, %137 : vector<64x32xf32>
      %139 = vector.shape_cast %138 : vector<64x32xf32> to vector<8x8x32xf32>
      %c0_55 = arith.constant 0 : index
      %c0_56 = arith.constant 0 : index
      %140 = vector.load %arg29[%c0_55, %c0_56] : memref<8x32xf32, #tpu.memory_space<vmem>>, vector<8x32xf32>
      %141 = vector.shape_cast %42 : vector<8x8xf32> to vector<8x8x1xf32>
      %142 = vector.broadcast %141 : vector<8x8x1xf32> to vector<8x8x32xf32>
      %143 = arith.mulf %139, %142 : vector<8x8x32xf32>
      %cst_57 = arith.constant dense<0.000000e+00> : vector<8x32xf32>
      %144 = vector.multi_reduction <add>, %143, %cst_57 [1] : vector<8x8x32xf32> to vector<8x32xf32>
      %145 = arith.addf %140, %144 : vector<8x32xf32>
      %c0_58 = arith.constant 0 : index
      %c0_59 = arith.constant 0 : index
      %146 = vector.load %arg29[%c0_58, %c0_59] : memref<8x32xf32, #tpu.memory_space<vmem>>, vector<8x32xf32>
      tpu.vector_store %arg29[%c0_58, %c0_59], %145 {strides = array<i32>} : memref<8x32xf32, #tpu.memory_space<vmem>>, vector<8x32xf32>,
    } else {
    }
    %c0_i32_3 = arith.constant 0 : i32
    %9 = arith.cmpi eq, %arg1, %c0_i32_3 : i32
    %10 = arith.extui %9 : i1 to i32
    %c0_i32_4 = arith.constant 0 : i32
    %11 = arith.cmpi ne, %10, %c0_i32_4 : i32
    scf.if %11 {
      %c0 = arith.constant 0 : index
      %c0_5 = arith.constant 0 : index
      %12 = vector.load %arg31[%c0, %c0_5] : memref<8x32xf32, #tpu.memory_space<vmem>>, vector<8x32xf32>
      %c0_6 = arith.constant 0 : index
      %c0_7 = arith.constant 0 : index
      %13 = vector.load %arg29[%c0_6, %c0_7] : memref<8x32xf32, #tpu.memory_space<vmem>>, vector<8x32xf32>
      %c0_8 = arith.constant 0 : index
      %c0_9 = arith.constant 0 : index
      %14 = vector.load %arg22[%c0_8, %c0_9] : memref<32x32xbf16, #tpu.memory_space<vmem>>, vector<32x32xbf16>
      %15 = arith.truncf %13 : vector<8x32xf32> to vector<8x32xbf16>
      %cst = arith.constant dense<0.000000e+00> : vector<8x32xf32>
      %16 = tpu.matmul %15, %14, %cst {dimension_numbers = #tpu.dot_dimension_numbers<[1], [0], [0], [1], [0, 0, 1, 1], [], []>} : vector<8x32xbf16>, vector<32x32xbf16>, vector<8x32xf32> -> vector<8x32xf32>
      %17 = arith.addf %12, %16 : vector<8x32xf32>
      %c0_10 = arith.constant 0 : index
      %c0_11 = arith.constant 0 : index
      %18 = vector.load %arg23[%c0_10, %c0_11] : memref<1x32xf32, #tpu.memory_space<vmem>>, vector<1x32xf32>
      %c0_12 = arith.constant 0 : index
      %c0_13 = arith.constant 0 : index
      %19 = vector.load %arg24[%c0_12, %c0_13] : memref<1x32xf32, #tpu.memory_space<vmem>>, vector<1x32xf32>
      %cst_14 = arith.constant dense<0.000000e+00> : vector<8xf32>
      %20 = vector.multi_reduction <add>, %17, %cst_14 [1] : vector<8x32xf32> to vector<8xf32>
      %21 = vector.shape_cast %20 : vector<8xf32> to vector<8x1xf32>
      %cst_15 = arith.constant 3.200000e+01 : f32
      %22 = vector.broadcast %cst_15 : f32 to vector<8x1xf32>
      %23 = arith.divf %21, %22 : vector<8x1xf32>
      %24 = arith.mulf %17, %17 : vector<8x32xf32>
      %cst_16 = arith.constant dense<0.000000e+00> : vector<8xf32>
      %25 = vector.multi_reduction <add>, %24, %cst_16 [1] : vector<8x32xf32> to vector<8xf32>
      %26 = vector.shape_cast %25 : vector<8xf32> to vector<8x1xf32>
      %cst_17 = arith.constant 3.200000e+01 : f32
      %27 = vector.broadcast %cst_17 : f32 to vector<8x1xf32>
      %28 = arith.divf %26, %27 : vector<8x1xf32>
      %29 = arith.mulf %23, %23 : vector<8x1xf32>
      %30 = arith.subf %28, %29 : vector<8x1xf32>
      %cst_18 = arith.constant 0.000000e+00 : f32
      %31 = vector.broadcast %cst_18 : f32 to vector<8x1xf32>
      %32 = arith.maximumf %30, %31 : vector<8x1xf32>
      %33 = vector.broadcast %23 : vector<8x1xf32> to vector<8x32xf32>
      %34 = arith.subf %17, %33 : vector<8x32xf32>
      %cst_19 = arith.constant 9.99999974E-6 : f32
      %35 = vector.broadcast %cst_19 : f32 to vector<8x1xf32>
      %36 = arith.addf %32, %35 : vector<8x1xf32>
      %37 = math.rsqrt %36 : vector<8x1xf32>
      %38 = vector.broadcast %37 : vector<8x1xf32> to vector<8x32xf32>
      %39 = vector.broadcast %18 : vector<1x32xf32> to vector<8x32xf32>
      %40 = arith.mulf %38, %39 : vector<8x32xf32>
      %41 = arith.mulf %34, %40 : vector<8x32xf32>
      %42 = vector.broadcast %19 : vector<1x32xf32> to vector<8x32xf32>
      %43 = arith.addf %41, %42 : vector<8x32xf32>
      %cst_20 = arith.constant 0.000000e+00 : f32
      %44 = vector.broadcast %cst_20 : f32 to vector<8x32xf32>
      %45 = arith.maximumf %43, %44 : vector<8x32xf32>
      %c0_21 = arith.constant 0 : index
      %c0_22 = arith.constant 0 : index
      %46 = vector.load %arg25[%c0_21, %c0_22] : memref<32x32xbf16, #tpu.memory_space<vmem>>, vector<32x32xbf16>
      %47 = arith.truncf %45 : vector<8x32xf32> to vector<8x32xbf16>
      %cst_23 = arith.constant dense<0.000000e+00> : vector<8x32xf32>
      %48 = tpu.matmul %47, %46, %cst_23 {dimension_numbers = #tpu.dot_dimension_numbers<[1], [0], [0], [1], [0, 0, 1, 1], [], []>} : vector<8x32xbf16>, vector<32x32xbf16>, vector<8x32xf32> -> vector<8x32xf32>
      %c0_24 = arith.constant 0 : index
      %c0_25 = arith.constant 0 : index
      %49 = vector.load %arg26[%c0_24, %c0_25] : memref<1x32xf32, #tpu.memory_space<vmem>>, vector<1x32xf32>
      %c0_26 = arith.constant 0 : index
      %c0_27 = arith.constant 0 : index
      %50 = vector.load %arg27[%c0_26, %c0_27] : memref<1x32xf32, #tpu.memory_space<vmem>>, vector<1x32xf32>
      %cst_28 = arith.constant dense<0.000000e+00> : vector<8xf32>
      %51 = vector.multi_reduction <add>, %48, %cst_28 [1] : vector<8x32xf32> to vector<8xf32>
      %52 = vector.shape_cast %51 : vector<8xf32> to vector<8x1xf32>
      %cst_29 = arith.constant 3.200000e+01 : f32
      %53 = vector.broadcast %cst_29 : f32 to vector<8x1xf32>
      %54 = arith.divf %52, %53 : vector<8x1xf32>
      %55 = arith.mulf %48, %48 : vector<8x32xf32>
      %cst_30 = arith.constant dense<0.000000e+00> : vector<8xf32>
      %56 = vector.multi_reduction <add>, %55, %cst_30 [1] : vector<8x32xf32> to vector<8xf32>
      %57 = vector.shape_cast %56 : vector<8xf32> to vector<8x1xf32>
      %cst_31 = arith.constant 3.200000e+01 : f32
      %58 = vector.broadcast %cst_31 : f32 to vector<8x1xf32>
      %59 = arith.divf %57, %58 : vector<8x1xf32>
      %60 = arith.mulf %54, %54 : vector<8x1xf32>
      %61 = arith.subf %59, %60 : vector<8x1xf32>
      %cst_32 = arith.constant 0.000000e+00 : f32
      %62 = vector.broadcast %cst_32 : f32 to vector<8x1xf32>
      %63 = arith.maximumf %61, %62 : vector<8x1xf32>
      %64 = vector.broadcast %54 : vector<8x1xf32> to vector<8x32xf32>
      %65 = arith.subf %48, %64 : vector<8x32xf32>
      %cst_33 = arith.constant 9.99999974E-6 : f32
      %66 = vector.broadcast %cst_33 : f32 to vector<8x1xf32>
      %67 = arith.addf %63, %66 : vector<8x1xf32>
      %68 = math.rsqrt %67 : vector<8x1xf32>
      %69 = vector.broadcast %68 : vector<8x1xf32> to vector<8x32xf32>
      %70 = vector.broadcast %49 : vector<1x32xf32> to vector<8x32xf32>
      %71 = arith.mulf %69, %70 : vector<8x32xf32>
      %72 = arith.mulf %65, %71 : vector<8x32xf32>
      %73 = vector.broadcast %50 : vector<1x32xf32> to vector<8x32xf32>
      %74 = arith.addf %72, %73 : vector<8x32xf32>
      %c0_34 = arith.constant 0 : index
      %c0_35 = arith.constant 0 : index
      %75 = vector.load %arg3[%c0_34, %c0_35] : memref<8x32xf32, #tpu.memory_space<vmem>>, vector<8x32xf32>
      %76 = arith.addf %74, %75 : vector<8x32xf32>
      %c0_36 = arith.constant 0 : index
      %c0_37 = arith.constant 0 : index
      %77 = vector.load %arg28[%c0_36, %c0_37] : memref<8x32xf32, #tpu.memory_space<vmem>>, vector<8x32xf32>
      tpu.vector_store %arg28[%c0_36, %c0_37], %76 {strides = array<i32>} : memref<8x32xf32, #tpu.memory_space<vmem>>, vector<8x32xf32>,
    } else {
    }
    return
  }
  func.func @transform_0(%arg0: i32, %arg1: i32, %arg2: memref<1x1xi32, #tpu.memory_space<smem>>) -> (i32, i32) {
    %c0_i32 = arith.constant 0 : i32
    %c0_i32_0 = arith.constant 0 : i32
    return %arg0, %c0_i32 : i32, i32
  }
  func.func @transform_1(%arg0: i32, %arg1: i32, %arg2: memref<1x1xi32, #tpu.memory_space<smem>>) -> (i32, i32) {
    %c0_i32 = arith.constant 0 : i32
    %c0_i32_0 = arith.constant 0 : i32
    return %arg1, %c0_i32 : i32, i32
  }
  func.func @transform_2(%arg0: i32, %arg1: i32, %arg2: memref<1x1xi32, #tpu.memory_space<smem>>) -> (i32, i32) {
    %c0_i32 = arith.constant 0 : i32
    %c0_i32_0 = arith.constant 0 : i32
    return %arg0, %c0_i32 : i32, i32
  }
  func.func @transform_3(%arg0: i32, %arg1: i32, %arg2: memref<1x1xi32, #tpu.memory_space<smem>>) -> (i32, i32) {
    %c0_i32 = arith.constant 0 : i32
    %c0_i32_0 = arith.constant 0 : i32
    return %arg1, %c0_i32 : i32, i32
  }
  func.func @transform_4(%arg0: i32, %arg1: i32, %arg2: memref<1x1xi32, #tpu.memory_space<smem>>) -> (i32, i32) {
    %c0_i32 = arith.constant 0 : i32
    %c0_i32_0 = arith.constant 0 : i32
    return %arg0, %c0_i32 : i32, i32
  }
  func.func @transform_5(%arg0: i32, %arg1: i32, %arg2: memref<1x1xi32, #tpu.memory_space<smem>>) -> (i32, i32) {
    %c0_i32 = arith.constant 0 : i32
    %c0_i32_0 = arith.constant 0 : i32
    return %arg1, %c0_i32 : i32, i32
  }
  func.func @transform_6(%arg0: i32, %arg1: i32, %arg2: memref<1x1xi32, #tpu.memory_space<smem>>) -> (i32, i32) {
    %c0_i32 = arith.constant 0 : i32
    %c0_i32_0 = arith.constant 0 : i32
    %c0_i32_1 = arith.constant 0 : i32
    return %c0_i32, %c0_i32_0 : i32, i32
  }
  func.func @transform_7(%arg0: i32, %arg1: i32, %arg2: memref<1x1xi32, #tpu.memory_space<smem>>) -> (i32, i32) {
    %c0_i32 = arith.constant 0 : i32
    %c0_i32_0 = arith.constant 0 : i32
    %c0_i32_1 = arith.constant 0 : i32
    return %c0_i32, %c0_i32_0 : i32, i32
  }
  func.func @transform_8(%arg0: i32, %arg1: i32, %arg2: memref<1x1xi32, #tpu.memory_space<smem>>) -> (i32, i32) {
    %c0_i32 = arith.constant 0 : i32
    %c0_i32_0 = arith.constant 0 : i32
    %c0_i32_1 = arith.constant 0 : i32
    return %c0_i32, %c0_i32_0 : i32, i32
  }
  func.func @transform_9(%arg0: i32, %arg1: i32, %arg2: memref<1x1xi32, #tpu.memory_space<smem>>) -> (i32, i32) {
    %c0_i32 = arith.constant 0 : i32
    %c0_i32_0 = arith.constant 0 : i32
    %c0_i32_1 = arith.constant 0 : i32
    return %c0_i32, %c0_i32_0 : i32, i32
  }
  func.func @transform_10(%arg0: i32, %arg1: i32, %arg2: memref<1x1xi32, #tpu.memory_space<smem>>) -> (i32, i32) {
    %c0_i32 = arith.constant 0 : i32
    %c0_i32_0 = arith.constant 0 : i32
    %c0_i32_1 = arith.constant 0 : i32
    return %c0_i32, %c0_i32_0 : i32, i32
  }
  func.func @transform_11(%arg0: i32, %arg1: i32, %arg2: memref<1x1xi32, #tpu.memory_space<smem>>) -> (i32, i32) {
    %c0_i32 = arith.constant 0 : i32
    %c0_i32_0 = arith.constant 0 : i32
    %c0_i32_1 = arith.constant 0 : i32
    return %c0_i32, %c0_i32_0 : i32, i32
  }
  func.func @transform_12(%arg0: i32, %arg1: i32, %arg2: memref<1x1xi32, #tpu.memory_space<smem>>) -> (i32, i32) {
    %c0_i32 = arith.constant 0 : i32
    %c0_i32_0 = arith.constant 0 : i32
    %c0_i32_1 = arith.constant 0 : i32
    return %c0_i32, %c0_i32_0 : i32, i32
  }
  func.func @transform_13(%arg0: i32, %arg1: i32, %arg2: memref<1x1xi32, #tpu.memory_space<smem>>) -> (i32, i32) {
    %c0_i32 = arith.constant 0 : i32
    %c0_i32_0 = arith.constant 0 : i32
    %c0_i32_1 = arith.constant 0 : i32
    return %c0_i32, %c0_i32_0 : i32, i32
  }
  func.func @transform_14(%arg0: i32, %arg1: i32, %arg2: memref<1x1xi32, #tpu.memory_space<smem>>) -> (i32, i32) {
    %c0_i32 = arith.constant 0 : i32
    %c0_i32_0 = arith.constant 0 : i32
    %c0_i32_1 = arith.constant 0 : i32
    return %c0_i32, %c0_i32_0 : i32, i32
  }
  func.func @transform_15(%arg0: i32, %arg1: i32, %arg2: memref<1x1xi32, #tpu.memory_space<smem>>) -> (i32, i32) {
    %c0_i32 = arith.constant 0 : i32
    %c0_i32_0 = arith.constant 0 : i32
    %c0_i32_1 = arith.constant 0 : i32
    return %c0_i32, %c0_i32_0 : i32, i32
  }
  func.func @transform_16(%arg0: i32, %arg1: i32, %arg2: memref<1x1xi32, #tpu.memory_space<smem>>) -> (i32, i32) {
    %c0_i32 = arith.constant 0 : i32
    %c0_i32_0 = arith.constant 0 : i32
    %c0_i32_1 = arith.constant 0 : i32
    return %c0_i32, %c0_i32_0 : i32, i32
  }
  func.func @transform_17(%arg0: i32, %arg1: i32, %arg2: memref<1x1xi32, #tpu.memory_space<smem>>) -> (i32, i32) {
    %c0_i32 = arith.constant 0 : i32
    %c0_i32_0 = arith.constant 0 : i32
    %c0_i32_1 = arith.constant 0 : i32
    return %c0_i32, %c0_i32_0 : i32, i32
  }
  func.func @transform_18(%arg0: i32, %arg1: i32, %arg2: memref<1x1xi32, #tpu.memory_space<smem>>) -> (i32, i32) {
    %c0_i32 = arith.constant 0 : i32
    %c0_i32_0 = arith.constant 0 : i32
    %c0_i32_1 = arith.constant 0 : i32
    return %c0_i32, %c0_i32_0 : i32, i32
  }
  func.func @transform_19(%arg0: i32, %arg1: i32, %arg2: memref<1x1xi32, #tpu.memory_space<smem>>) -> (i32, i32) {
    %c0_i32 = arith.constant 0 : i32
    %c0_i32_0 = arith.constant 0 : i32
    %c0_i32_1 = arith.constant 0 : i32
    return %c0_i32, %c0_i32_0 : i32, i32
  }
  func.func @transform_20(%arg0: i32, %arg1: i32, %arg2: memref<1x1xi32, #tpu.memory_space<smem>>) -> (i32, i32) {
    %c0_i32 = arith.constant 0 : i32
    %c0_i32_0 = arith.constant 0 : i32
    %c0_i32_1 = arith.constant 0 : i32
    return %c0_i32, %c0_i32_0 : i32, i32
  }
  func.func @transform_21(%arg0: i32, %arg1: i32, %arg2: memref<1x1xi32, #tpu.memory_space<smem>>) -> (i32, i32) {
    %c0_i32 = arith.constant 0 : i32
    %c0_i32_0 = arith.constant 0 : i32
    %c0_i32_1 = arith.constant 0 : i32
    return %c0_i32, %c0_i32_0 : i32, i32
  }
  func.func @transform_22(%arg0: i32, %arg1: i32, %arg2: memref<1x1xi32, #tpu.memory_space<smem>>) -> (i32, i32) {
    %c0_i32 = arith.constant 0 : i32
    %c0_i32_0 = arith.constant 0 : i32
    %c0_i32_1 = arith.constant 0 : i32
    return %c0_i32, %c0_i32_0 : i32, i32
  }
  func.func @transform_23(%arg0: i32, %arg1: i32, %arg2: memref<1x1xi32, #tpu.memory_space<smem>>) -> (i32, i32) {
    %c0_i32 = arith.constant 0 : i32
    %c0_i32_0 = arith.constant 0 : i32
    %c0_i32_1 = arith.constant 0 : i32
    return %c0_i32, %c0_i32_0 : i32, i32
  }
  func.func @transform_24(%arg0: i32, %arg1: i32, %arg2: memref<1x1xi32, #tpu.memory_space<smem>>) -> (i32, i32) {
    %c0_i32 = arith.constant 0 : i32
    %c0_i32_0 = arith.constant 0 : i32
    %c0_i32_1 = arith.constant 0 : i32
    return %c0_i32, %c0_i32_0 : i32, i32
  }
  func.func @transform_25(%arg0: i32, %arg1: i32, %arg2: memref<1x1xi32, #tpu.memory_space<smem>>) -> (i32, i32) {
    %c0_i32 = arith.constant 0 : i32
    %c0_i32_0 = arith.constant 0 : i32
    return %arg0, %c0_i32 : i32, i32
  }
}

</mosaic_0001>

<llo_original>
// kernel: net_forward.3
$region0: #{net_forward.3}
  #allocation0 [shape = 'u32[]', space=smem, size = 0x4, offset = 0x4, fixed_abs, tag = 'smem constant byte address 0x4 - core index']
  #allocation1 [shape = 'u32[144,128]{1,0:T(1,128)}', space=vmem, size = 0x12000, scoped, tag = 'internal scratch']
  #allocation2 [shape = 'f32[8,32]{1,0:T(8,128)}', space=vmem, size = 0x1000, scoped, tag = 'scratch operand']
  #allocation3 [shape = 'f32[8,32]{1,0:T(8,128)}', space=vmem, size = 0x1000, scoped, tag = 'scratch operand']
  #allocation4 [shape = 'f32[8,32]{1,0:T(8,128)}', space=vmem, size = 0x1000, scoped, tag = 'scratch operand']
  #allocation5 [shape = 's32[1]{0}', space=sflag, size = 0x4, scoped, tag = 'scoped memory for net_forward.3']
  #allocation6 [shape = 's32[1,1]{1,0:T(1,128)S(6)}', space=smem, size = 0x200, scoped, tag = 'prefetched SMEM operand 0']
  %s0 = inlined_call_operand.<no memory space> [shape: s32[1,1], index: 0, kind: input, shape index: {}]
  %s1 = inlined_call_operand.vmem [shape: f32[8,32], index: 1, kind: input, shape index: {}, may-alias: {1,2}]
  %s2 = inlined_call_operand.vmem [shape: f32[8,32], index: 2, kind: input, shape index: {}, may-alias: {1,2}]
  %s3 = inlined_call_operand.vmem [shape: f32[8,2], index: 3, kind: input, shape index: {}, may-alias: {3,4}]
  %s4 = inlined_call_operand.vmem [shape: f32[8,2], index: 4, kind: input, shape index: {}, may-alias: {3,4}]
  %s5 = inlined_call_operand.vmem [shape: f32[8,1], index: 5, kind: input, shape index: {}, may-alias: {5,6}]
  %s6 = inlined_call_operand.vmem [shape: f32[8,1], index: 6, kind: input, shape index: {}, may-alias: {5,6}]
  %s7 = inlined_call_operand.vmem [shape: f32[2,32], index: 7, kind: input, shape index: {}]
  %s8 = inlined_call_operand.vmem [shape: f32[1,32], index: 8, kind: input, shape index: {}]
  %s9 = inlined_call_operand.vmem [shape: bf16[32,32], index: 9, kind: input, shape index: {}]
  %s10 = inlined_call_operand.vmem [shape: f32[1,32], index: 10, kind: input, shape index: {}]
  %s11 = inlined_call_operand.vmem [shape: f32[1,32], index: 11, kind: input, shape index: {}]
  %s12 = inlined_call_operand.vmem [shape: bf16[32,64], index: 12, kind: input, shape index: {}]
  %s13 = inlined_call_operand.vmem [shape: f32[1,32], index: 13, kind: input, shape index: {}]
  %s14 = inlined_call_operand.vmem [shape: f32[1,32], index: 14, kind: input, shape index: {}]
  %s15 = inlined_call_operand.vmem [shape: bf16[32,32], index: 15, kind: input, shape index: {}]
  %s16 = inlined_call_operand.vmem [shape: bf16[32,32], index: 16, kind: input, shape index: {}]
  %s17 = inlined_call_operand.vmem [shape: bf16[32,32], index: 17, kind: input, shape index: {}]
  %s18 = inlined_call_operand.vmem [shape: f32[1,32], index: 18, kind: input, shape index: {}]
  %s19 = inlined_call_operand.vmem [shape: f32[1,32], index: 19, kind: input, shape index: {}]
  %s20 = inlined_call_operand.vmem [shape: bf16[32,32], index: 20, kind: input, shape index: {}]
  %s21 = inlined_call_operand.vmem [shape: f32[1,32], index: 21, kind: input, shape index: {}]
  %s22 = inlined_call_operand.vmem [shape: f32[1,32], index: 22, kind: input, shape index: {}]
  %s23 = inlined_call_operand.vmem [shape: bf16[32,32], index: 23, kind: input, shape index: {}]
  %s24 = inlined_call_operand.vmem [shape: f32[1,32], index: 24, kind: input, shape index: {}]
  %s25 = inlined_call_operand.vmem [shape: f32[1,32], index: 25, kind: input, shape index: {}]
  %s26 = inlined_call_operand.hbm [shape: f32[8,32], index: 26, kind: output, shape index: {}]
  %s27 = sld [smem:[#allocation0]]
  $region122: #{net_forward.3} parent=0
    _
  %s29 = ssub.s32 1, %s27
  %s30 = scalar_select 0, %s29, %s27
  %31 = sst [smem:[#allocation6]] %s0
  $region1: #{net_forward.3} parent=0
    #allocation7 [shape = 'u8[4096]{0}', space=vmem, size = 0x1000, scoped, tag = 'output window, operand 0, single buffered']
    #allocation8 [shape = 's32[1]{0}', space=sflag, size = 0x4, scoped, tag = 'scoped memory for net_forward.3']
    %32 = vsyncpa [#allocation8], 0
    // Predicated region
    $region2: #{net_forward.3} parent=1 // pred_check
      _
    $region3: #{net_forward.3} parent=1 // pred_check_branch
      %34 = sbr.rel (0) target = $region5
    $region4: #{net_forward.3} parent=1 // pred_region
      _
    $region5: #{net_forward.3} parent=1 // pred_fallthru
      _
    // Predicated region
    $region6: #{net_forward.3} parent=1 // pred_check
      _
    $region7: #{net_forward.3} parent=1 // pred_check_branch
      %36 = sbr.rel (0) target = $region9
    $region8: #{net_forward.3} parent=1 // pred_region
      _
    $region9: #{net_forward.3} parent=1 // pred_fallthru
      _
    // Predicated region
    $region10: #{net_forward.3} parent=1 // pred_check
      _
    $region11: #{net_forward.3} parent=1 // pred_check_branch
      %38 = sbr.rel (0) target = $region13
    $region12: #{net_forward.3} parent=1 // pred_region
      _
    $region13: #{net_forward.3} parent=1 // pred_fallthru
      _
    // Predicated region
    $region14: #{net_forward.3} parent=1 // pred_check
      _
    $region15: #{net_forward.3} parent=1 // pred_check_branch
      %40 = sbr.rel (0) target = $region17
    $region16: #{net_forward.3} parent=1 // pred_region
      _
    $region17: #{net_forward.3} parent=1 // pred_fallthru
      _
    // Predicated region
    $region18: #{net_forward.3} parent=1 // pred_check
      _
    $region19: #{net_forward.3} parent=1 // pred_check_branch
      %42 = sbr.rel (0) target = $region21
    $region20: #{net_forward.3} parent=1 // pred_region
      _
    $region21: #{net_forward.3} parent=1 // pred_fallthru
      _
    // Predicated region
    $region22: #{net_forward.3} parent=1 // pred_check
      _
    $region23: #{net_forward.3} parent=1 // pred_check_branch
      %44 = sbr.rel (0) target = $region25
    $region24: #{net_forward.3} parent=1 // pred_region
      _
    $region25: #{net_forward.3} parent=1 // pred_fallthru
      _
    // Predicated region
    $region26: #{net_forward.3} parent=1 // pred_check
      _
    $region27: #{net_forward.3} parent=1 // pred_check_branch
      %46 = sbr.rel (0) target = $region29
    $region28: #{net_forward.3} parent=1 // pred_region
      _
    $region29: #{net_forward.3} parent=1 // pred_fallthru
      _
    // Predicated region
    $region30: #{net_forward.3} parent=1 // pred_check
      _
    $region31: #{net_forward.3} parent=1 // pred_check_branch
      %48 = sbr.rel (0) target = $region33
    $region32: #{net_forward.3} parent=1 // pred_region
      _
    $region33: #{net_forward.3} parent=1 // pred_fallthru
      _
    // Predicated region
    $region34: #{net_forward.3} parent=1 // pred_check
      _
    $region35: #{net_forward.3} parent=1 // pred_check_branch
      %50 = sbr.rel (0) target = $region37
    $region36: #{net_forward.3} parent=1 // pred_region
      _
    $region37: #{net_forward.3} parent=1 // pred_fallthru
      _
    // Predicated region
    $region38: #{net_forward.3} parent=1 // pred_check
      _
    $region39: #{net_forward.3} parent=1 // pred_check_branch
      %52 = sbr.rel (0) target = $region41
    $region40: #{net_forward.3} parent=1 // pred_region
      _
    $region41: #{net_forward.3} parent=1 // pred_fallthru
      _
    // Predicated region
    $region42: #{net_forward.3} parent=1 // pred_check
      _
    $region43: #{net_forward.3} parent=1 // pred_check_branch
      %54 = sbr.rel (0) target = $region45
    $region44: #{net_forward.3} parent=1 // pred_region
      _
    $region45: #{net_forward.3} parent=1 // pred_fallthru
      _
    // Predicated region
    $region46: #{net_forward.3} parent=1 // pred_check
      _
    $region47: #{net_forward.3} parent=1 // pred_check_branch
      %56 = sbr.rel (0) target = $region49
    $region48: #{net_forward.3} parent=1 // pred_region
      _
    $region49: #{net_forward.3} parent=1 // pred_fallthru
      _
    // Predicated region
    $region50: #{net_forward.3} parent=1 // pred_check
      _
    $region51: #{net_forward.3} parent=1 // pred_check_branch
      %58 = sbr.rel (0) target = $region53
    $region52: #{net_forward.3} parent=1 // pred_region
      _
    $region53: #{net_forward.3} parent=1 // pred_fallthru
      _
    // Predicated region
    $region54: #{net_forward.3} parent=1 // pred_check
      _
    $region55: #{net_forward.3} parent=1 // pred_check_branch
      %60 = sbr.rel (0) target = $region57
    $region56: #{net_forward.3} parent=1 // pred_region
      _
    $region57: #{net_forward.3} parent=1 // pred_fallthru
      _
    // Predicated region
    $region58: #{net_forward.3} parent=1 // pred_check
      _
    $region59: #{net_forward.3} parent=1 // pred_check_branch
      %62 = sbr.rel (0) target = $region61
    $region60: #{net_forward.3} parent=1 // pred_region
      _
    $region61: #{net_forward.3} parent=1 // pred_fallthru
      _
    // Predicated region
    $region62: #{net_forward.3} parent=1 // pred_check
      _
    $region63: #{net_forward.3} parent=1 // pred_check_branch
      %64 = sbr.rel (0) target = $region65
    $region64: #{net_forward.3} parent=1 // pred_region
      _
    $region65: #{net_forward.3} parent=1 // pred_fallthru
      _
    // Predicated region
    $region66: #{net_forward.3} parent=1 // pred_check
      _
    $region67: #{net_forward.3} parent=1 // pred_check_branch
      %66 = sbr.rel (0) target = $region69
    $region68: #{net_forward.3} parent=1 // pred_region
      _
    $region69: #{net_forward.3} parent=1 // pred_fallthru
      _
    // Predicated region
    $region70: #{net_forward.3} parent=1 // pred_check
      _
    $region71: #{net_forward.3} parent=1 // pred_check_branch
      %68 = sbr.rel (0) target = $region73
    $region72: #{net_forward.3} parent=1 // pred_region
      _
    $region73: #{net_forward.3} parent=1 // pred_fallthru
      _
    // Predicated region
    $region74: #{net_forward.3} parent=1 // pred_check
      _
    $region75: #{net_forward.3} parent=1 // pred_check_branch
      %70 = sbr.rel (0) target = $region77
    $region76: #{net_forward.3} parent=1 // pred_region
      _
    $region77: #{net_forward.3} parent=1 // pred_fallthru
      _
    // Predicated region
    $region78: #{net_forward.3} parent=1 // pred_check
      _
    $region79: #{net_forward.3} parent=1 // pred_check_branch
      %72 = sbr.rel (0) target = $region81
    $region80: #{net_forward.3} parent=1 // pred_region
      _
    $region81: #{net_forward.3} parent=1 // pred_fallthru
      _
    // Predicated region
    $region82: #{net_forward.3} parent=1 // pred_check
      _
    $region83: #{net_forward.3} parent=1 // pred_check_branch
      %74 = sbr.rel (0) target = $region85
    $region84: #{net_forward.3} parent=1 // pred_region
      _
    $region85: #{net_forward.3} parent=1 // pred_fallthru
      _
    // Predicated region
    $region86: #{net_forward.3} parent=1 // pred_check
      _
    $region87: #{net_forward.3} parent=1 // pred_check_branch
      %76 = sbr.rel (0) target = $region89
    $region88: #{net_forward.3} parent=1 // pred_region
      _
    $region89: #{net_forward.3} parent=1 // pred_fallthru
      _
    // Predicated region
    $region90: #{net_forward.3} parent=1 // pred_check
      _
    $region91: #{net_forward.3} parent=1 // pred_check_branch
      %78 = sbr.rel (0) target = $region93
    $region92: #{net_forward.3} parent=1 // pred_region
      _
    $region93: #{net_forward.3} parent=1 // pred_fallthru
      _
    // Predicated region
    $region94: #{net_forward.3} parent=1 // pred_check
      _
    $region95: #{net_forward.3} parent=1 // pred_check_branch
      %80 = sbr.rel (0) target = $region97
    $region96: #{net_forward.3} parent=1 // pred_region
      _
    $region97: #{net_forward.3} parent=1 // pred_fallthru
      _
    // Predicated region
    $region98: #{net_forward.3} parent=1 // pred_check
      _
    $region99: #{net_forward.3} parent=1 // pred_check_branch
      %82 = sbr.rel (0) target = $region101
    $region100: #{net_forward.3} parent=1 // pred_region
      _
    $region101: #{net_forward.3} parent=1 // pred_fallthru
      _
    %p84 = scmp.eq.s32.totalorder 0, 0
    // Predicated region
    $region102: #{net_forward.3} parent=1 // pred_check
      %p85 = pneg %p84
    $region103: #{net_forward.3} parent=1 // pred_check_branch
      %87 = sbr.rel (%p85) target = $region105
    $region104: #{net_forward.3} parent=1 // pred_region
      %vm88 = vcmask 261120
      %89 = vst.msk [vmem:[#allocation2] sm:$0xff] %vm88, 0.0
      %v90 = vld [vmem:[%s1] sm:$0xff]
      %v91 = vld [vmem:[%s12] sm:$0xf]
      %v92 = vld [vmem:[%s12 + $0x4] sm:$0xf]
      %v93 = vld [vmem:[%s12 + $0x8] sm:$0xf]
      %v94 = vld [vmem:[%s12 + $0xc] sm:$0xf]
      %v95 = vpack.c.bf16 %v90, %v90
      %v100 = vunpack.c.l.b16 %v91
      %v101 = vunpack.c.l.b16 %v92
      %v102 = vunpack.c.l.b16 %v93
      %v103 = vunpack.c.l.b16 %v94
      %v104 = vpack.c.b16 %v101, %v100
      %v105 = vpack.c.b16 %v103, %v102
      %v109 = vsel %vm88, %v95, 0
      %111 = vmatprep.subr.bf16.mxu0 0
      %112 = vmatpush1.bf16.msra.mxu0 %v104
      %113 = vmatprep.subr.bf16.mxu0 0
      %114 = vmatpush1.bf16.msra.mxu0 %v105
      %115 = vmatprep.subr.bf16.mxu0 0
      %116 = vmatpush1.bf16.msra.mxu0 0
      %117 = vmatprep.subr.bf16.mxu0 0
      %118 = vmatpush1.bf16.msra.mxu0 0
      %119 = vmatprep.subr.bf16.mxu0 0
      %120 = vmatpush1.bf16.msra.mxu0 0
      %121 = vmatprep.subr.bf16.mxu0 0
      %122 = vmatpush1.bf16.msra.mxu0 0
      %123 = vmatprep.subr.bf16.mxu0 0
      %124 = vmatpush1.bf16.msra.mxu0 0
      %125 = vmatprep.subr.bf16.mxu0 0
      %126 = vmatpush1.bf16.msra.mxu0 0
      %127 = vmatprep.subr.bf16.mxu0 0
      %128 = vmatpush1.bf16.msra.mxu0 0
      %129 = vmatprep.subr.bf16.mxu0 0
      %130 = vmatpush1.bf16.msra.mxu0 0
      %131 = vmatprep.subr.bf16.mxu0 0
      %132 = vmatpush1.bf16.msra.mxu0 0
      %133 = vmatprep.subr.bf16.mxu0 0
      %134 = vmatpush1.bf16.msra.mxu0 0
      %135 = vmatprep.subr.bf16.mxu0 0
      %136 = vmatpush1.bf16.msra.mxu0 0
      %137 = vmatprep.subr.bf16.mxu0 0
      %138 = vmatpush1.bf16.msra.mxu0 0
      %139 = vmatprep.subr.bf16.mxu0 0
      %140 = vmatpush1.bf16.msra.mxu0 0
      %141 = vmatprep.subr.bf16.mxu0 0
      %142 = vmatpush1.bf16.msra.mxu0 0
      %143 = vmatprep.mubr.bf16.mxu0 0
      %144 = vmatmul.mubr.bf16.gmra.mrb[0].mxu0 %v109
      %v145 = vpop.f32.mrb[0].mxu0
      %v146 = vadd.f32 0.0, %v145
      %v147 = vpop.f32.mrb[0].mxu0
      %v148 = vpop.f32.mrb[0].mxu0
      %v149 = vpop.f32.mrb[0].mxu0
      %150 = vdwg.mxu0
      %v151 = vld [vmem:[%s13] sm:$0x1]
      %v152 = vld [vmem:[%s14] sm:$0x1]
      %v153 = vsel %vm88, %v146, 0.0
      %154 = vadd.xlane.f32.xlu0 %v153
      %v155 = vpop.xlane.xlu0 %154
      %v156 = vrcp.pop 32.0
      %v157 = vmul.f32 %v155, %v156
      %v158 = vmul.f32 %v146, %v146
      %v159 = vsel %vm88, %v158, 0.0
      %160 = vadd.xlane.f32.xlu0 %v159
      %v161 = vpop.xlane.xlu0 %160
      %v162 = vmul.f32 %v161, %v156
      %v163 = vmul.f32 %v157, %v157
      %v164 = vsub.f32 %v162, %v163
      %v165 = vmax.f32 %v164, 0.0
      %v166 = vsub.f32 %v146, %v157
      %v167 = vadd.f32 %v165, 1e-05
      %v168 = vrsqrt.pop %v167
      %v170 = vlaneseq
      %v171 = vshrl.u32 %v170, 7
      %v172 = vsub.s32 0, %v171
      %v173 = vrot.slane %v151, %v172
      %v175 = vmul.f32 %v168, %v173
      %v176 = vmul.f32 %v166, %v175
      %v178 = vlaneseq
      %v179 = vshrl.u32 %v178, 7
      %v180 = vsub.s32 0, %v179
      %v181 = vrot.slane %v152, %v180
      %v183 = vadd.f32 %v176, %v181
      %v184 = vmax.f32 %v183, 0.0
      %v185 = vld [vmem:[%s16] sm:$0xf]
      %v186 = vld [vmem:[%s16 + $0x4] sm:$0xf]
      %v187 = vld [vmem:[%s16 + $0x8] sm:$0xf]
      %v188 = vld [vmem:[%s16 + $0xc] sm:$0xf]
      %v189 = vpack.c.bf16 %v184, %v184
      %v194 = vunpack.c.l.b16 %v185
      %v195 = vunpack.c.l.b16 %v186
      %v196 = vunpack.c.l.b16 %v187
      %v197 = vunpack.c.l.b16 %v188
      %v198 = vpack.c.b16 %v195, %v194
      %v199 = vpack.c.b16 %v197, %v196
      %v203 = vsel %vm88, %v189, 0
      %205 = vmatprep.subr.bf16.mxu0 0
      %206 = vmatpush1.bf16.msra.mxu0 %v198
      %207 = vmatprep.subr.bf16.mxu0 0
      %208 = vmatpush1.bf16.msra.mxu0 %v199
      %209 = vmatprep.subr.bf16.mxu0 0
      %210 = vmatpush1.bf16.msra.mxu0 0
      %211 = vmatprep.subr.bf16.mxu0 0
      %212 = vmatpush1.bf16.msra.mxu0 0
      %213 = vmatprep.subr.bf16.mxu0 0
      %214 = vmatpush1.bf16.msra.mxu0 0
      %215 = vmatprep.subr.bf16.mxu0 0
      %216 = vmatpush1.bf16.msra.mxu0 0
      %217 = vmatprep.subr.bf16.mxu0 0
      %218 = vmatpush1.bf16.msra.mxu0 0
      %219 = vmatprep.subr.bf16.mxu0 0
      %220 = vmatpush1.bf16.msra.mxu0 0
      %221 = vmatprep.subr.bf16.mxu0 0
      %222 = vmatpush1.bf16.msra.mxu0 0
      %223 = vmatprep.subr.bf16.mxu0 0
      %224 = vmatpush1.bf16.msra.mxu0 0
      %225 = vmatprep.subr.bf16.mxu0 0
      %226 = vmatpush1.bf16.msra.mxu0 0
      %227 = vmatprep.subr.bf16.mxu0 0
      %228 = vmatpush1.bf16.msra.mxu0 0
      %229 = vmatprep.subr.bf16.mxu0 0
      %230 = vmatpush1.bf16.msra.mxu0 0
      %231 = vmatprep.subr.bf16.mxu0 0
      %232 = vmatpush1.bf16.msra.mxu0 0
      %233 = vmatprep.subr.bf16.mxu0 0
      %234 = vmatpush1.bf16.msra.mxu0 0
      %235 = vmatprep.subr.bf16.mxu0 0
      %236 = vmatpush1.bf16.msra.mxu0 0
      %237 = vmatprep.mubr.bf16.mxu0 0
      %238 = vmatmul.mubr.bf16.gmra.mrb[0].mxu0 %v203
      %v239 = vpop.f32.mrb[0].mxu0
      %v240 = vadd.f32 0.0, %v239
      %v241 = vpop.f32.mrb[0].mxu0
      %v242 = vpop.f32.mrb[0].mxu0
      %v243 = vpop.f32.mrb[0].mxu0
      %244 = vdwg.mxu0
      %245 = vst.msk [vmem:[#allocation3] sm:$0xff] %vm88, %v240
      %247 = vrot.lane.b32.xlu0 %v146, 96
      %v248 = vpop.permute.xlu0 %247
      %250 = vst.msk [vmem:[#allocation4] sm:$0xff] %vm88, %v248
    $region105: #{net_forward.3} parent=1 // pred_fallthru
      _
    %s251 = sadd.s32 0, 0
    %s252 = smul.u32 %s251, 128
    %s253 = sadd.s32 %s252, 0
    %s254 = sld [smem:[#allocation6 + %s253]]
    %p255 = scmp.gt.s32.totalorder %s254, 0
    // Predicated region
    $region106: #{net_forward.3} parent=1 // pred_check
      %p256 = pneg %p255
    $region107: #{net_forward.3} parent=1 // pred_check_branch
      %258 = sbr.rel (%p256) target = $region109
    $region108: #{net_forward.3} parent=1 // pred_region
      %v259 = vld [vmem:[%s3] sm:$0xff]
      %v260 = vld [vmem:[%s4] sm:$0xff]
      %261 = vxpose.xlu0.b32.start [1/16] %v260, 128
      %262 = vxpose.xlu0.b32.cont [2/16] 0.0, 128
      %263 = vxpose.xlu0.b32.cont [3/16] 0.0, 128
      %264 = vxpose.xlu0.b32.cont [4/16] 0.0, 128
      %265 = vxpose.xlu0.b32.cont [5/16] 0.0, 128
      %266 = vxpose.xlu0.b32.cont [6/16] 0.0, 128
      %267 = vxpose.xlu0.b32.cont [7/16] 0.0, 128
      %268 = vxpose.xlu0.b32.cont [8/16] 0.0, 128
      %269 = vxpose.xlu0.b32.cont [9/16] 0.0, 128
      %270 = vxpose.xlu0.b32.cont [10/16] 0.0, 128
      %271 = vxpose.xlu0.b32.cont [11/16] 0.0, 128
      %272 = vxpose.xlu0.b32.cont [12/16] 0.0, 128
      %273 = vxpose.xlu0.b32.cont [13/16] 0.0, 128
      %274 = vxpose.xlu0.b32.cont [14/16] 0.0, 128
      %275 = vxpose.xlu0.b32.cont [15/16] 0.0, 128
      %276 = vxpose.xlu0.b32.end [16/16] 0.0, 128
      %v277 = vpop.trf.xlu0
      %v278 = vpop.trf.xlu0
      %v279 = vpop.trf.xlu0
      %v280 = vpop.trf.xlu0
      %v281 = vpop.trf.xlu0
      %v282 = vpop.trf.xlu0
      %v283 = vpop.trf.xlu0
      %v284 = vpop.trf.xlu0
      %v285 = vpop.trf.xlu0
      %v286 = vpop.trf.xlu0
      %v287 = vpop.trf.xlu0
      %v288 = vpop.trf.xlu0
      %v289 = vpop.trf.xlu0
      %v290 = vpop.trf.xlu0
      %v291 = vpop.trf.xlu0
      %v292 = vpop.trf.xlu0
      %294 = vset.pattern.permute.xlu0 0
      %295 = vperm.xlu0 %294, %v259
      %v296 = vpop.permute.xlu0 %295
      %v298 = vlaneseq
      %v299 = vshrl.u32 %v298, 7
      %v300 = vsub.s32 0, %v299
      %v301 = vrot.slane %v277, %v300
      %v302 = vsub.f32 %v296, %v301
      %304 = vrot.lane.b32.xlu0 %v260, 127
      %v305 = vpop.permute.xlu0 %304
      %307 = vxpose.xlu0.b32.start [1/16] %v305, 128
      %308 = vxpose.xlu0.b32.cont [2/16] 0.0, 128
      %309 = vxpose.xlu0.b32.cont [3/16] 0.0, 128
      %310 = vxpose.xlu0.b32.cont [4/16] 0.0, 128
      %311 = vxpose.xlu0.b32.cont [5/16] 0.0, 128
      %312 = vxpose.xlu0.b32.cont [6/16] 0.0, 128
      %313 = vxpose.xlu0.b32.cont [7/16] 0.0, 128
      %314 = vxpose.xlu0.b32.cont [8/16] 0.0, 128
      %315 = vxpose.xlu0.b32.cont [9/16] 0.0, 128
      %316 = vxpose.xlu0.b32.cont [10/16] 0.0, 128
      %317 = vxpose.xlu0.b32.cont [11/16] 0.0, 128
      %318 = vxpose.xlu0.b32.cont [12/16] 0.0, 128
      %319 = vxpose.xlu0.b32.cont [13/16] 0.0, 128
      %320 = vxpose.xlu0.b32.cont [14/16] 0.0, 128
      %321 = vxpose.xlu0.b32.cont [15/16] 0.0, 128
      %322 = vxpose.xlu0.b32.end [16/16] 0.0, 128
      %v323 = vpop.trf.xlu0
      %v324 = vpop.trf.xlu0
      %v325 = vpop.trf.xlu0
      %v326 = vpop.trf.xlu0
      %v327 = vpop.trf.xlu0
      %v328 = vpop.trf.xlu0
      %v329 = vpop.trf.xlu0
      %v330 = vpop.trf.xlu0
      %v331 = vpop.trf.xlu0
      %v332 = vpop.trf.xlu0
      %v333 = vpop.trf.xlu0
      %v334 = vpop.trf.xlu0
      %v335 = vpop.trf.xlu0
      %v336 = vpop.trf.xlu0
      %v337 = vpop.trf.xlu0
      %v338 = vpop.trf.xlu0
      %339 = vset.pattern.permute.xlu0 1
      %340 = vperm.xlu0 %339, %v259
      %v341 = vpop.permute.xlu0 %340
      %v343 = vlaneseq
      %v344 = vshrl.u32 %v343, 7
      %v345 = vsub.s32 0, %v344
      %v346 = vrot.slane %v323, %v345
      %v347 = vsub.f32 %v341, %v346
      %v348 = vmul.f32 %v302, %v302
      %v349 = vmul.f32 %v347, %v347
      %v350 = vadd.f32 %v348, %v349
      %v351 = vld [vmem:[%s5] sm:$0xff]
      %v352 = vld [vmem:[%s6] sm:$0xff]
      %353 = vxpose.xlu0.b32.start [1/16] %v352, 128
      %354 = vxpose.xlu0.b32.cont [2/16] 0.0, 128
      %355 = vxpose.xlu0.b32.cont [3/16] 0.0, 128
      %356 = vxpose.xlu0.b32.cont [4/16] 0.0, 128
      %357 = vxpose.xlu0.b32.cont [5/16] 0.0, 128
      %358 = vxpose.xlu0.b32.cont [6/16] 0.0, 128
      %359 = vxpose.xlu0.b32.cont [7/16] 0.0, 128
      %360 = vxpose.xlu0.b32.cont [8/16] 0.0, 128
      %361 = vxpose.xlu0.b32.cont [9/16] 0.0, 128
      %362 = vxpose.xlu0.b32.cont [10/16] 0.0, 128
      %363 = vxpose.xlu0.b32.cont [11/16] 0.0, 128
      %364 = vxpose.xlu0.b32.cont [12/16] 0.0, 128
      %365 = vxpose.xlu0.b32.cont [13/16] 0.0, 128
      %366 = vxpose.xlu0.b32.cont [14/16] 0.0, 128
      %367 = vxpose.xlu0.b32.cont [15/16] 0.0, 128
      %368 = vxpose.xlu0.b32.end [16/16] 0.0, 128
      %v369 = vpop.trf.xlu0
      %v370 = vpop.trf.xlu0
      %v371 = vpop.trf.xlu0
      %v372 = vpop.trf.xlu0
      %v373 = vpop.trf.xlu0
      %v374 = vpop.trf.xlu0
      %v375 = vpop.trf.xlu0
      %v376 = vpop.trf.xlu0
      %v377 = vpop.trf.xlu0
      %v378 = vpop.trf.xlu0
      %v379 = vpop.trf.xlu0
      %v380 = vpop.trf.xlu0
      %v381 = vpop.trf.xlu0
      %v382 = vpop.trf.xlu0
      %v383 = vpop.trf.xlu0
      %v384 = vpop.trf.xlu0
      %386 = vset.pattern.permute.xlu0 0
      %387 = vperm.xlu0 %386, %v351
      %v388 = vpop.permute.xlu0 %387
      %v390 = vlaneseq
      %v391 = vshrl.u32 %v390, 7
      %v392 = vsub.s32 0, %v391
      %v393 = vrot.slane %v369, %v392
      %v394 = vsub.f32 %v388, %v393
      %vm395 = vcmp.eq.f32.partialorder %v394, 0.0
      %vm396 = vcmp.le.f32.partialorder %v350, 36.0
      %vm397 = vmand %vm396, %vm395
      %v398 = vsel %vm397, 1.0, 0.0
      %v399 = vld [vmem:[%s7] sm:$0x3]
      %v400 = vlaneseq
      %v401 = vshrl.u32 %v400, 7
      %v402 = vsub.s32 0, %v401
      %v403 = vrot.slane %v302, %v402
      %405 = vbcast.lane.b32.xlu0 %v403, 256
      %v406 = vpop.permute.xlu0 %405
      %v407 = vlaneseq
      %v408 = vshrl.u32 %v407, 7
      %v409 = vsub.s32 1, %v408
      %v410 = vrot.slane %v302, %v409
      %412 = vbcast.lane.b32.xlu0 %v410, 256
      %v413 = vpop.permute.xlu0 %412
      %v414 = vlaneseq
      %v415 = vshrl.u32 %v414, 7
      %v416 = vsub.s32 2, %v415
      %v417 = vrot.slane %v302, %v416
      %419 = vbcast.lane.b32.xlu0 %v417, 256
      %v420 = vpop.permute.xlu0 %419
      %v421 = vlaneseq
      %v422 = vshrl.u32 %v421, 7
      %v423 = vsub.s32 3, %v422
      %v424 = vrot.slane %v302, %v423
      %426 = vbcast.lane.b32.xlu0 %v424, 256
      %v427 = vpop.permute.xlu0 %426
      %v428 = vlaneseq
      %v429 = vshrl.u32 %v428, 7
      %v430 = vsub.s32 4, %v429
      %v431 = vrot.slane %v302, %v430
      %433 = vbcast.lane.b32.xlu0 %v431, 256
      %v434 = vpop.permute.xlu0 %433
      %v435 = vlaneseq
      %v436 = vshrl.u32 %v435, 7
      %v437 = vsub.s32 5, %v436
      %v438 = vrot.slane %v302, %v437
      %440 = vbcast.lane.b32.xlu0 %v438, 256
      %v441 = vpop.permute.xlu0 %440
      %v442 = vlaneseq
      %v443 = vshrl.u32 %v442, 7
      %v444 = vsub.s32 6, %v443
      %v445 = vrot.slane %v302, %v444
      %447 = vbcast.lane.b32.xlu0 %v445, 256
      %v448 = vpop.permute.xlu0 %447
      %v449 = vlaneseq
      %v450 = vshrl.u32 %v449, 7
      %v451 = vsub.s32 7, %v450
      %v452 = vrot.slane %v302, %v451
      %454 = vbcast.lane.b32.xlu0 %v452, 256
      %v455 = vpop.permute.xlu0 %454
      %v456 = vlaneseq
      %v457 = vshrl.u32 %v456, 7
      %v458 = vsub.s32 0, %v457
      %v459 = vrot.slane %v399, %v458
      %v460 = vmul.f32 %v406, %v459
      %v461 = vmul.f32 %v413, %v459
      %v462 = vmul.f32 %v420, %v459
      %v463 = vmul.f32 %v427, %v459
      %v464 = vmul.f32 %v434, %v459
      %v465 = vmul.f32 %v441, %v459
      %v466 = vmul.f32 %v448, %v459
      %v467 = vmul.f32 %v455, %v459
      %v468 = vlaneseq
      %v469 = vshrl.u32 %v468, 7
      %v470 = vsub.s32 0, %v469
      %v471 = vrot.slane %v347, %v470
      %473 = vbcast.lane.b32.xlu0 %v471, 256
      %v474 = vpop.permute.xlu0 %473
      %v475 = vlaneseq
      %v476 = vshrl.u32 %v475, 7
      %v477 = vsub.s32 1, %v476
      %v478 = vrot.slane %v347, %v477
      %480 = vbcast.lane.b32.xlu0 %v478, 256
      %v481 = vpop.permute.xlu0 %480
      %v482 = vlaneseq
      %v483 = vshrl.u32 %v482, 7
      %v484 = vsub.s32 2, %v483
      %v485 = vrot.slane %v347, %v484
      %487 = vbcast.lane.b32.xlu0 %v485, 256
      %v488 = vpop.permute.xlu0 %487
      %v489 = vlaneseq
      %v490 = vshrl.u32 %v489, 7
      %v491 = vsub.s32 3, %v490
      %v492 = vrot.slane %v347, %v491
      %494 = vbcast.lane.b32.xlu0 %v492, 256
      %v495 = vpop.permute.xlu0 %494
      %v496 = vlaneseq
      %v497 = vshrl.u32 %v496, 7
      %v498 = vsub.s32 4, %v497
      %v499 = vrot.slane %v347, %v498
      %501 = vbcast.lane.b32.xlu0 %v499, 256
      %v502 = vpop.permute.xlu0 %501
      %v503 = vlaneseq
      %v504 = vshrl.u32 %v503, 7
      %v505 = vsub.s32 5, %v504
      %v506 = vrot.slane %v347, %v505
      %508 = vbcast.lane.b32.xlu0 %v506, 256
      %v509 = vpop.permute.xlu0 %508
      %v510 = vlaneseq
      %v511 = vshrl.u32 %v510, 7
      %v512 = vsub.s32 6, %v511
      %v513 = vrot.slane %v347, %v512
      %515 = vbcast.lane.b32.xlu0 %v513, 256
      %v516 = vpop.permute.xlu0 %515
      %v517 = vlaneseq
      %v518 = vshrl.u32 %v517, 7
      %v519 = vsub.s32 7, %v518
      %v520 = vrot.slane %v347, %v519
      %522 = vbcast.lane.b32.xlu0 %v520, 256
      %v523 = vpop.permute.xlu0 %522
      %v524 = vlaneseq
      %v525 = vshrl.u32 %v524, 7
      %v526 = vsub.s32 1, %v525
      %v527 = vrot.slane %v399, %v526
      %v528 = vmul.f32 %v474, %v527
      %v529 = vmul.f32 %v481, %v527
      %v530 = vmul.f32 %v488, %v527
      %v531 = vmul.f32 %v495, %v527
      %v532 = vmul.f32 %v502, %v527
      %v533 = vmul.f32 %v509, %v527
      %v534 = vmul.f32 %v516, %v527
      %v535 = vmul.f32 %v523, %v527
      %v536 = vadd.f32 %v460, %v528
      %v537 = vadd.f32 %v461, %v529
      %v538 = vadd.f32 %v462, %v530
      %v539 = vadd.f32 %v463, %v531
      %v540 = vadd.f32 %v464, %v532
      %v541 = vadd.f32 %v465, %v533
      %v542 = vadd.f32 %v466, %v534
      %v543 = vadd.f32 %v467, %v535
      %v544 = vld [vmem:[%s8] sm:$0x1]
      %v546 = vlaneseq
      %v547 = vshrl.u32 %v546, 7
      %v548 = vsub.s32 0, %v547
      %v549 = vrot.slane %v544, %v548
      %v551 = vadd.f32 %v536, %v549
      %v552 = vadd.f32 %v537, %v549
      %v553 = vadd.f32 %v538, %v549
      %v554 = vadd.f32 %v539, %v549
      %v555 = vadd.f32 %v540, %v549
      %v556 = vadd.f32 %v541, %v549
      %v557 = vadd.f32 %v542, %v549
      %v558 = vadd.f32 %v543, %v549
      %v559 = vmax.f32 %v551, 0.0
      %v560 = vmax.f32 %v552, 0.0
      %v561 = vmax.f32 %v553, 0.0
      %v562 = vmax.f32 %v554, 0.0
      %v563 = vmax.f32 %v555, 0.0
      %v564 = vmax.f32 %v556, 0.0
      %v565 = vmax.f32 %v557, 0.0
      %v566 = vmax.f32 %v558, 0.0
      %v567 = vld [vmem:[%s9] sm:$0xf]
      %v568 = vld [vmem:[%s9 + $0x4] sm:$0xf]
      %v569 = vld [vmem:[%s9 + $0x8] sm:$0xf]
      %v570 = vld [vmem:[%s9 + $0xc] sm:$0xf]
      %v571 = vpack.c.bf16 %v560, %v559
      %v572 = vpack.c.bf16 %v562, %v561
      %v573 = vpack.c.bf16 %v564, %v563
      %v574 = vpack.c.bf16 %v566, %v565
      %v579 = vunpack.c.l.b16 %v567
      %v580 = vunpack.c.l.b16 %v568
      %v581 = vunpack.c.l.b16 %v569
      %v582 = vunpack.c.l.b16 %v570
      %v583 = vpack.c.b16 %v580, %v579
      %v584 = vpack.c.b16 %v582, %v581
      %vm587 = vcmask 261120
      %v589 = vsel %vm587, %v571, 0
      %v592 = vsel %vm587, %v572, 0
      %v595 = vsel %vm587, %v573, 0
      %v598 = vsel %vm587, %v574, 0
      %600 = vmatprep.subr.bf16.mxu0 0
      %601 = vmatpush1.bf16.msra.mxu0 %v583
      %602 = vmatprep.subr.bf16.mxu0 0
      %603 = vmatpush1.bf16.msra.mxu0 %v584
      %604 = vmatprep.subr.bf16.mxu0 0
      %605 = vmatpush1.bf16.msra.mxu0 0
      %606 = vmatprep.subr.bf16.mxu0 0
      %607 = vmatpush1.bf16.msra.mxu0 0
      %608 = vmatprep.subr.bf16.mxu0 0
      %609 = vmatpush1.bf16.msra.mxu0 0
      %610 = vmatprep.subr.bf16.mxu0 0
      %611 = vmatpush1.bf16.msra.mxu0 0
      %612 = vmatprep.subr.bf16.mxu0 0
      %613 = vmatpush1.bf16.msra.mxu0 0
      %614 = vmatprep.subr.bf16.mxu0 0
      %615 = vmatpush1.bf16.msra.mxu0 0
      %616 = vmatprep.subr.bf16.mxu0 0
      %617 = vmatpush1.bf16.msra.mxu0 0
      %618 = vmatprep.subr.bf16.mxu0 0
      %619 = vmatpush1.bf16.msra.mxu0 0
      %620 = vmatprep.subr.bf16.mxu0 0
      %621 = vmatpush1.bf16.msra.mxu0 0
      %622 = vmatprep.subr.bf16.mxu0 0
      %623 = vmatpush1.bf16.msra.mxu0 0
      %624 = vmatprep.subr.bf16.mxu0 0
      %625 = vmatpush1.bf16.msra.mxu0 0
      %626 = vmatprep.subr.bf16.mxu0 0
      %627 = vmatpush1.bf16.msra.mxu0 0
      %628 = vmatprep.subr.bf16.mxu0 0
      %629 = vmatpush1.bf16.msra.mxu0 0
      %630 = vmatprep.subr.bf16.mxu0 0
      %631 = vmatpush1.bf16.msra.mxu0 0
      %632 = vmatprep.mubr.bf16.mxu0 0
      %633 = vmatmul.mubr.bf16.gmra.mrb[0].mxu0 %v589
      %v634 = vpop.f32.mrb[0].mxu0
      %v635 = vadd.f32 0.0, %v634
      %v636 = vpop.f32.mrb[0].mxu0
      %v637 = vpop.f32.mrb[0].mxu0
      %v638 = vadd.f32 0.0, %v637
      %v639 = vpop.f32.mrb[0].mxu0
      %640 = vmatprep.mubr.bf16.mxu0 0
      %641 = vmatmul.mubr.bf16.gmra.mrb[0].mxu0 %v592
      %v642 = vpop.f32.mrb[0].mxu0
      %v643 = vadd.f32 0.0, %v642
      %v644 = vpop.f32.mrb[0].mxu0
      %v645 = vpop.f32.mrb[0].mxu0
      %v646 = vadd.f32 0.0, %v645
      %v647 = vpop.f32.mrb[0].mxu0
      %648 = vmatprep.mubr.bf16.mxu0 0
      %649 = vmatmul.mubr.bf16.gmra.mrb[0].mxu0 %v595
      %v650 = vpop.f32.mrb[0].mxu0
      %v651 = vadd.f32 0.0, %v650
      %v652 = vpop.f32.mrb[0].mxu0
      %v653 = vpop.f32.mrb[0].mxu0
      %v654 = vadd.f32 0.0, %v653
      %v655 = vpop.f32.mrb[0].mxu0
      %656 = vmatprep.mubr.bf16.mxu0 0
      %657 = vmatmul.mubr.bf16.gmra.mrb[0].mxu0 %v598
      %v658 = vpop.f32.mrb[0].mxu0
      %v659 = vadd.f32 0.0, %v658
      %v660 = vpop.f32.mrb[0].mxu0
      %v661 = vpop.f32.mrb[0].mxu0
      %v662 = vadd.f32 0.0, %v661
      %v663 = vpop.f32.mrb[0].mxu0
      %664 = vdwg.mxu0
      %v665 = vld [vmem:[%s10] sm:$0x1]
      %v666 = vld [vmem:[%s11] sm:$0x1]
      %v667 = vsel %vm587, %v635, 0.0
      %668 = vadd.xlane.f32.xlu0 %v667
      %v669 = vpop.xlane.xlu0 %668
      %v670 = vsel %vm587, %v638, 0.0
      %671 = vadd.xlane.f32.xlu0 %v670
      %v672 = vpop.xlane.xlu0 %671
      %v673 = vsel %vm587, %v643, 0.0
      %674 = vadd.xlane.f32.xlu0 %v673
      %v675 = vpop.xlane.xlu0 %674
      %v676 = vsel %vm587, %v646, 0.0
      %677 = vadd.xlane.f32.xlu0 %v676
      %v678 = vpop.xlane.xlu0 %677
      %v679 = vsel %vm587, %v651, 0.0
      %680 = vadd.xlane.f32.xlu0 %v679
      %v681 = vpop.xlane.xlu0 %680
      %v682 = vsel %vm587, %v654, 0.0
      %683 = vadd.xlane.f32.xlu0 %v682
      %v684 = vpop.xlane.xlu0 %683
      %v685 = vsel %vm587, %v659, 0.0
      %686 = vadd.xlane.f32.xlu0 %v685
      %v687 = vpop.xlane.xlu0 %686
      %v688 = vsel %vm587, %v662, 0.0
      %689 = vadd.xlane.f32.xlu0 %v688
      %v690 = vpop.xlane.xlu0 %689
      %v691 = vrcp.pop 32.0
      %v692 = vmul.f32 %v669, %v691
      %v693 = vmul.f32 %v672, %v691
      %v694 = vmul.f32 %v675, %v691
      %v695 = vmul.f32 %v678, %v691
      %v696 = vmul.f32 %v681, %v691
      %v697 = vmul.f32 %v684, %v691
      %v698 = vmul.f32 %v687, %v691
      %v699 = vmul.f32 %v690, %v691
      %v700 = vmul.f32 %v635, %v635
      %v701 = vmul.f32 %v638, %v638
      %v702 = vmul.f32 %v643, %v643
      %v703 = vmul.f32 %v646, %v646
      %v704 = vmul.f32 %v651, %v651
      %v705 = vmul.f32 %v654, %v654
      %v706 = vmul.f32 %v659, %v659
      %v707 = vmul.f32 %v662, %v662
      %v708 = vsel %vm587, %v700, 0.0
      %709 = vadd.xlane.f32.xlu0 %v708
      %v710 = vpop.xlane.xlu0 %709
      %v711 = vsel %vm587, %v701, 0.0
      %712 = vadd.xlane.f32.xlu0 %v711
      %v713 = vpop.xlane.xlu0 %712
      %v714 = vsel %vm587, %v702, 0.0
      %715 = vadd.xlane.f32.xlu0 %v714
      %v716 = vpop.xlane.xlu0 %715
      %v717 = vsel %vm587, %v703, 0.0
      %718 = vadd.xlane.f32.xlu0 %v717
      %v719 = vpop.xlane.xlu0 %718
      %v720 = vsel %vm587, %v704, 0.0
      %721 = vadd.xlane.f32.xlu0 %v720
      %v722 = vpop.xlane.xlu0 %721
      %v723 = vsel %vm587, %v705, 0.0
      %724 = vadd.xlane.f32.xlu0 %v723
      %v725 = vpop.xlane.xlu0 %724
      %v726 = vsel %vm587, %v706, 0.0
      %727 = vadd.xlane.f32.xlu0 %v726
      %v728 = vpop.xlane.xlu0 %727
      %v729 = vsel %vm587, %v707, 0.0
      %730 = vadd.xlane.f32.xlu0 %v729
      %v731 = vpop.xlane.xlu0 %730
      %v732 = vmul.f32 %v710, %v691
      %v733 = vmul.f32 %v713, %v691
      %v734 = vmul.f32 %v716, %v691
      %v735 = vmul.f32 %v719, %v691
      %v736 = vmul.f32 %v722, %v691
      %v737 = vmul.f32 %v725, %v691
      %v738 = vmul.f32 %v728, %v691
      %v739 = vmul.f32 %v731, %v691
      %v740 = vmul.f32 %v692, %v692
      %v741 = vmul.f32 %v693, %v693
      %v742 = vmul.f32 %v694, %v694
      %v743 = vmul.f32 %v695, %v695
      %v744 = vmul.f32 %v696, %v696
      %v745 = vmul.f32 %v697, %v697
      %v746 = vmul.f32 %v698, %v698
      %v747 = vmul.f32 %v699, %v699
      %v748 = vsub.f32 %v732, %v740
      %v749 = vsub.f32 %v733, %v741
      %v750 = vsub.f32 %v734, %v742
      %v751 = vsub.f32 %v735, %v743
      %v752 = vsub.f32 %v736, %v744
      %v753 = vsub.f32 %v737, %v745
      %v754 = vsub.f32 %v738, %v746
      %v755 = vsub.f32 %v739, %v747
      %v756 = vmax.f32 %v748, 0.0
      %v757 = vmax.f32 %v749, 0.0
      %v758 = vmax.f32 %v750, 0.0
      %v759 = vmax.f32 %v751, 0.0
      %v760 = vmax.f32 %v752, 0.0
      %v761 = vmax.f32 %v753, 0.0
      %v762 = vmax.f32 %v754, 0.0
      %v763 = vmax.f32 %v755, 0.0
      %v764 = vsub.f32 %v635, %v692
      %v765 = vsub.f32 %v638, %v693
      %v766 = vsub.f32 %v643, %v694
      %v767 = vsub.f32 %v646, %v695
      %v768 = vsub.f32 %v651, %v696
      %v769 = vsub.f32 %v654, %v697
      %v770 = vsub.f32 %v659, %v698
      %v771 = vsub.f32 %v662, %v699
      %v772 = vadd.f32 %v756, 1e-05
      %v773 = vadd.f32 %v757, 1e-05
      %v774 = vadd.f32 %v758, 1e-05
      %v775 = vadd.f32 %v759, 1e-05
      %v776 = vadd.f32 %v760, 1e-05
      %v777 = vadd.f32 %v761, 1e-05
      %v778 = vadd.f32 %v762, 1e-05
      %v779 = vadd.f32 %v763, 1e-05
      %v780 = vrsqrt.pop %v772
      %v781 = vrsqrt.pop %v773
      %v782 = vrsqrt.pop %v774
      %v783 = vrsqrt.pop %v775
      %v784 = vrsqrt.pop %v776
      %v785 = vrsqrt.pop %v777
      %v786 = vrsqrt.pop %v778
      %v787 = vrsqrt.pop %v779
      %v789 = vlaneseq
      %v790 = vshrl.u32 %v789, 7
      %v791 = vsub.s32 0, %v790
      %v792 = vrot.slane %v665, %v791
      %v794 = vmul.f32 %v780, %v792
      %v795 = vmul.f32 %v781, %v792
      %v796 = vmul.f32 %v782, %v792
      %v797 = vmul.f32 %v783, %v792
      %v798 = vmul.f32 %v784, %v792
      %v799 = vmul.f32 %v785, %v792
      %v800 = vmul.f32 %v786, %v792
      %v801 = vmul.f32 %v787, %v792
      %v802 = vmul.f32 %v764, %v794
      %v803 = vmul.f32 %v765, %v795
      %v804 = vmul.f32 %v766, %v796
      %v805 = vmul.f32 %v767, %v797
      %v806 = vmul.f32 %v768, %v798
      %v807 = vmul.f32 %v769, %v799
      %v808 = vmul.f32 %v770, %v800
      %v809 = vmul.f32 %v771, %v801
      %v811 = vlaneseq
      %v812 = vshrl.u32 %v811, 7
      %v813 = vsub.s32 0, %v812
      %v814 = vrot.slane %v666, %v813
      %v816 = vadd.f32 %v802, %v814
      %v817 = vadd.f32 %v803, %v814
      %v818 = vadd.f32 %v804, %v814
      %v819 = vadd.f32 %v805, %v814
      %v820 = vadd.f32 %v806, %v814
      %v821 = vadd.f32 %v807, %v814
      %v822 = vadd.f32 %v808, %v814
      %v823 = vadd.f32 %v809, %v814
      %v824 = vmax.f32 %v816, 0.0
      %v825 = vmax.f32 %v817, 0.0
      %v826 = vmax.f32 %v818, 0.0
      %v827 = vmax.f32 %v819, 0.0
      %v828 = vmax.f32 %v820, 0.0
      %v829 = vmax.f32 %v821, 0.0
      %v830 = vmax.f32 %v822, 0.0
      %v831 = vmax.f32 %v823, 0.0
      %v832 = vld [vmem:[%s15] sm:$0xf]
      %v833 = vld [vmem:[%s15 + $0x4] sm:$0xf]
      %v834 = vld [vmem:[%s15 + $0x8] sm:$0xf]
      %v835 = vld [vmem:[%s15 + $0xc] sm:$0xf]
      %v836 = vpack.c.bf16 %v825, %v824
      %v837 = vpack.c.bf16 %v827, %v826
      %v838 = vpack.c.bf16 %v829, %v828
      %v839 = vpack.c.bf16 %v831, %v830
      %v844 = vunpack.c.l.b16 %v832
      %v845 = vunpack.c.l.b16 %v833
      %v846 = vunpack.c.l.b16 %v834
      %v847 = vunpack.c.l.b16 %v835
      %v848 = vpack.c.b16 %v845, %v844
      %v849 = vpack.c.b16 %v847, %v846
      %v853 = vsel %vm587, %v836, 0
      %v856 = vsel %vm587, %v837, 0
      %v859 = vsel %vm587, %v838, 0
      %v862 = vsel %vm587, %v839, 0
      %864 = vmatprep.subr.bf16.mxu0 0
      %865 = vmatpush1.bf16.msra.mxu0 %v848
      %866 = vmatprep.subr.bf16.mxu0 0
      %867 = vmatpush1.bf16.msra.mxu0 %v849
      %868 = vmatprep.subr.bf16.mxu0 0
      %869 = vmatpush1.bf16.msra.mxu0 0
      %870 = vmatprep.subr.bf16.mxu0 0
      %871 = vmatpush1.bf16.msra.mxu0 0
      %872 = vmatprep.subr.bf16.mxu0 0
      %873 = vmatpush1.bf16.msra.mxu0 0
      %874 = vmatprep.subr.bf16.mxu0 0
      %875 = vmatpush1.bf16.msra.mxu0 0
      %876 = vmatprep.subr.bf16.mxu0 0
      %877 = vmatpush1.bf16.msra.mxu0 0
      %878 = vmatprep.subr.bf16.mxu0 0
      %879 = vmatpush1.bf16.msra.mxu0 0
      %880 = vmatprep.subr.bf16.mxu0 0
      %881 = vmatpush1.bf16.msra.mxu0 0
      %882 = vmatprep.subr.bf16.mxu0 0
      %883 = vmatpush1.bf16.msra.mxu0 0
      %884 = vmatprep.subr.bf16.mxu0 0
      %885 = vmatpush1.bf16.msra.mxu0 0
      %886 = vmatprep.subr.bf16.mxu0 0
      %887 = vmatpush1.bf16.msra.mxu0 0
      %888 = vmatprep.subr.bf16.mxu0 0
      %889 = vmatpush1.bf16.msra.mxu0 0
      %890 = vmatprep.subr.bf16.mxu0 0
      %891 = vmatpush1.bf16.msra.mxu0 0
      %892 = vmatprep.subr.bf16.mxu0 0
      %893 = vmatpush1.bf16.msra.mxu0 0
      %894 = vmatprep.subr.bf16.mxu0 0
      %895 = vmatpush1.bf16.msra.mxu0 0
      %896 = vmatprep.mubr.bf16.mxu0 0
      %897 = vmatmul.mubr.bf16.gmra.mrb[0].mxu0 %v853
      %v898 = vpop.f32.mrb[0].mxu0
      %v899 = vadd.f32 0.0, %v898
      %v900 = vpop.f32.mrb[0].mxu0
      %v901 = vpop.f32.mrb[0].mxu0
      %v902 = vadd.f32 0.0, %v901
      %v903 = vpop.f32.mrb[0].mxu0
      %904 = vmatprep.mubr.bf16.mxu0 0
      %905 = vmatmul.mubr.bf16.gmra.mrb[0].mxu0 %v856
      %v906 = vpop.f32.mrb[0].mxu0
      %v907 = vadd.f32 0.0, %v906
      %v908 = vpop.f32.mrb[0].mxu0
      %v909 = vpop.f32.mrb[0].mxu0
      %v910 = vadd.f32 0.0, %v909
      %v911 = vpop.f32.mrb[0].mxu0
      %912 = vmatprep.mubr.bf16.mxu0 0
      %913 = vmatmul.mubr.bf16.gmra.mrb[0].mxu0 %v859
      %v914 = vpop.f32.mrb[0].mxu0
      %v915 = vadd.f32 0.0, %v914
      %v916 = vpop.f32.mrb[0].mxu0
      %v917 = vpop.f32.mrb[0].mxu0
      %v918 = vadd.f32 0.0, %v917
      %v919 = vpop.f32.mrb[0].mxu0
      %920 = vmatprep.mubr.bf16.mxu0 0
      %921 = vmatmul.mubr.bf16.gmra.mrb[0].mxu0 %v862
      %v922 = vpop.f32.mrb[0].mxu0
      %v923 = vadd.f32 0.0, %v922
      %v924 = vpop.f32.mrb[0].mxu0
      %v925 = vpop.f32.mrb[0].mxu0
      %v926 = vadd.f32 0.0, %v925
      %v927 = vpop.f32.mrb[0].mxu0
      %928 = vdwg.mxu0
      %v929 = vld [vmem:[#allocation3] sm:$0xff]
      %v931 = vcombine.high %v929, %v929
      %v933 = vunpack.c.l.s4 1966171168
      %v934 = vunpack.c.0.s8 %v933
      %v935 = vlaneseq
      %v936 = vshrl.u32 %v935, 7
      %v937 = vsub.s32 %v934, %v936
      %v938 = vrot.slane %v929, %v937
      %v940 = vunpack.c.l.s4 1966171168
      %v941 = vunpack.c.0.s8 %v940
      %v942 = vlaneseq
      %v943 = vshrl.u32 %v942, 7
      %v944 = vsub.s32 %v941, %v943
      %v945 = vrot.slane %v931, %v944
      %v946 = vcombine.high %v938, %v938
      %v947 = vcombine.high %v945, %v945
      %v949 = vunpack.c.l.s4 1966171168
      %v950 = vunpack.c.0.s8 %v949
      %v951 = vlaneseq
      %v952 = vshrl.u32 %v951, 7
      %v953 = vsub.s32 %v950, %v952
      %v954 = vrot.slane %v938, %v953
      %v956 = vunpack.c.l.s4 1966171168
      %v957 = vunpack.c.0.s8 %v956
      %v958 = vlaneseq
      %v959 = vshrl.u32 %v958, 7
      %v960 = vsub.s32 %v957, %v959
      %v961 = vrot.slane %v945, %v960
      %v963 = vunpack.c.l.s4 1966171168
      %v964 = vunpack.c.0.s8 %v963
      %v965 = vlaneseq
      %v966 = vshrl.u32 %v965, 7
      %v967 = vsub.s32 %v964, %v966
      %v968 = vrot.slane %v946, %v967
      %v970 = vunpack.c.l.s4 1966171168
      %v971 = vunpack.c.0.s8 %v970
      %v972 = vlaneseq
      %v973 = vshrl.u32 %v972, 7
      %v974 = vsub.s32 %v971, %v973
      %v975 = vrot.slane %v947, %v974
      %v976 = vcombine.high %v954, %v954
      %v977 = vcombine.high %v961, %v961
      %v978 = vcombine.high %v968, %v968
      %v979 = vcombine.high %v975, %v975
      %v980 = vlaneseq
      %v981 = vshrl.u32 %v980, 7
      %v982 = vsub.s32 0, %v981
      %v983 = vrot.slane %v954, %v982
      %v984 = vlaneseq
      %v985 = vshrl.u32 %v984, 7
      %v986 = vsub.s32 0, %v985
      %v987 = vrot.slane %v968, %v986
      %v988 = vlaneseq
      %v989 = vshrl.u32 %v988, 7
      %v990 = vsub.s32 0, %v989
      %v991 = vrot.slane %v976, %v990
      %v992 = vlaneseq
      %v993 = vshrl.u32 %v992, 7
      %v994 = vsub.s32 0, %v993
      %v995 = vrot.slane %v978, %v994
      %v996 = vlaneseq
      %v997 = vshrl.u32 %v996, 7
      %v998 = vsub.s32 0, %v997
      %v999 = vrot.slane %v961, %v998
      %v1000 = vlaneseq
      %v1001 = vshrl.u32 %v1000, 7
      %v1002 = vsub.s32 0, %v1001
      %v1003 = vrot.slane %v975, %v1002
      %v1004 = vlaneseq
      %v1005 = vshrl.u32 %v1004, 7
      %v1006 = vsub.s32 0, %v1005
      %v1007 = vrot.slane %v977, %v1006
      %v1008 = vlaneseq
      %v1009 = vshrl.u32 %v1008, 7
      %v1010 = vsub.s32 0, %v1009
      %v1011 = vrot.slane %v979, %v1010
      %v1020 = vadd.f32 %v899, %v983
      %v1021 = vadd.f32 %v902, %v987
      %v1022 = vadd.f32 %v907, %v991
      %v1023 = vadd.f32 %v910, %v995
      %v1024 = vadd.f32 %v915, %v999
      %v1025 = vadd.f32 %v918, %v1003
      %v1026 = vadd.f32 %v923, %v1007
      %v1027 = vadd.f32 %v926, %v1011
      %v1028 = vld [vmem:[%s2] sm:$0xff]
      %v1029 = vld [vmem:[%s17] sm:$0xf]
      %v1030 = vld [vmem:[%s17 + $0x4] sm:$0xf]
      %v1031 = vld [vmem:[%s17 + $0x8] sm:$0xf]
      %v1032 = vld [vmem:[%s17 + $0xc] sm:$0xf]
      %v1033 = vpack.c.bf16 %v1028, %v1028
      %v1038 = vunpack.c.l.b16 %v1029
      %v1039 = vunpack.c.l.b16 %v1030
      %v1040 = vunpack.c.l.b16 %v1031
      %v1041 = vunpack.c.l.b16 %v1032
      %v1042 = vpack.c.b16 %v1039, %v1038
      %v1043 = vpack.c.b16 %v1041, %v1040
      %v1047 = vsel %vm587, %v1033, 0
      %1049 = vmatprep.subr.bf16.mxu0 0
      %1050 = vmatpush1.bf16.msra.mxu0 %v1042
      %1051 = vmatprep.subr.bf16.mxu0 0
      %1052 = vmatpush1.bf16.msra.mxu0 %v1043
      %1053 = vmatprep.subr.bf16.mxu0 0
      %1054 = vmatpush1.bf16.msra.mxu0 0
      %1055 = vmatprep.subr.bf16.mxu0 0
      %1056 = vmatpush1.bf16.msra.mxu0 0
      %1057 = vmatprep.subr.bf16.mxu0 0
      %1058 = vmatpush1.bf16.msra.mxu0 0
      %1059 = vmatprep.subr.bf16.mxu0 0
      %1060 = vmatpush1.bf16.msra.mxu0 0
      %1061 = vmatprep.subr.bf16.mxu0 0
      %1062 = vmatpush1.bf16.msra.mxu0 0
      %1063 = vmatprep.subr.bf16.mxu0 0
      %1064 = vmatpush1.bf16.msra.mxu0 0
      %1065 = vmatprep.subr.bf16.mxu0 0
      %1066 = vmatpush1.bf16.msra.mxu0 0
      %1067 = vmatprep.subr.bf16.mxu0 0
      %1068 = vmatpush1.bf16.msra.mxu0 0
      %1069 = vmatprep.subr.bf16.mxu0 0
      %1070 = vmatpush1.bf16.msra.mxu0 0
      %1071 = vmatprep.subr.bf16.mxu0 0
      %1072 = vmatpush1.bf16.msra.mxu0 0
      %1073 = vmatprep.subr.bf16.mxu0 0
      %1074 = vmatpush1.bf16.msra.mxu0 0
      %1075 = vmatprep.subr.bf16.mxu0 0
      %1076 = vmatpush1.bf16.msra.mxu0 0
      %1077 = vmatprep.subr.bf16.mxu0 0
      %1078 = vmatpush1.bf16.msra.mxu0 0
      %1079 = vmatprep.subr.bf16.mxu0 0
      %1080 = vmatpush1.bf16.msra.mxu0 0
      %1081 = vmatprep.mubr.bf16.mxu0 0
      %1082 = vmatmul.mubr.bf16.gmra.mrb[0].mxu0 %v1047
      %v1083 = vpop.f32.mrb[0].mxu0
      %v1084 = vadd.f32 0.0, %v1083
      %v1085 = vpop.f32.mrb[0].mxu0
      %v1086 = vpop.f32.mrb[0].mxu0
      %v1087 = vpop.f32.mrb[0].mxu0
      %1088 = vdwg.mxu0
      %v1089 = vadd.f32 %v1020, %v1084
      %v1090 = vadd.f32 %v1021, %v1084
      %v1091 = vadd.f32 %v1022, %v1084
      %v1092 = vadd.f32 %v1023, %v1084
      %v1093 = vadd.f32 %v1024, %v1084
      %v1094 = vadd.f32 %v1025, %v1084
      %v1095 = vadd.f32 %v1026, %v1084
      %v1096 = vadd.f32 %v1027, %v1084
      %v1097 = vld [vmem:[%s18] sm:$0x1]
      %v1098 = vld [vmem:[%s19] sm:$0x1]
      %v1099 = vsel %vm587, %v1089, 0.0
      %1100 = vadd.xlane.f32.xlu0 %v1099
      %v1101 = vpop.xlane.xlu0 %1100
      %v1102 = vsel %vm587, %v1090, 0.0
      %1103 = vadd.xlane.f32.xlu0 %v1102
      %v1104 = vpop.xlane.xlu0 %1103
      %v1105 = vsel %vm587, %v1091, 0.0
      %1106 = vadd.xlane.f32.xlu0 %v1105
      %v1107 = vpop.xlane.xlu0 %1106
      %v1108 = vsel %vm587, %v1092, 0.0
      %1109 = vadd.xlane.f32.xlu0 %v1108
      %v1110 = vpop.xlane.xlu0 %1109
      %v1111 = vsel %vm587, %v1093, 0.0
      %1112 = vadd.xlane.f32.xlu0 %v1111
      %v1113 = vpop.xlane.xlu0 %1112
      %v1114 = vsel %vm587, %v1094, 0.0
      %1115 = vadd.xlane.f32.xlu0 %v1114
      %v1116 = vpop.xlane.xlu0 %1115
      %v1117 = vsel %vm587, %v1095, 0.0
      %1118 = vadd.xlane.f32.xlu0 %v1117
      %v1119 = vpop.xlane.xlu0 %1118
      %v1120 = vsel %vm587, %v1096, 0.0
      %1121 = vadd.xlane.f32.xlu0 %v1120
      %v1122 = vpop.xlane.xlu0 %1121
      %v1123 = vmul.f32 %v1101, %v691
      %v1124 = vmul.f32 %v1104, %v691
      %v1125 = vmul.f32 %v1107, %v691
      %v1126 = vmul.f32 %v1110, %v691
      %v1127 = vmul.f32 %v1113, %v691
      %v1128 = vmul.f32 %v1116, %v691
      %v1129 = vmul.f32 %v1119, %v691
      %v1130 = vmul.f32 %v1122, %v691
      %v1131 = vmul.f32 %v1089, %v1089
      %v1132 = vmul.f32 %v1090, %v1090
      %v1133 = vmul.f32 %v1091, %v1091
      %v1134 = vmul.f32 %v1092, %v1092
      %v1135 = vmul.f32 %v1093, %v1093
      %v1136 = vmul.f32 %v1094, %v1094
      %v1137 = vmul.f32 %v1095, %v1095
      %v1138 = vmul.f32 %v1096, %v1096
      %v1139 = vsel %vm587, %v1131, 0.0
      %1140 = vadd.xlane.f32.xlu0 %v1139
      %v1141 = vpop.xlane.xlu0 %1140
      %v1142 = vsel %vm587, %v1132, 0.0
      %1143 = vadd.xlane.f32.xlu0 %v1142
      %v1144 = vpop.xlane.xlu0 %1143
      %v1145 = vsel %vm587, %v1133, 0.0
      %1146 = vadd.xlane.f32.xlu0 %v1145
      %v1147 = vpop.xlane.xlu0 %1146
      %v1148 = vsel %vm587, %v1134, 0.0
      %1149 = vadd.xlane.f32.xlu0 %v1148
      %v1150 = vpop.xlane.xlu0 %1149
      %v1151 = vsel %vm587, %v1135, 0.0
      %1152 = vadd.xlane.f32.xlu0 %v1151
      %v1153 = vpop.xlane.xlu0 %1152
      %v1154 = vsel %vm587, %v1136, 0.0
      %1155 = vadd.xlane.f32.xlu0 %v1154
      %v1156 = vpop.xlane.xlu0 %1155
      %v1157 = vsel %vm587, %v1137, 0.0
      %1158 = vadd.xlane.f32.xlu0 %v1157
      %v1159 = vpop.xlane.xlu0 %1158
      %v1160 = vsel %vm587, %v1138, 0.0
      %1161 = vadd.xlane.f32.xlu0 %v1160
      %v1162 = vpop.xlane.xlu0 %1161
      %v1163 = vmul.f32 %v1141, %v691
      %v1164 = vmul.f32 %v1144, %v691
      %v1165 = vmul.f32 %v1147, %v691
      %v1166 = vmul.f32 %v1150, %v691
      %v1167 = vmul.f32 %v1153, %v691
      %v1168 = vmul.f32 %v1156, %v691
      %v1169 = vmul.f32 %v1159, %v691
      %v1170 = vmul.f32 %v1162, %v691
      %v1171 = vmul.f32 %v1123, %v1123
      %v1172 = vmul.f32 %v1124, %v1124
      %v1173 = vmul.f32 %v1125, %v1125
      %v1174 = vmul.f32 %v1126, %v1126
      %v1175 = vmul.f32 %v1127, %v1127
      %v1176 = vmul.f32 %v1128, %v1128
      %v1177 = vmul.f32 %v1129, %v1129
      %v1178 = vmul.f32 %v1130, %v1130
      %v1179 = vsub.f32 %v1163, %v1171
      %v1180 = vsub.f32 %v1164, %v1172
      %v1181 = vsub.f32 %v1165, %v1173
      %v1182 = vsub.f32 %v1166, %v1174
      %v1183 = vsub.f32 %v1167, %v1175
      %v1184 = vsub.f32 %v1168, %v1176
      %v1185 = vsub.f32 %v1169, %v1177
      %v1186 = vsub.f32 %v1170, %v1178
      %v1187 = vmax.f32 %v1179, 0.0
      %v1188 = vmax.f32 %v1180, 0.0
      %v1189 = vmax.f32 %v1181, 0.0
      %v1190 = vmax.f32 %v1182, 0.0
      %v1191 = vmax.f32 %v1183, 0.0
      %v1192 = vmax.f32 %v1184, 0.0
      %v1193 = vmax.f32 %v1185, 0.0
      %v1194 = vmax.f32 %v1186, 0.0
      %v1195 = vsub.f32 %v1089, %v1123
      %v1196 = vsub.f32 %v1090, %v1124
      %v1197 = vsub.f32 %v1091, %v1125
      %v1198 = vsub.f32 %v1092, %v1126
      %v1199 = vsub.f32 %v1093, %v1127
      %v1200 = vsub.f32 %v1094, %v1128
      %v1201 = vsub.f32 %v1095, %v1129
      %v1202 = vsub.f32 %v1096, %v1130
      %v1203 = vadd.f32 %v1187, 1e-05
      %v1204 = vadd.f32 %v1188, 1e-05
      %v1205 = vadd.f32 %v1189, 1e-05
      %v1206 = vadd.f32 %v1190, 1e-05
      %v1207 = vadd.f32 %v1191, 1e-05
      %v1208 = vadd.f32 %v1192, 1e-05
      %v1209 = vadd.f32 %v1193, 1e-05
      %v1210 = vadd.f32 %v1194, 1e-05
      %v1211 = vrsqrt.pop %v1203
      %v1212 = vrsqrt.pop %v1204
      %v1213 = vrsqrt.pop %v1205
      %v1214 = vrsqrt.pop %v1206
      %v1215 = vrsqrt.pop %v1207
      %v1216 = vrsqrt.pop %v1208
      %v1217 = vrsqrt.pop %v1209
      %v1218 = vrsqrt.pop %v1210
      %v1220 = vlaneseq
      %v1221 = vshrl.u32 %v1220, 7
      %v1222 = vsub.s32 0, %v1221
      %v1223 = vrot.slane %v1097, %v1222
      %v1225 = vmul.f32 %v1211, %v1223
      %v1226 = vmul.f32 %v1212, %v1223
      %v1227 = vmul.f32 %v1213, %v1223
      %v1228 = vmul.f32 %v1214, %v1223
      %v1229 = vmul.f32 %v1215, %v1223
      %v1230 = vmul.f32 %v1216, %v1223
      %v1231 = vmul.f32 %v1217, %v1223
      %v1232 = vmul.f32 %v1218, %v1223
      %v1233 = vmul.f32 %v1195, %v1225
      %v1234 = vmul.f32 %v1196, %v1226
      %v1235 = vmul.f32 %v1197, %v1227
      %v1236 = vmul.f32 %v1198, %v1228
      %v1237 = vmul.f32 %v1199, %v1229
      %v1238 = vmul.f32 %v1200, %v1230
      %v1239 = vmul.f32 %v1201, %v1231
      %v1240 = vmul.f32 %v1202, %v1232
      %v1242 = vlaneseq
      %v1243 = vshrl.u32 %v1242, 7
      %v1244 = vsub.s32 0, %v1243
      %v1245 = vrot.slane %v1098, %v1244
      %v1247 = vadd.f32 %v1233, %v1245
      %v1248 = vadd.f32 %v1234, %v1245
      %v1249 = vadd.f32 %v1235, %v1245
      %v1250 = vadd.f32 %v1236, %v1245
      %v1251 = vadd.f32 %v1237, %v1245
      %v1252 = vadd.f32 %v1238, %v1245
      %v1253 = vadd.f32 %v1239, %v1245
      %v1254 = vadd.f32 %v1240, %v1245
      %v1255 = vmax.f32 %v1247, 0.0
      %v1256 = vmax.f32 %v1248, 0.0
      %v1257 = vmax.f32 %v1249, 0.0
      %v1258 = vmax.f32 %v1250, 0.0
      %v1259 = vmax.f32 %v1251, 0.0
      %v1260 = vmax.f32 %v1252, 0.0
      %v1261 = vmax.f32 %v1253, 0.0
      %v1262 = vmax.f32 %v1254, 0.0
      %v1263 = vld [vmem:[#allocation2] sm:$0xff]
      %v1264 = vlaneseq
      %v1265 = vshrl.u32 %v1264, 7
      %v1266 = vsub.s32 0, %v1265
      %v1267 = vrot.slane %v398, %v1266
      %1269 = vbcast.lane.b32.xlu0 %v1267, 256
      %v1270 = vpop.permute.xlu0 %1269
      %v1271 = vlaneseq
      %v1272 = vshrl.u32 %v1271, 7
      %v1273 = vsub.s32 1, %v1272
      %v1274 = vrot.slane %v398, %v1273
      %1276 = vbcast.lane.b32.xlu0 %v1274, 256
      %v1277 = vpop.permute.xlu0 %1276
      %v1278 = vlaneseq
      %v1279 = vshrl.u32 %v1278, 7
      %v1280 = vsub.s32 2, %v1279
      %v1281 = vrot.slane %v398, %v1280
      %1283 = vbcast.lane.b32.xlu0 %v1281, 256
      %v1284 = vpop.permute.xlu0 %1283
      %v1285 = vlaneseq
      %v1286 = vshrl.u32 %v1285, 7
      %v1287 = vsub.s32 3, %v1286
      %v1288 = vrot.slane %v398, %v1287
      %1290 = vbcast.lane.b32.xlu0 %v1288, 256
      %v1291 = vpop.permute.xlu0 %1290
      %v1292 = vlaneseq
      %v1293 = vshrl.u32 %v1292, 7
      %v1294 = vsub.s32 4, %v1293
      %v1295 = vrot.slane %v398, %v1294
      %1297 = vbcast.lane.b32.xlu0 %v1295, 256
      %v1298 = vpop.permute.xlu0 %1297
      %v1299 = vlaneseq
      %v1300 = vshrl.u32 %v1299, 7
      %v1301 = vsub.s32 5, %v1300
      %v1302 = vrot.slane %v398, %v1301
      %1304 = vbcast.lane.b32.xlu0 %v1302, 256
      %v1305 = vpop.permute.xlu0 %1304
      %v1306 = vlaneseq
      %v1307 = vshrl.u32 %v1306, 7
      %v1308 = vsub.s32 6, %v1307
      %v1309 = vrot.slane %v398, %v1308
      %1311 = vbcast.lane.b32.xlu0 %v1309, 256
      %v1312 = vpop.permute.xlu0 %1311
      %v1313 = vlaneseq
      %v1314 = vshrl.u32 %v1313, 7
      %v1315 = vsub.s32 7, %v1314
      %v1316 = vrot.slane %v398, %v1315
      %1318 = vbcast.lane.b32.xlu0 %v1316, 256
      %v1319 = vpop.permute.xlu0 %1318
      %v1320 = vmul.f32 %v1255, %v1270
      %v1321 = vmul.f32 %v1256, %v1277
      %v1322 = vmul.f32 %v1257, %v1284
      %v1323 = vmul.f32 %v1258, %v1291
      %v1324 = vmul.f32 %v1259, %v1298
      %v1325 = vmul.f32 %v1260, %v1305
      %v1326 = vmul.f32 %v1261, %v1312
      %v1327 = vmul.f32 %v1262, %v1319
      %v1328 = vsel %vm587, %v1320, 0.0
      %v1329 = vrot.slane %v1328, 4
      %v1330 = vadd.f32 %v1328, %v1329
      %v1331 = vrot.slane %v1330, 2
      %v1332 = vadd.f32 %v1330, %v1331
      %v1333 = vrot.slane %v1332, 1
      %v1334 = vadd.f32 %v1332, %v1333
      %v1335 = vsel %vm587, %v1321, 0.0
      %v1336 = vrot.slane %v1335, 4
      %v1337 = vadd.f32 %v1335, %v1336
      %v1338 = vrot.slane %v1337, 2
      %v1339 = vadd.f32 %v1337, %v1338
      %v1340 = vrot.slane %v1339, 1
      %v1341 = vadd.f32 %v1339, %v1340
      %v1342 = vsel %vm587, %v1322, 0.0
      %v1343 = vrot.slane %v1342, 4
      %v1344 = vadd.f32 %v1342, %v1343
      %v1345 = vrot.slane %v1344, 2
      %v1346 = vadd.f32 %v1344, %v1345
      %v1347 = vrot.slane %v1346, 1
      %v1348 = vadd.f32 %v1346, %v1347
      %v1349 = vsel %vm587, %v1323, 0.0
      %v1350 = vrot.slane %v1349, 4
      %v1351 = vadd.f32 %v1349, %v1350
      %v1352 = vrot.slane %v1351, 2
      %v1353 = vadd.f32 %v1351, %v1352
      %v1354 = vrot.slane %v1353, 1
      %v1355 = vadd.f32 %v1353, %v1354
      %v1356 = vsel %vm587, %v1324, 0.0
      %v1357 = vrot.slane %v1356, 4
      %v1358 = vadd.f32 %v1356, %v1357
      %v1359 = vrot.slane %v1358, 2
      %v1360 = vadd.f32 %v1358, %v1359
      %v1361 = vrot.slane %v1360, 1
      %v1362 = vadd.f32 %v1360, %v1361
      %v1363 = vsel %vm587, %v1325, 0.0
      %v1364 = vrot.slane %v1363, 4
      %v1365 = vadd.f32 %v1363, %v1364
      %v1366 = vrot.slane %v1365, 2
      %v1367 = vadd.f32 %v1365, %v1366
      %v1368 = vrot.slane %v1367, 1
      %v1369 = vadd.f32 %v1367, %v1368
      %v1370 = vsel %vm587, %v1326, 0.0
      %v1371 = vrot.slane %v1370, 4
      %v1372 = vadd.f32 %v1370, %v1371
      %v1373 = vrot.slane %v1372, 2
      %v1374 = vadd.f32 %v1372, %v1373
      %v1375 = vrot.slane %v1374, 1
      %v1376 = vadd.f32 %v1374, %v1375
      %v1377 = vsel %vm587, %v1327, 0.0
      %v1378 = vrot.slane %v1377, 4
      %v1379 = vadd.f32 %v1377, %v1378
      %v1380 = vrot.slane %v1379, 2
      %v1381 = vadd.f32 %v1379, %v1380
      %v1382 = vrot.slane %v1381, 1
      %v1383 = vadd.f32 %v1381, %v1382
      %vm1392 = vcmask 1041409
      %v1393 = vsel %vm1392, %v1341, %v1334
      %vm1394 = vcmask 1042434
      %v1395 = vsel %vm1394, %v1348, %v1393
      %vm1396 = vcmask 1043459
      %v1397 = vsel %vm1396, %v1355, %v1395
      %vm1398 = vcmask 1044484
      %v1399 = vsel %vm1398, %v1362, %v1397
      %vm1400 = vcmask 1045509
      %v1401 = vsel %vm1400, %v1369, %v1399
      %vm1402 = vcmask 1046534
      %v1403 = vsel %vm1402, %v1376, %v1401
      %vm1404 = vcmask 1047559
      %v1405 = vsel %vm1404, %v1383, %v1403
      %v1407 = vadd.f32 %v1263, %v1405
      %1408 = vst.msk [vmem:[#allocation2] sm:$0xff] %vm587, %v1407
    $region109: #{net_forward.3} parent=1 // pred_fallthru
      _
    // Predicated region
    $region110: #{net_forward.3} parent=1 // pred_check
      %p1409 = pneg %p84
    $region111: #{net_forward.3} parent=1 // pred_check_branch
      %1411 = sbr.rel (%p1409) target = $region113
    $region112: #{net_forward.3} parent=1 // pred_region
      %v1412 = vld [vmem:[#allocation4] sm:$0xff]
      %v1413 = vld [vmem:[#allocation2] sm:$0xff]
      %v1414 = vld [vmem:[%s20] sm:$0xf]
      %v1415 = vld [vmem:[%s20 + $0x4] sm:$0xf]
      %v1416 = vld [vmem:[%s20 + $0x8] sm:$0xf]
      %v1417 = vld [vmem:[%s20 + $0xc] sm:$0xf]
      %v1418 = vpack.c.bf16 %v1413, %v1413
      %v1423 = vunpack.c.l.b16 %v1414
      %v1424 = vunpack.c.l.b16 %v1415
      %v1425 = vunpack.c.l.b16 %v1416
      %v1426 = vunpack.c.l.b16 %v1417
      %v1427 = vpack.c.b16 %v1424, %v1423
      %v1428 = vpack.c.b16 %v1426, %v1425
      %vm1431 = vcmask 261120
      %v1433 = vsel %vm1431, %v1418, 0
      %1435 = vmatprep.subr.bf16.mxu0 0
      %1436 = vmatpush1.bf16.msra.mxu0 %v1427
      %1437 = vmatprep.subr.bf16.mxu0 0
      %1438 = vmatpush1.bf16.msra.mxu0 %v1428
      %1439 = vmatprep.subr.bf16.mxu0 0
      %1440 = vmatpush1.bf16.msra.mxu0 0
      %1441 = vmatprep.subr.bf16.mxu0 0
      %1442 = vmatpush1.bf16.msra.mxu0 0
      %1443 = vmatprep.subr.bf16.mxu0 0
      %1444 = vmatpush1.bf16.msra.mxu0 0
      %1445 = vmatprep.subr.bf16.mxu0 0
      %1446 = vmatpush1.bf16.msra.mxu0 0
      %1447 = vmatprep.subr.bf16.mxu0 0
      %1448 = vmatpush1.bf16.msra.mxu0 0
      %1449 = vmatprep.subr.bf16.mxu0 0
      %1450 = vmatpush1.bf16.msra.mxu0 0
      %1451 = vmatprep.subr.bf16.mxu0 0
      %1452 = vmatpush1.bf16.msra.mxu0 0
      %1453 = vmatprep.subr.bf16.mxu0 0
      %1454 = vmatpush1.bf16.msra.mxu0 0
      %1455 = vmatprep.subr.bf16.mxu0 0
      %1456 = vmatpush1.bf16.msra.mxu0 0
      %1457 = vmatprep.subr.bf16.mxu0 0
      %1458 = vmatpush1.bf16.msra.mxu0 0
      %1459 = vmatprep.subr.bf16.mxu0 0
      %1460 = vmatpush1.bf16.msra.mxu0 0
      %1461 = vmatprep.subr.bf16.mxu0 0
      %1462 = vmatpush1.bf16.msra.mxu0 0
      %1463 = vmatprep.subr.bf16.mxu0 0
      %1464 = vmatpush1.bf16.msra.mxu0 0
      %1465 = vmatprep.subr.bf16.mxu0 0
      %1466 = vmatpush1.bf16.msra.mxu0 0
      %1467 = vmatprep.mubr.bf16.mxu0 0
      %1468 = vmatmul.mubr.bf16.gmra.mrb[0].mxu0 %v1433
      %v1469 = vpop.f32.mrb[0].mxu0
      %v1470 = vadd.f32 0.0, %v1469
      %v1471 = vpop.f32.mrb[0].mxu0
      %v1472 = vpop.f32.mrb[0].mxu0
      %v1473 = vpop.f32.mrb[0].mxu0
      %1474 = vdwg.mxu0
      %v1475 = vadd.f32 %v1412, %v1470
      %v1476 = vld [vmem:[%s21] sm:$0x1]
      %v1477 = vld [vmem:[%s22] sm:$0x1]
      %v1478 = vsel %vm1431, %v1475, 0.0
      %1479 = vadd.xlane.f32.xlu0 %v1478
      %v1480 = vpop.xlane.xlu0 %1479
      %v1481 = vrcp.pop 32.0
      %v1482 = vmul.f32 %v1480, %v1481
      %v1483 = vmul.f32 %v1475, %v1475
      %v1484 = vsel %vm1431, %v1483, 0.0
      %1485 = vadd.xlane.f32.xlu0 %v1484
      %v1486 = vpop.xlane.xlu0 %1485
      %v1487 = vmul.f32 %v1486, %v1481
      %v1488 = vmul.f32 %v1482, %v1482
      %v1489 = vsub.f32 %v1487, %v1488
      %v1490 = vmax.f32 %v1489, 0.0
      %v1491 = vsub.f32 %v1475, %v1482
      %v1492 = vadd.f32 %v1490, 1e-05
      %v1493 = vrsqrt.pop %v1492
      %v1495 = vlaneseq
      %v1496 = vshrl.u32 %v1495, 7
      %v1497 = vsub.s32 0, %v1496
      %v1498 = vrot.slane %v1476, %v1497
      %v1500 = vmul.f32 %v1493, %v1498
      %v1501 = vmul.f32 %v1491, %v1500
      %v1503 = vlaneseq
      %v1504 = vshrl.u32 %v1503, 7
      %v1505 = vsub.s32 0, %v1504
      %v1506 = vrot.slane %v1477, %v1505
      %v1508 = vadd.f32 %v1501, %v1506
      %v1509 = vmax.f32 %v1508, 0.0
      %v1510 = vld [vmem:[%s23] sm:$0xf]
      %v1511 = vld [vmem:[%s23 + $0x4] sm:$0xf]
      %v1512 = vld [vmem:[%s23 + $0x8] sm:$0xf]
      %v1513 = vld [vmem:[%s23 + $0xc] sm:$0xf]
      %v1514 = vpack.c.bf16 %v1509, %v1509
      %v1519 = vunpack.c.l.b16 %v1510
      %v1520 = vunpack.c.l.b16 %v1511
      %v1521 = vunpack.c.l.b16 %v1512
      %v1522 = vunpack.c.l.b16 %v1513
      %v1523 = vpack.c.b16 %v1520, %v1519
      %v1524 = vpack.c.b16 %v1522, %v1521
      %v1528 = vsel %vm1431, %v1514, 0
      %1530 = vmatprep.subr.bf16.mxu0 0
      %1531 = vmatpush1.bf16.msra.mxu0 %v1523
      %1532 = vmatprep.subr.bf16.mxu0 0
      %1533 = vmatpush1.bf16.msra.mxu0 %v1524
      %1534 = vmatprep.subr.bf16.mxu0 0
      %1535 = vmatpush1.bf16.msra.mxu0 0
      %1536 = vmatprep.subr.bf16.mxu0 0
      %1537 = vmatpush1.bf16.msra.mxu0 0
      %1538 = vmatprep.subr.bf16.mxu0 0
      %1539 = vmatpush1.bf16.msra.mxu0 0
      %1540 = vmatprep.subr.bf16.mxu0 0
      %1541 = vmatpush1.bf16.msra.mxu0 0
      %1542 = vmatprep.subr.bf16.mxu0 0
      %1543 = vmatpush1.bf16.msra.mxu0 0
      %1544 = vmatprep.subr.bf16.mxu0 0
      %1545 = vmatpush1.bf16.msra.mxu0 0
      %1546 = vmatprep.subr.bf16.mxu0 0
      %1547 = vmatpush1.bf16.msra.mxu0 0
      %1548 = vmatprep.subr.bf16.mxu0 0
      %1549 = vmatpush1.bf16.msra.mxu0 0
      %1550 = vmatprep.subr.bf16.mxu0 0
      %1551 = vmatpush1.bf16.msra.mxu0 0
      %1552 = vmatprep.subr.bf16.mxu0 0
      %1553 = vmatpush1.bf16.msra.mxu0 0
      %1554 = vmatprep.subr.bf16.mxu0 0
      %1555 = vmatpush1.bf16.msra.mxu0 0
      %1556 = vmatprep.subr.bf16.mxu0 0
      %1557 = vmatpush1.bf16.msra.mxu0 0
      %1558 = vmatprep.subr.bf16.mxu0 0
      %1559 = vmatpush1.bf16.msra.mxu0 0
      %1560 = vmatprep.subr.bf16.mxu0 0
      %1561 = vmatpush1.bf16.msra.mxu0 0
      %1562 = vmatprep.mubr.bf16.mxu0 0
      %1563 = vmatmul.mubr.bf16.gmra.mrb[0].mxu0 %v1528
      %v1564 = vpop.f32.mrb[0].mxu0
      %v1565 = vadd.f32 0.0, %v1564
      %v1566 = vpop.f32.mrb[0].mxu0
      %v1567 = vpop.f32.mrb[0].mxu0
      %v1568 = vpop.f32.mrb[0].mxu0
      %1569 = vdwg.mxu0
      %v1570 = vld [vmem:[%s24] sm:$0x1]
      %v1571 = vld [vmem:[%s25] sm:$0x1]
      %v1572 = vsel %vm1431, %v1565, 0.0
      %1573 = vadd.xlane.f32.xlu0 %v1572
      %v1574 = vpop.xlane.xlu0 %1573
      %v1575 = vmul.f32 %v1574, %v1481
      %v1576 = vmul.f32 %v1565, %v1565
      %v1577 = vsel %vm1431, %v1576, 0.0
      %1578 = vadd.xlane.f32.xlu0 %v1577
      %v1579 = vpop.xlane.xlu0 %1578
      %v1580 = vmul.f32 %v1579, %v1481
      %v1581 = vmul.f32 %v1575, %v1575
      %v1582 = vsub.f32 %v1580, %v1581
      %v1583 = vmax.f32 %v1582, 0.0
      %v1584 = vsub.f32 %v1565, %v1575
      %v1585 = vadd.f32 %v1583, 1e-05
      %v1586 = vrsqrt.pop %v1585
      %v1588 = vlaneseq
      %v1589 = vshrl.u32 %v1588, 7
      %v1590 = vsub.s32 0, %v1589
      %v1591 = vrot.slane %v1570, %v1590
      %v1593 = vmul.f32 %v1586, %v1591
      %v1594 = vmul.f32 %v1584, %v1593
      %v1596 = vlaneseq
      %v1597 = vshrl.u32 %v1596, 7
      %v1598 = vsub.s32 0, %v1597
      %v1599 = vrot.slane %v1571, %v1598
      %v1601 = vadd.f32 %v1594, %v1599
      %v1602 = vld [vmem:[%s1] sm:$0xff]
      %v1603 = vadd.f32 %v1601, %v1602
      %1604 = vst.msk [vmem:[#allocation7] sm:$0xff] %vm1431, %v1603
    $region113: #{net_forward.3} parent=1 // pred_fallthru
      _
    // Predicated region
    $region114: #{net_forward.3} parent=1 // pred_check
      _
    $region115: #{net_forward.3} parent=1 // pred_check_branch
      %1606 = sbr.rel (0) target = $region117
    $region116: #{net_forward.3} parent=1 // pred_region
      %s1608 = ssub.s32 128, 128
      %1609 = vsyncadd [#allocation8], %s1608
      %s1611 = sshll.u32 [#allocation7], 4
      %s1612 = int_to_ptr.vmem [resolvable:$true] %s1611
      %1614 = dma.vmem_to_hbm [thread:$0]  %s1612, 128, %s26, [#allocation8]
    $region117: #{net_forward.3} parent=1 // pred_fallthru
      _
    // Predicated region
    $region118: #{net_forward.3} parent=1 // pred_check
      _
    $region119: #{net_forward.3} parent=1 // pred_check_branch
      %1616 = sbr.rel (0) target = $region121
    $region120: #{net_forward.3} parent=1 // pred_region
      %1617 = dma.done [#allocation8], 128
    $region121: #{net_forward.3} parent=1 // pred_fallthru
      _
    %1618 = vsyncpa [#allocation8], 1

// kernel: net_forward.2
$region0: #{net_forward.2}
  #allocation0 [shape = 'u32[]', space=smem, size = 0x4, offset = 0x4, fixed_abs, tag = 'smem constant byte address 0x4 - core index']
  #allocation1 [shape = 'u32[144,128]{1,0:T(1,128)}', space=vmem, size = 0x12000, scoped, tag = 'internal scratch']
  #allocation2 [shape = 'f32[8,32]{1,0:T(8,128)}', space=vmem, size = 0x1000, scoped, tag = 'scratch operand']
  #allocation3 [shape = 'f32[8,32]{1,0:T(8,128)}', space=vmem, size = 0x1000, scoped, tag = 'scratch operand']
  #allocation4 [shape = 'f32[8,32]{1,0:T(8,128)}', space=vmem, size = 0x1000, scoped, tag = 'scratch operand']
  #allocation5 [shape = 's32[1]{0}', space=sflag, size = 0x4, scoped, tag = 'scoped memory for net_forward.2']
  #allocation6 [shape = 's32[1,1]{1,0:T(1,128)S(6)}', space=smem, size = 0x200, scoped, tag = 'prefetched SMEM operand 0']
  %s0 = inlined_call_operand.<no memory space> [shape: s32[1,1], index: 0, kind: input, shape index: {}]
  %s1 = inlined_call_operand.vmem [shape: f32[8,32], index: 1, kind: input, shape index: {}, may-alias: {1,2}]
  %s2 = inlined_call_operand.vmem [shape: f32[8,32], index: 2, kind: input, shape index: {}, may-alias: {1,2}]
  %s3 = inlined_call_operand.vmem [shape: f32[8,2], index: 3, kind: input, shape index: {}, may-alias: {3,4}]
  %s4 = inlined_call_operand.vmem [shape: f32[8,2], index: 4, kind: input, shape index: {}, may-alias: {3,4}]
  %s5 = inlined_call_operand.vmem [shape: f32[8,1], index: 5, kind: input, shape index: {}, may-alias: {5,6}]
  %s6 = inlined_call_operand.vmem [shape: f32[8,1], index: 6, kind: input, shape index: {}, may-alias: {5,6}]
  %s7 = inlined_call_operand.vmem [shape: f32[2,32], index: 7, kind: input, shape index: {}]
  %s8 = inlined_call_operand.vmem [shape: f32[1,32], index: 8, kind: input, shape index: {}]
  %s9 = inlined_call_operand.vmem [shape: bf16[32,32], index: 9, kind: input, shape index: {}]
  %s10 = inlined_call_operand.vmem [shape: f32[1,32], index: 10, kind: input, shape index: {}]
  %s11 = inlined_call_operand.vmem [shape: f32[1,32], index: 11, kind: input, shape index: {}]
  %s12 = inlined_call_operand.vmem [shape: bf16[32,64], index: 12, kind: input, shape index: {}]
  %s13 = inlined_call_operand.vmem [shape: f32[1,32], index: 13, kind: input, shape index: {}]
  %s14 = inlined_call_operand.vmem [shape: f32[1,32], index: 14, kind: input, shape index: {}]
  %s15 = inlined_call_operand.vmem [shape: bf16[32,32], index: 15, kind: input, shape index: {}]
  %s16 = inlined_call_operand.vmem [shape: bf16[32,32], index: 16, kind: input, shape index: {}]
  %s17 = inlined_call_operand.vmem [shape: bf16[32,32], index: 17, kind: input, shape index: {}]
  %s18 = inlined_call_operand.vmem [shape: f32[1,32], index: 18, kind: input, shape index: {}]
  %s19 = inlined_call_operand.vmem [shape: f32[1,32], index: 19, kind: input, shape index: {}]
  %s20 = inlined_call_operand.vmem [shape: bf16[32,32], index: 20, kind: input, shape index: {}]
  %s21 = inlined_call_operand.vmem [shape: f32[1,32], index: 21, kind: input, shape index: {}]
  %s22 = inlined_call_operand.vmem [shape: f32[1,32], index: 22, kind: input, shape index: {}]
  %s23 = inlined_call_operand.vmem [shape: bf16[32,32], index: 23, kind: input, shape index: {}]
  %s24 = inlined_call_operand.vmem [shape: f32[1,32], index: 24, kind: input, shape index: {}]
  %s25 = inlined_call_operand.vmem [shape: f32[1,32], index: 25, kind: input, shape index: {}]
  %s26 = inlined_call_operand.vmem [shape: f32[8,32], index: 26, kind: output, shape index: {}]
  %s27 = sld [smem:[#allocation0]]
  $region122: #{net_forward.2} parent=0
    _
  %s29 = ssub.s32 1, %s27
  %s30 = scalar_select 0, %s29, %s27
  %31 = sst [smem:[#allocation6]] %s0
  // Predicated region
  $region2: #{net_forward.2} parent=0 // pred_check
    _
  $region3: #{net_forward.2} parent=0 // pred_check_branch
    %33 = sbr.rel (0) target = $region5
  $region4: #{net_forward.2} parent=0 // pred_region
    _
  $region5: #{net_forward.2} parent=0 // pred_fallthru
    _
  // Predicated region
  $region6: #{net_forward.2} parent=0 // pred_check
    _
  $region7: #{net_forward.2} parent=0 // pred_check_branch
    %35 = sbr.rel (0) target = $region9
  $region8: #{net_forward.2} parent=0 // pred_region
    _
  $region9: #{net_forward.2} parent=0 // pred_fallthru
    _
  // Predicated region
  $region10: #{net_forward.2} parent=0 // pred_check
    _
  $region11: #{net_forward.2} parent=0 // pred_check_branch
    %37 = sbr.rel (0) target = $region13
  $region12: #{net_forward.2} parent=0 // pred_region
    _
  $region13: #{net_forward.2} parent=0 // pred_fallthru
    _
  // Predicated region
  $region14: #{net_forward.2} parent=0 // pred_check
    _
  $region15: #{net_forward.2} parent=0 // pred_check_branch
    %39 = sbr.rel (0) target = $region17
  $region16: #{net_forward.2} parent=0 // pred_region
    _
  $region17: #{net_forward.2} parent=0 // pred_fallthru
    _
  // Predicated region
  $region18: #{net_forward.2} parent=0 // pred_check
    _
  $region19: #{net_forward.2} parent=0 // pred_check_branch
    %41 = sbr.rel (0) target = $region21
  $region20: #{net_forward.2} parent=0 // pred_region
    _
  $region21: #{net_forward.2} parent=0 // pred_fallthru
    _
  // Predicated region
  $region22: #{net_forward.2} parent=0 // pred_check
    _
  $region23: #{net_forward.2} parent=0 // pred_check_branch
    %43 = sbr.rel (0) target = $region25
  $region24: #{net_forward.2} parent=0 // pred_region
    _
  $region25: #{net_forward.2} parent=0 // pred_fallthru
    _
  // Predicated region
  $region26: #{net_forward.2} parent=0 // pred_check
    _
  $region27: #{net_forward.2} parent=0 // pred_check_branch
    %45 = sbr.rel (0) target = $region29
  $region28: #{net_forward.2} parent=0 // pred_region
    _
  $region29: #{net_forward.2} parent=0 // pred_fallthru
    _
  // Predicated region
  $region30: #{net_forward.2} parent=0 // pred_check
    _
  $region31: #{net_forward.2} parent=0 // pred_check_branch
    %47 = sbr.rel (0) target = $region33
  $region32: #{net_forward.2} parent=0 // pred_region
    _
  $region33: #{net_forward.2} parent=0 // pred_fallthru
    _
  // Predicated region
  $region34: #{net_forward.2} parent=0 // pred_check
    _
  $region35: #{net_forward.2} parent=0 // pred_check_branch
    %49 = sbr.rel (0) target = $region37
  $region36: #{net_forward.2} parent=0 // pred_region
    _
  $region37: #{net_forward.2} parent=0 // pred_fallthru
    _
  // Predicated region
  $region38: #{net_forward.2} parent=0 // pred_check
    _
  $region39: #{net_forward.2} parent=0 // pred_check_branch
    %51 = sbr.rel (0) target = $region41
  $region40: #{net_forward.2} parent=0 // pred_region
    _
  $region41: #{net_forward.2} parent=0 // pred_fallthru
    _
  // Predicated region
  $region42: #{net_forward.2} parent=0 // pred_check
    _
  $region43: #{net_forward.2} parent=0 // pred_check_branch
    %53 = sbr.rel (0) target = $region45
  $region44: #{net_forward.2} parent=0 // pred_region
    _
  $region45: #{net_forward.2} parent=0 // pred_fallthru
    _
  // Predicated region
  $region46: #{net_forward.2} parent=0 // pred_check
    _
  $region47: #{net_forward.2} parent=0 // pred_check_branch
    %55 = sbr.rel (0) target = $region49
  $region48: #{net_forward.2} parent=0 // pred_region
    _
  $region49: #{net_forward.2} parent=0 // pred_fallthru
    _
  // Predicated region
  $region50: #{net_forward.2} parent=0 // pred_check
    _
  $region51: #{net_forward.2} parent=0 // pred_check_branch
    %57 = sbr.rel (0) target = $region53
  $region52: #{net_forward.2} parent=0 // pred_region
    _
  $region53: #{net_forward.2} parent=0 // pred_fallthru
    _
  // Predicated region
  $region54: #{net_forward.2} parent=0 // pred_check
    _
  $region55: #{net_forward.2} parent=0 // pred_check_branch
    %59 = sbr.rel (0) target = $region57
  $region56: #{net_forward.2} parent=0 // pred_region
    _
  $region57: #{net_forward.2} parent=0 // pred_fallthru
    _
  // Predicated region
  $region58: #{net_forward.2} parent=0 // pred_check
    _
  $region59: #{net_forward.2} parent=0 // pred_check_branch
    %61 = sbr.rel (0) target = $region61
  $region60: #{net_forward.2} parent=0 // pred_region
    _
  $region61: #{net_forward.2} parent=0 // pred_fallthru
    _
  // Predicated region
  $region62: #{net_forward.2} parent=0 // pred_check
    _
  $region63: #{net_forward.2} parent=0 // pred_check_branch
    %63 = sbr.rel (0) target = $region65
  $region64: #{net_forward.2} parent=0 // pred_region
    _
  $region65: #{net_forward.2} parent=0 // pred_fallthru
    _
  // Predicated region
  $region66: #{net_forward.2} parent=0 // pred_check
    _
  $region67: #{net_forward.2} parent=0 // pred_check_branch
    %65 = sbr.rel (0) target = $region69
  $region68: #{net_forward.2} parent=0 // pred_region
    _
  $region69: #{net_forward.2} parent=0 // pred_fallthru
    _
  // Predicated region
  $region70: #{net_forward.2} parent=0 // pred_check
    _
  $region71: #{net_forward.2} parent=0 // pred_check_branch
    %67 = sbr.rel (0) target = $region73
  $region72: #{net_forward.2} parent=0 // pred_region
    _
  $region73: #{net_forward.2} parent=0 // pred_fallthru
    _
  // Predicated region
  $region74: #{net_forward.2} parent=0 // pred_check
    _
  $region75: #{net_forward.2} parent=0 // pred_check_branch
    %69 = sbr.rel (0) target = $region77
  $region76: #{net_forward.2} parent=0 // pred_region
    _
  $region77: #{net_forward.2} parent=0 // pred_fallthru
    _
  // Predicated region
  $region78: #{net_forward.2} parent=0 // pred_check
    _
  $region79: #{net_forward.2} parent=0 // pred_check_branch
    %71 = sbr.rel (0) target = $region81
  $region80: #{net_forward.2} parent=0 // pred_region
    _
  $region81: #{net_forward.2} parent=0 // pred_fallthru
    _
  // Predicated region
  $region82: #{net_forward.2} parent=0 // pred_check
    _
  $region83: #{net_forward.2} parent=0 // pred_check_branch
    %73 = sbr.rel (0) target = $region85
  $region84: #{net_forward.2} parent=0 // pred_region
    _
  $region85: #{net_forward.2} parent=0 // pred_fallthru
    _
  // Predicated region
  $region86: #{net_forward.2} parent=0 // pred_check
    _
  $region87: #{net_forward.2} parent=0 // pred_check_branch
    %75 = sbr.rel (0) target = $region89
  $region88: #{net_forward.2} parent=0 // pred_region
    _
  $region89: #{net_forward.2} parent=0 // pred_fallthru
    _
  // Predicated region
  $region90: #{net_forward.2} parent=0 // pred_check
    _
  $region91: #{net_forward.2} parent=0 // pred_check_branch
    %77 = sbr.rel (0) target = $region93
  $region92: #{net_forward.2} parent=0 // pred_region
    _
  $region93: #{net_forward.2} parent=0 // pred_fallthru
    _
  // Predicated region
  $region94: #{net_forward.2} parent=0 // pred_check
    _
  $region95: #{net_forward.2} parent=0 // pred_check_branch
    %79 = sbr.rel (0) target = $region97
  $region96: #{net_forward.2} parent=0 // pred_region
    _
  $region97: #{net_forward.2} parent=0 // pred_fallthru
    _
  // Predicated region
  $region98: #{net_forward.2} parent=0 // pred_check
    _
  $region99: #{net_forward.2} parent=0 // pred_check_branch
    %81 = sbr.rel (0) target = $region101
  $region100: #{net_forward.2} parent=0 // pred_region
    _
  $region101: #{net_forward.2} parent=0 // pred_fallthru
    _
  %p83 = scmp.eq.s32.totalorder 0, 0
  // Predicated region
  $region102: #{net_forward.2} parent=0 // pred_check
    %p84 = pneg %p83
  $region103: #{net_forward.2} parent=0 // pred_check_branch
    %86 = sbr.rel (%p84) target = $region105
  $region104: #{net_forward.2} parent=0 // pred_region
    %vm87 = vcmask 261120
    %88 = vst.msk [vmem:[#allocation2] sm:$0xff] %vm87, 0.0
    %v89 = vld [vmem:[%s1] sm:$0xff]
    %v90 = vld [vmem:[%s12] sm:$0xf]
    %v91 = vld [vmem:[%s12 + $0x4] sm:$0xf]
    %v92 = vld [vmem:[%s12 + $0x8] sm:$0xf]
    %v93 = vld [vmem:[%s12 + $0xc] sm:$0xf]
    %v94 = vpack.c.bf16 %v89, %v89
    %v99 = vunpack.c.l.b16 %v90
    %v100 = vunpack.c.l.b16 %v91
    %v101 = vunpack.c.l.b16 %v92
    %v102 = vunpack.c.l.b16 %v93
    %v103 = vpack.c.b16 %v100, %v99
    %v104 = vpack.c.b16 %v102, %v101
    %v108 = vsel %vm87, %v94, 0
    %110 = vmatprep.subr.bf16.mxu0 0
    %111 = vmatpush1.bf16.msra.mxu0 %v103
    %112 = vmatprep.subr.bf16.mxu0 0
    %113 = vmatpush1.bf16.msra.mxu0 %v104
    %114 = vmatprep.subr.bf16.mxu0 0
    %115 = vmatpush1.bf16.msra.mxu0 0
    %116 = vmatprep.subr.bf16.mxu0 0
    %117 = vmatpush1.bf16.msra.mxu0 0
    %118 = vmatprep.subr.bf16.mxu0 0
    %119 = vmatpush1.bf16.msra.mxu0 0
    %120 = vmatprep.subr.bf16.mxu0 0
    %121 = vmatpush1.bf16.msra.mxu0 0
    %122 = vmatprep.subr.bf16.mxu0 0
    %123 = vmatpush1.bf16.msra.mxu0 0
    %124 = vmatprep.subr.bf16.mxu0 0
    %125 = vmatpush1.bf16.msra.mxu0 0
    %126 = vmatprep.subr.bf16.mxu0 0
    %127 = vmatpush1.bf16.msra.mxu0 0
    %128 = vmatprep.subr.bf16.mxu0 0
    %129 = vmatpush1.bf16.msra.mxu0 0
    %130 = vmatprep.subr.bf16.mxu0 0
    %131 = vmatpush1.bf16.msra.mxu0 0
    %132 = vmatprep.subr.bf16.mxu0 0
    %133 = vmatpush1.bf16.msra.mxu0 0
    %134 = vmatprep.subr.bf16.mxu0 0
    %135 = vmatpush1.bf16.msra.mxu0 0
    %136 = vmatprep.subr.bf16.mxu0 0
    %137 = vmatpush1.bf16.msra.mxu0 0
    %138 = vmatprep.subr.bf16.mxu0 0
    %139 = vmatpush1.bf16.msra.mxu0 0
    %140 = vmatprep.subr.bf16.mxu0 0
    %141 = vmatpush1.bf16.msra.mxu0 0
    %142 = vmatprep.mubr.bf16.mxu0 0
    %143 = vmatmul.mubr.bf16.gmra.mrb[0].mxu0 %v108
    %v144 = vpop.f32.mrb[0].mxu0
    %v145 = vadd.f32 0.0, %v144
    %v146 = vpop.f32.mrb[0].mxu0
    %v147 = vpop.f32.mrb[0].mxu0
    %v148 = vpop.f32.mrb[0].mxu0
    %149 = vdwg.mxu0
    %v150 = vld [vmem:[%s13] sm:$0x1]
    %v151 = vld [vmem:[%s14] sm:$0x1]
    %v152 = vsel %vm87, %v145, 0.0
    %153 = vadd.xlane.f32.xlu0 %v152
    %v154 = vpop.xlane.xlu0 %153
    %v155 = vrcp.pop 32.0
    %v156 = vmul.f32 %v154, %v155
    %v157 = vmul.f32 %v145, %v145
    %v158 = vsel %vm87, %v157, 0.0
    %159 = vadd.xlane.f32.xlu0 %v158
    %v160 = vpop.xlane.xlu0 %159
    %v161 = vmul.f32 %v160, %v155
    %v162 = vmul.f32 %v156, %v156
    %v163 = vsub.f32 %v161, %v162
    %v164 = vmax.f32 %v163, 0.0
    %v165 = vsub.f32 %v145, %v156
    %v166 = vadd.f32 %v164, 1e-05
    %v167 = vrsqrt.pop %v166
    %v169 = vlaneseq
    %v170 = vshrl.u32 %v169, 7
    %v171 = vsub.s32 0, %v170
    %v172 = vrot.slane %v150, %v171
    %v174 = vmul.f32 %v167, %v172
    %v175 = vmul.f32 %v165, %v174
    %v177 = vlaneseq
    %v178 = vshrl.u32 %v177, 7
    %v179 = vsub.s32 0, %v178
    %v180 = vrot.slane %v151, %v179
    %v182 = vadd.f32 %v175, %v180
    %v183 = vmax.f32 %v182, 0.0
    %v184 = vld [vmem:[%s16] sm:$0xf]
    %v185 = vld [vmem:[%s16 + $0x4] sm:$0xf]
    %v186 = vld [vmem:[%s16 + $0x8] sm:$0xf]
    %v187 = vld [vmem:[%s16 + $0xc] sm:$0xf]
    %v188 = vpack.c.bf16 %v183, %v183
    %v193 = vunpack.c.l.b16 %v184
    %v194 = vunpack.c.l.b16 %v185
    %v195 = vunpack.c.l.b16 %v186
    %v196 = vunpack.c.l.b16 %v187
    %v197 = vpack.c.b16 %v194, %v193
    %v198 = vpack.c.b16 %v196, %v195
    %v202 = vsel %vm87, %v188, 0
    %204 = vmatprep.subr.bf16.mxu0 0
    %205 = vmatpush1.bf16.msra.mxu0 %v197
    %206 = vmatprep.subr.bf16.mxu0 0
    %207 = vmatpush1.bf16.msra.mxu0 %v198
    %208 = vmatprep.subr.bf16.mxu0 0
    %209 = vmatpush1.bf16.msra.mxu0 0
    %210 = vmatprep.subr.bf16.mxu0 0
    %211 = vmatpush1.bf16.msra.mxu0 0
    %212 = vmatprep.subr.bf16.mxu0 0
    %213 = vmatpush1.bf16.msra.mxu0 0
    %214 = vmatprep.subr.bf16.mxu0 0
    %215 = vmatpush1.bf16.msra.mxu0 0
    %216 = vmatprep.subr.bf16.mxu0 0
    %217 = vmatpush1.bf16.msra.mxu0 0
    %218 = vmatprep.subr.bf16.mxu0 0
    %219 = vmatpush1.bf16.msra.mxu0 0
    %220 = vmatprep.subr.bf16.mxu0 0
    %221 = vmatpush1.bf16.msra.mxu0 0
    %222 = vmatprep.subr.bf16.mxu0 0
    %223 = vmatpush1.bf16.msra.mxu0 0
    %224 = vmatprep.subr.bf16.mxu0 0
    %225 = vmatpush1.bf16.msra.mxu0 0
    %226 = vmatprep.subr.bf16.mxu0 0
    %227 = vmatpush1.bf16.msra.mxu0 0
    %228 = vmatprep.subr.bf16.mxu0 0
    %229 = vmatpush1.bf16.msra.mxu0 0
    %230 = vmatprep.subr.bf16.mxu0 0
    %231 = vmatpush1.bf16.msra.mxu0 0
    %232 = vmatprep.subr.bf16.mxu0 0
    %233 = vmatpush1.bf16.msra.mxu0 0
    %234 = vmatprep.subr.bf16.mxu0 0
    %235 = vmatpush1.bf16.msra.mxu0 0
    %236 = vmatprep.mubr.bf16.mxu0 0
    %237 = vmatmul.mubr.bf16.gmra.mrb[0].mxu0 %v202
    %v238 = vpop.f32.mrb[0].mxu0
    %v239 = vadd.f32 0.0, %v238
    %v240 = vpop.f32.mrb[0].mxu0
    %v241 = vpop.f32.mrb[0].mxu0
    %v242 = vpop.f32.mrb[0].mxu0
    %243 = vdwg.mxu0
    %244 = vst.msk [vmem:[#allocation3] sm:$0xff] %vm87, %v239
    %246 = vrot.lane.b32.xlu0 %v145, 96
    %v247 = vpop.permute.xlu0 %246
    %249 = vst.msk [vmem:[#allocation4] sm:$0xff] %vm87, %v247
  $region105: #{net_forward.2} parent=0 // pred_fallthru
    _
  %s250 = sadd.s32 0, 0
  %s251 = smul.u32 %s250, 128
  %s252 = sadd.s32 %s251, 0
  %s253 = sld [smem:[#allocation6 + %s252]]
  %p254 = scmp.gt.s32.totalorder %s253, 0
  // Predicated region
  $region106: #{net_forward.2} parent=0 // pred_check
    %p255 = pneg %p254
  $region107: #{net_forward.2} parent=0 // pred_check_branch
    %257 = sbr.rel (%p255) target = $region109
  $region108: #{net_forward.2} parent=0 // pred_region
    %v258 = vld [vmem:[%s3] sm:$0xff]
    %v259 = vld [vmem:[%s4] sm:$0xff]
    %260 = vxpose.xlu0.b32.start [1/16] %v259, 128
    %261 = vxpose.xlu0.b32.cont [2/16] 0.0, 128
    %262 = vxpose.xlu0.b32.cont [3/16] 0.0, 128
    %263 = vxpose.xlu0.b32.cont [4/16] 0.0, 128
    %264 = vxpose.xlu0.b32.cont [5/16] 0.0, 128
    %265 = vxpose.xlu0.b32.cont [6/16] 0.0, 128
    %266 = vxpose.xlu0.b32.cont [7/16] 0.0, 128
    %267 = vxpose.xlu0.b32.cont [8/16] 0.0, 128
    %268 = vxpose.xlu0.b32.cont [9/16] 0.0, 128
    %269 = vxpose.xlu0.b32.cont [10/16] 0.0, 128
    %270 = vxpose.xlu0.b32.cont [11/16] 0.0, 128
    %271 = vxpose.xlu0.b32.cont [12/16] 0.0, 128
    %272 = vxpose.xlu0.b32.cont [13/16] 0.0, 128
    %273 = vxpose.xlu0.b32.cont [14/16] 0.0, 128
    %274 = vxpose.xlu0.b32.cont [15/16] 0.0, 128
    %275 = vxpose.xlu0.b32.end [16/16] 0.0, 128
    %v276 = vpop.trf.xlu0
    %v277 = vpop.trf.xlu0
    %v278 = vpop.trf.xlu0
    %v279 = vpop.trf.xlu0
    %v280 = vpop.trf.xlu0
    %v281 = vpop.trf.xlu0
    %v282 = vpop.trf.xlu0
    %v283 = vpop.trf.xlu0
    %v284 = vpop.trf.xlu0
    %v285 = vpop.trf.xlu0
    %v286 = vpop.trf.xlu0
    %v287 = vpop.trf.xlu0
    %v288 = vpop.trf.xlu0
    %v289 = vpop.trf.xlu0
    %v290 = vpop.trf.xlu0
    %v291 = vpop.trf.xlu0
    %293 = vset.pattern.permute.xlu0 0
    %294 = vperm.xlu0 %293, %v258
    %v295 = vpop.permute.xlu0 %294
    %v297 = vlaneseq
    %v298 = vshrl.u32 %v297, 7
    %v299 = vsub.s32 0, %v298
    %v300 = vrot.slane %v276, %v299
    %v301 = vsub.f32 %v295, %v300
    %303 = vrot.lane.b32.xlu0 %v259, 127
    %v304 = vpop.permute.xlu0 %303
    %306 = vxpose.xlu0.b32.start [1/16] %v304, 128
    %307 = vxpose.xlu0.b32.cont [2/16] 0.0, 128
    %308 = vxpose.xlu0.b32.cont [3/16] 0.0, 128
    %309 = vxpose.xlu0.b32.cont [4/16] 0.0, 128
    %310 = vxpose.xlu0.b32.cont [5/16] 0.0, 128
    %311 = vxpose.xlu0.b32.cont [6/16] 0.0, 128
    %312 = vxpose.xlu0.b32.cont [7/16] 0.0, 128
    %313 = vxpose.xlu0.b32.cont [8/16] 0.0, 128
    %314 = vxpose.xlu0.b32.cont [9/16] 0.0, 128
    %315 = vxpose.xlu0.b32.cont [10/16] 0.0, 128
    %316 = vxpose.xlu0.b32.cont [11/16] 0.0, 128
    %317 = vxpose.xlu0.b32.cont [12/16] 0.0, 128
    %318 = vxpose.xlu0.b32.cont [13/16] 0.0, 128
    %319 = vxpose.xlu0.b32.cont [14/16] 0.0, 128
    %320 = vxpose.xlu0.b32.cont [15/16] 0.0, 128
    %321 = vxpose.xlu0.b32.end [16/16] 0.0, 128
    %v322 = vpop.trf.xlu0
    %v323 = vpop.trf.xlu0
    %v324 = vpop.trf.xlu0
    %v325 = vpop.trf.xlu0
    %v326 = vpop.trf.xlu0
    %v327 = vpop.trf.xlu0
    %v328 = vpop.trf.xlu0
    %v329 = vpop.trf.xlu0
    %v330 = vpop.trf.xlu0
    %v331 = vpop.trf.xlu0
    %v332 = vpop.trf.xlu0
    %v333 = vpop.trf.xlu0
    %v334 = vpop.trf.xlu0
    %v335 = vpop.trf.xlu0
    %v336 = vpop.trf.xlu0
    %v337 = vpop.trf.xlu0
    %338 = vset.pattern.permute.xlu0 1
    %339 = vperm.xlu0 %338, %v258
    %v340 = vpop.permute.xlu0 %339
    %v342 = vlaneseq
    %v343 = vshrl.u32 %v342, 7
    %v344 = vsub.s32 0, %v343
    %v345 = vrot.slane %v322, %v344
    %v346 = vsub.f32 %v340, %v345
    %v347 = vmul.f32 %v301, %v301
    %v348 = vmul.f32 %v346, %v346
    %v349 = vadd.f32 %v347, %v348
    %v350 = vld [vmem:[%s5] sm:$0xff]
    %v351 = vld [vmem:[%s6] sm:$0xff]
    %352 = vxpose.xlu0.b32.start [1/16] %v351, 128
    %353 = vxpose.xlu0.b32.cont [2/16] 0.0, 128
    %354 = vxpose.xlu0.b32.cont [3/16] 0.0, 128
    %355 = vxpose.xlu0.b32.cont [4/16] 0.0, 128
    %356 = vxpose.xlu0.b32.cont [5/16] 0.0, 128
    %357 = vxpose.xlu0.b32.cont [6/16] 0.0, 128
    %358 = vxpose.xlu0.b32.cont [7/16] 0.0, 128
    %359 = vxpose.xlu0.b32.cont [8/16] 0.0, 128
    %360 = vxpose.xlu0.b32.cont [9/16] 0.0, 128
    %361 = vxpose.xlu0.b32.cont [10/16] 0.0, 128
    %362 = vxpose.xlu0.b32.cont [11/16] 0.0, 128
    %363 = vxpose.xlu0.b32.cont [12/16] 0.0, 128
    %364 = vxpose.xlu0.b32.cont [13/16] 0.0, 128
    %365 = vxpose.xlu0.b32.cont [14/16] 0.0, 128
    %366 = vxpose.xlu0.b32.cont [15/16] 0.0, 128
    %367 = vxpose.xlu0.b32.end [16/16] 0.0, 128
    %v368 = vpop.trf.xlu0
    %v369 = vpop.trf.xlu0
    %v370 = vpop.trf.xlu0
    %v371 = vpop.trf.xlu0
    %v372 = vpop.trf.xlu0
    %v373 = vpop.trf.xlu0
    %v374 = vpop.trf.xlu0
    %v375 = vpop.trf.xlu0
    %v376 = vpop.trf.xlu0
    %v377 = vpop.trf.xlu0
    %v378 = vpop.trf.xlu0
    %v379 = vpop.trf.xlu0
    %v380 = vpop.trf.xlu0
    %v381 = vpop.trf.xlu0
    %v382 = vpop.trf.xlu0
    %v383 = vpop.trf.xlu0
    %385 = vset.pattern.permute.xlu0 0
    %386 = vperm.xlu0 %385, %v350
    %v387 = vpop.permute.xlu0 %386
    %v389 = vlaneseq
    %v390 = vshrl.u32 %v389, 7
    %v391 = vsub.s32 0, %v390
    %v392 = vrot.slane %v368, %v391
    %v393 = vsub.f32 %v387, %v392
    %vm394 = vcmp.eq.f32.partialorder %v393, 0.0
    %vm395 = vcmp.le.f32.partialorder %v349, 36.0
    %vm396 = vmand %vm395, %vm394
    %v397 = vsel %vm396, 1.0, 0.0
    %v398 = vld [vmem:[%s7] sm:$0x3]
    %v399 = vlaneseq
    %v400 = vshrl.u32 %v399, 7
    %v401 = vsub.s32 0, %v400
    %v402 = vrot.slane %v301, %v401
    %404 = vbcast.lane.b32.xlu0 %v402, 256
    %v405 = vpop.permute.xlu0 %404
    %v406 = vlaneseq
    %v407 = vshrl.u32 %v406, 7
    %v408 = vsub.s32 1, %v407
    %v409 = vrot.slane %v301, %v408
    %411 = vbcast.lane.b32.xlu0 %v409, 256
    %v412 = vpop.permute.xlu0 %411
    %v413 = vlaneseq
    %v414 = vshrl.u32 %v413, 7
    %v415 = vsub.s32 2, %v414
    %v416 = vrot.slane %v301, %v415
    %418 = vbcast.lane.b32.xlu0 %v416, 256
    %v419 = vpop.permute.xlu0 %418
    %v420 = vlaneseq
    %v421 = vshrl.u32 %v420, 7
    %v422 = vsub.s32 3, %v421
    %v423 = vrot.slane %v301, %v422
    %425 = vbcast.lane.b32.xlu0 %v423, 256
    %v426 = vpop.permute.xlu0 %425
    %v427 = vlaneseq
    %v428 = vshrl.u32 %v427, 7
    %v429 = vsub.s32 4, %v428
    %v430 = vrot.slane %v301, %v429
    %432 = vbcast.lane.b32.xlu0 %v430, 256
    %v433 = vpop.permute.xlu0 %432
    %v434 = vlaneseq
    %v435 = vshrl.u32 %v434, 7
    %v436 = vsub.s32 5, %v435
    %v437 = vrot.slane %v301, %v436
    %439 = vbcast.lane.b32.xlu0 %v437, 256
    %v440 = vpop.permute.xlu0 %439
    %v441 = vlaneseq
    %v442 = vshrl.u32 %v441, 7
    %v443 = vsub.s32 6, %v442
    %v444 = vrot.slane %v301, %v443
    %446 = vbcast.lane.b32.xlu0 %v444, 256
    %v447 = vpop.permute.xlu0 %446
    %v448 = vlaneseq
    %v449 = vshrl.u32 %v448, 7
    %v450 = vsub.s32 7, %v449
    %v451 = vrot.slane %v301, %v450
    %453 = vbcast.lane.b32.xlu0 %v451, 256
    %v454 = vpop.permute.xlu0 %453
    %v455 = vlaneseq
    %v456 = vshrl.u32 %v455, 7
    %v457 = vsub.s32 0, %v456
    %v458 = vrot.slane %v398, %v457
    %v459 = vmul.f32 %v405, %v458
    %v460 = vmul.f32 %v412, %v458
    %v461 = vmul.f32 %v419, %v458
    %v462 = vmul.f32 %v426, %v458
    %v463 = vmul.f32 %v433, %v458
    %v464 = vmul.f32 %v440, %v458
    %v465 = vmul.f32 %v447, %v458
    %v466 = vmul.f32 %v454, %v458
    %v467 = vlaneseq
    %v468 = vshrl.u32 %v467, 7
    %v469 = vsub.s32 0, %v468
    %v470 = vrot.slane %v346, %v469
    %472 = vbcast.lane.b32.xlu0 %v470, 256
    %v473 = vpop.permute.xlu0 %472
    %v474 = vlaneseq
    %v475 = vshrl.u32 %v474, 7
    %v476 = vsub.s32 1, %v475
    %v477 = vrot.slane %v346, %v476
    %479 = vbcast.lane.b32.xlu0 %v477, 256
    %v480 = vpop.permute.xlu0 %479
    %v481 = vlaneseq
    %v482 = vshrl.u32 %v481, 7
    %v483 = vsub.s32 2, %v482
    %v484 = vrot.slane %v346, %v483
    %486 = vbcast.lane.b32.xlu0 %v484, 256
    %v487 = vpop.permute.xlu0 %486
    %v488 = vlaneseq
    %v489 = vshrl.u32 %v488, 7
    %v490 = vsub.s32 3, %v489
    %v491 = vrot.slane %v346, %v490
    %493 = vbcast.lane.b32.xlu0 %v491, 256
    %v494 = vpop.permute.xlu0 %493
    %v495 = vlaneseq
    %v496 = vshrl.u32 %v495, 7
    %v497 = vsub.s32 4, %v496
    %v498 = vrot.slane %v346, %v497
    %500 = vbcast.lane.b32.xlu0 %v498, 256
    %v501 = vpop.permute.xlu0 %500
    %v502 = vlaneseq
    %v503 = vshrl.u32 %v502, 7
    %v504 = vsub.s32 5, %v503
    %v505 = vrot.slane %v346, %v504
    %507 = vbcast.lane.b32.xlu0 %v505, 256
    %v508 = vpop.permute.xlu0 %507
    %v509 = vlaneseq
    %v510 = vshrl.u32 %v509, 7
    %v511 = vsub.s32 6, %v510
    %v512 = vrot.slane %v346, %v511
    %514 = vbcast.lane.b32.xlu0 %v512, 256
    %v515 = vpop.permute.xlu0 %514
    %v516 = vlaneseq
    %v517 = vshrl.u32 %v516, 7
    %v518 = vsub.s32 7, %v517
    %v519 = vrot.slane %v346, %v518
    %521 = vbcast.lane.b32.xlu0 %v519, 256
    %v522 = vpop.permute.xlu0 %521
    %v523 = vlaneseq
    %v524 = vshrl.u32 %v523, 7
    %v525 = vsub.s32 1, %v524
    %v526 = vrot.slane %v398, %v525
    %v527 = vmul.f32 %v473, %v526
    %v528 = vmul.f32 %v480, %v526
    %v529 = vmul.f32 %v487, %v526
    %v530 = vmul.f32 %v494, %v526
    %v531 = vmul.f32 %v501, %v526
    %v532 = vmul.f32 %v508, %v526
    %v533 = vmul.f32 %v515, %v526
    %v534 = vmul.f32 %v522, %v526
    %v535 = vadd.f32 %v459, %v527
    %v536 = vadd.f32 %v460, %v528
    %v537 = vadd.f32 %v461, %v529
    %v538 = vadd.f32 %v462, %v530
    %v539 = vadd.f32 %v463, %v531
    %v540 = vadd.f32 %v464, %v532
    %v541 = vadd.f32 %v465, %v533
    %v542 = vadd.f32 %v466, %v534
    %v543 = vld [vmem:[%s8] sm:$0x1]
    %v545 = vlaneseq
    %v546 = vshrl.u32 %v545, 7
    %v547 = vsub.s32 0, %v546
    %v548 = vrot.slane %v543, %v547
    %v550 = vadd.f32 %v535, %v548
    %v551 = vadd.f32 %v536, %v548
    %v552 = vadd.f32 %v537, %v548
    %v553 = vadd.f32 %v538, %v548
    %v554 = vadd.f32 %v539, %v548
    %v555 = vadd.f32 %v540, %v548
    %v556 = vadd.f32 %v541, %v548
    %v557 = vadd.f32 %v542, %v548
    %v558 = vmax.f32 %v550, 0.0
    %v559 = vmax.f32 %v551, 0.0
    %v560 = vmax.f32 %v552, 0.0
    %v561 = vmax.f32 %v553, 0.0
    %v562 = vmax.f32 %v554, 0.0
    %v563 = vmax.f32 %v555, 0.0
    %v564 = vmax.f32 %v556, 0.0
    %v565 = vmax.f32 %v557, 0.0
    %v566 = vld [vmem:[%s9] sm:$0xf]
    %v567 = vld [vmem:[%s9 + $0x4] sm:$0xf]
    %v568 = vld [vmem:[%s9 + $0x8] sm:$0xf]
    %v569 = vld [vmem:[%s9 + $0xc] sm:$0xf]
    %v570 = vpack.c.bf16 %v559, %v558
    %v571 = vpack.c.bf16 %v561, %v560
    %v572 = vpack.c.bf16 %v563, %v562
    %v573 = vpack.c.bf16 %v565, %v564
    %v578 = vunpack.c.l.b16 %v566
    %v579 = vunpack.c.l.b16 %v567
    %v580 = vunpack.c.l.b16 %v568
    %v581 = vunpack.c.l.b16 %v569
    %v582 = vpack.c.b16 %v579, %v578
    %v583 = vpack.c.b16 %v581, %v580
    %vm586 = vcmask 261120
    %v588 = vsel %vm586, %v570, 0
    %v591 = vsel %vm586, %v571, 0
    %v594 = vsel %vm586, %v572, 0
    %v597 = vsel %vm586, %v573, 0
    %599 = vmatprep.subr.bf16.mxu0 0
    %600 = vmatpush1.bf16.msra.mxu0 %v582
    %601 = vmatprep.subr.bf16.mxu0 0
    %602 = vmatpush1.bf16.msra.mxu0 %v583
    %603 = vmatprep.subr.bf16.mxu0 0
    %604 = vmatpush1.bf16.msra.mxu0 0
    %605 = vmatprep.subr.bf16.mxu0 0
    %606 = vmatpush1.bf16.msra.mxu0 0
    %607 = vmatprep.subr.bf16.mxu0 0
    %608 = vmatpush1.bf16.msra.mxu0 0
    %609 = vmatprep.subr.bf16.mxu0 0
    %610 = vmatpush1.bf16.msra.mxu0 0
    %611 = vmatprep.subr.bf16.mxu0 0
    %612 = vmatpush1.bf16.msra.mxu0 0
    %613 = vmatprep.subr.bf16.mxu0 0
    %614 = vmatpush1.bf16.msra.mxu0 0
    %615 = vmatprep.subr.bf16.mxu0 0
    %616 = vmatpush1.bf16.msra.mxu0 0
    %617 = vmatprep.subr.bf16.mxu0 0
    %618 = vmatpush1.bf16.msra.mxu0 0
    %619 = vmatprep.subr.bf16.mxu0 0
    %620 = vmatpush1.bf16.msra.mxu0 0
    %621 = vmatprep.subr.bf16.mxu0 0
    %622 = vmatpush1.bf16.msra.mxu0 0
    %623 = vmatprep.subr.bf16.mxu0 0
    %624 = vmatpush1.bf16.msra.mxu0 0
    %625 = vmatprep.subr.bf16.mxu0 0
    %626 = vmatpush1.bf16.msra.mxu0 0
    %627 = vmatprep.subr.bf16.mxu0 0
    %628 = vmatpush1.bf16.msra.mxu0 0
    %629 = vmatprep.subr.bf16.mxu0 0
    %630 = vmatpush1.bf16.msra.mxu0 0
    %631 = vmatprep.mubr.bf16.mxu0 0
    %632 = vmatmul.mubr.bf16.gmra.mrb[0].mxu0 %v588
    %v633 = vpop.f32.mrb[0].mxu0
    %v634 = vadd.f32 0.0, %v633
    %v635 = vpop.f32.mrb[0].mxu0
    %v636 = vpop.f32.mrb[0].mxu0
    %v637 = vadd.f32 0.0, %v636
    %v638 = vpop.f32.mrb[0].mxu0
    %639 = vmatprep.mubr.bf16.mxu0 0
    %640 = vmatmul.mubr.bf16.gmra.mrb[0].mxu0 %v591
    %v641 = vpop.f32.mrb[0].mxu0
    %v642 = vadd.f32 0.0, %v641
    %v643 = vpop.f32.mrb[0].mxu0
    %v644 = vpop.f32.mrb[0].mxu0
    %v645 = vadd.f32 0.0, %v644
    %v646 = vpop.f32.mrb[0].mxu0
    %647 = vmatprep.mubr.bf16.mxu0 0
    %648 = vmatmul.mubr.bf16.gmra.mrb[0].mxu0 %v594
    %v649 = vpop.f32.mrb[0].mxu0
    %v650 = vadd.f32 0.0, %v649
    %v651 = vpop.f32.mrb[0].mxu0
    %v652 = vpop.f32.mrb[0].mxu0
    %v653 = vadd.f32 0.0, %v652
    %v654 = vpop.f32.mrb[0].mxu0
    %655 = vmatprep.mubr.bf16.mxu0 0
    %656 = vmatmul.mubr.bf16.gmra.mrb[0].mxu0 %v597
    %v657 = vpop.f32.mrb[0].mxu0
    %v658 = vadd.f32 0.0, %v657
    %v659 = vpop.f32.mrb[0].mxu0
    %v660 = vpop.f32.mrb[0].mxu0
    %v661 = vadd.f32 0.0, %v660
    %v662 = vpop.f32.mrb[0].mxu0
    %663 = vdwg.mxu0
    %v664 = vld [vmem:[%s10] sm:$0x1]
    %v665 = vld [vmem:[%s11] sm:$0x1]
    %v666 = vsel %vm586, %v634, 0.0
    %667 = vadd.xlane.f32.xlu0 %v666
    %v668 = vpop.xlane.xlu0 %667
    %v669 = vsel %vm586, %v637, 0.0
    %670 = vadd.xlane.f32.xlu0 %v669
    %v671 = vpop.xlane.xlu0 %670
    %v672 = vsel %vm586, %v642, 0.0
    %673 = vadd.xlane.f32.xlu0 %v672
    %v674 = vpop.xlane.xlu0 %673
    %v675 = vsel %vm586, %v645, 0.0
    %676 = vadd.xlane.f32.xlu0 %v675
    %v677 = vpop.xlane.xlu0 %676
    %v678 = vsel %vm586, %v650, 0.0
    %679 = vadd.xlane.f32.xlu0 %v678
    %v680 = vpop.xlane.xlu0 %679
    %v681 = vsel %vm586, %v653, 0.0
    %682 = vadd.xlane.f32.xlu0 %v681
    %v683 = vpop.xlane.xlu0 %682
    %v684 = vsel %vm586, %v658, 0.0
    %685 = vadd.xlane.f32.xlu0 %v684
    %v686 = vpop.xlane.xlu0 %685
    %v687 = vsel %vm586, %v661, 0.0
    %688 = vadd.xlane.f32.xlu0 %v687
    %v689 = vpop.xlane.xlu0 %688
    %v690 = vrcp.pop 32.0
    %v691 = vmul.f32 %v668, %v690
    %v692 = vmul.f32 %v671, %v690
    %v693 = vmul.f32 %v674, %v690
    %v694 = vmul.f32 %v677, %v690
    %v695 = vmul.f32 %v680, %v690
    %v696 = vmul.f32 %v683, %v690
    %v697 = vmul.f32 %v686, %v690
    %v698 = vmul.f32 %v689, %v690
    %v699 = vmul.f32 %v634, %v634
    %v700 = vmul.f32 %v637, %v637
    %v701 = vmul.f32 %v642, %v642
    %v702 = vmul.f32 %v645, %v645
    %v703 = vmul.f32 %v650, %v650
    %v704 = vmul.f32 %v653, %v653
    %v705 = vmul.f32 %v658, %v658
    %v706 = vmul.f32 %v661, %v661
    %v707 = vsel %vm586, %v699, 0.0
    %708 = vadd.xlane.f32.xlu0 %v707
    %v709 = vpop.xlane.xlu0 %708
    %v710 = vsel %vm586, %v700, 0.0
    %711 = vadd.xlane.f32.xlu0 %v710
    %v712 = vpop.xlane.xlu0 %711
    %v713 = vsel %vm586, %v701, 0.0
    %714 = vadd.xlane.f32.xlu0 %v713
    %v715 = vpop.xlane.xlu0 %714
    %v716 = vsel %vm586, %v702, 0.0
    %717 = vadd.xlane.f32.xlu0 %v716
    %v718 = vpop.xlane.xlu0 %717
    %v719 = vsel %vm586, %v703, 0.0
    %720 = vadd.xlane.f32.xlu0 %v719
    %v721 = vpop.xlane.xlu0 %720
    %v722 = vsel %vm586, %v704, 0.0
    %723 = vadd.xlane.f32.xlu0 %v722
    %v724 = vpop.xlane.xlu0 %723
    %v725 = vsel %vm586, %v705, 0.0
    %726 = vadd.xlane.f32.xlu0 %v725
    %v727 = vpop.xlane.xlu0 %726
    %v728 = vsel %vm586, %v706, 0.0
    %729 = vadd.xlane.f32.xlu0 %v728
    %v730 = vpop.xlane.xlu0 %729
    %v731 = vmul.f32 %v709, %v690
    %v732 = vmul.f32 %v712, %v690
    %v733 = vmul.f32 %v715, %v690
    %v734 = vmul.f32 %v718, %v690
    %v735 = vmul.f32 %v721, %v690
    %v736 = vmul.f32 %v724, %v690
    %v737 = vmul.f32 %v727, %v690
    %v738 = vmul.f32 %v730, %v690
    %v739 = vmul.f32 %v691, %v691
    %v740 = vmul.f32 %v692, %v692
    %v741 = vmul.f32 %v693, %v693
    %v742 = vmul.f32 %v694, %v694
    %v743 = vmul.f32 %v695, %v695
    %v744 = vmul.f32 %v696, %v696
    %v745 = vmul.f32 %v697, %v697
    %v746 = vmul.f32 %v698, %v698
    %v747 = vsub.f32 %v731, %v739
    %v748 = vsub.f32 %v732, %v740
    %v749 = vsub.f32 %v733, %v741
    %v750 = vsub.f32 %v734, %v742
    %v751 = vsub.f32 %v735, %v743
    %v752 = vsub.f32 %v736, %v744
    %v753 = vsub.f32 %v737, %v745
    %v754 = vsub.f32 %v738, %v746
    %v755 = vmax.f32 %v747, 0.0
    %v756 = vmax.f32 %v748, 0.0
    %v757 = vmax.f32 %v749, 0.0
    %v758 = vmax.f32 %v750, 0.0
    %v759 = vmax.f32 %v751, 0.0
    %v760 = vmax.f32 %v752, 0.0
    %v761 = vmax.f32 %v753, 0.0
    %v762 = vmax.f32 %v754, 0.0
    %v763 = vsub.f32 %v634, %v691
    %v764 = vsub.f32 %v637, %v692
    %v765 = vsub.f32 %v642, %v693
    %v766 = vsub.f32 %v645, %v694
    %v767 = vsub.f32 %v650, %v695
    %v768 = vsub.f32 %v653, %v696
    %v769 = vsub.f32 %v658, %v697
    %v770 = vsub.f32 %v661, %v698
    %v771 = vadd.f32 %v755, 1e-05
    %v772 = vadd.f32 %v756, 1e-05
    %v773 = vadd.f32 %v757, 1e-05
    %v774 = vadd.f32 %v758, 1e-05
    %v775 = vadd.f32 %v759, 1e-05
    %v776 = vadd.f32 %v760, 1e-05
    %v777 = vadd.f32 %v761, 1e-05
    %v778 = vadd.f32 %v762, 1e-05
    %v779 = vrsqrt.pop %v771
    %v780 = vrsqrt.pop %v772
    %v781 = vrsqrt.pop %v773
    %v782 = vrsqrt.pop %v774
    %v783 = vrsqrt.pop %v775
    %v784 = vrsqrt.pop %v776
    %v785 = vrsqrt.pop %v777
    %v786 = vrsqrt.pop %v778
    %v788 = vlaneseq
    %v789 = vshrl.u32 %v788, 7
    %v790 = vsub.s32 0, %v789
    %v791 = vrot.slane %v664, %v790
    %v793 = vmul.f32 %v779, %v791
    %v794 = vmul.f32 %v780, %v791
    %v795 = vmul.f32 %v781, %v791
    %v796 = vmul.f32 %v782, %v791
    %v797 = vmul.f32 %v783, %v791
    %v798 = vmul.f32 %v784, %v791
    %v799 = vmul.f32 %v785, %v791
    %v800 = vmul.f32 %v786, %v791
    %v801 = vmul.f32 %v763, %v793
    %v802 = vmul.f32 %v764, %v794
    %v803 = vmul.f32 %v765, %v795
    %v804 = vmul.f32 %v766, %v796
    %v805 = vmul.f32 %v767, %v797
    %v806 = vmul.f32 %v768, %v798
    %v807 = vmul.f32 %v769, %v799
    %v808 = vmul.f32 %v770, %v800
    %v810 = vlaneseq
    %v811 = vshrl.u32 %v810, 7
    %v812 = vsub.s32 0, %v811
    %v813 = vrot.slane %v665, %v812
    %v815 = vadd.f32 %v801, %v813
    %v816 = vadd.f32 %v802, %v813
    %v817 = vadd.f32 %v803, %v813
    %v818 = vadd.f32 %v804, %v813
    %v819 = vadd.f32 %v805, %v813
    %v820 = vadd.f32 %v806, %v813
    %v821 = vadd.f32 %v807, %v813
    %v822 = vadd.f32 %v808, %v813
    %v823 = vmax.f32 %v815, 0.0
    %v824 = vmax.f32 %v816, 0.0
    %v825 = vmax.f32 %v817, 0.0
    %v826 = vmax.f32 %v818, 0.0
    %v827 = vmax.f32 %v819, 0.0
    %v828 = vmax.f32 %v820, 0.0
    %v829 = vmax.f32 %v821, 0.0
    %v830 = vmax.f32 %v822, 0.0
    %v831 = vld [vmem:[%s15] sm:$0xf]
    %v832 = vld [vmem:[%s15 + $0x4] sm:$0xf]
    %v833 = vld [vmem:[%s15 + $0x8] sm:$0xf]
    %v834 = vld [vmem:[%s15 + $0xc] sm:$0xf]
    %v835 = vpack.c.bf16 %v824, %v823
    %v836 = vpack.c.bf16 %v826, %v825
    %v837 = vpack.c.bf16 %v828, %v827
    %v838 = vpack.c.bf16 %v830, %v829
    %v843 = vunpack.c.l.b16 %v831
    %v844 = vunpack.c.l.b16 %v832
    %v845 = vunpack.c.l.b16 %v833
    %v846 = vunpack.c.l.b16 %v834
    %v847 = vpack.c.b16 %v844, %v843
    %v848 = vpack.c.b16 %v846, %v845
    %v852 = vsel %vm586, %v835, 0
    %v855 = vsel %vm586, %v836, 0
    %v858 = vsel %vm586, %v837, 0
    %v861 = vsel %vm586, %v838, 0
    %863 = vmatprep.subr.bf16.mxu0 0
    %864 = vmatpush1.bf16.msra.mxu0 %v847
    %865 = vmatprep.subr.bf16.mxu0 0
    %866 = vmatpush1.bf16.msra.mxu0 %v848
    %867 = vmatprep.subr.bf16.mxu0 0
    %868 = vmatpush1.bf16.msra.mxu0 0
    %869 = vmatprep.subr.bf16.mxu0 0
    %870 = vmatpush1.bf16.msra.mxu0 0
    %871 = vmatprep.subr.bf16.mxu0 0
    %872 = vmatpush1.bf16.msra.mxu0 0
    %873 = vmatprep.subr.bf16.mxu0 0
    %874 = vmatpush1.bf16.msra.mxu0 0
    %875 = vmatprep.subr.bf16.mxu0 0
    %876 = vmatpush1.bf16.msra.mxu0 0
    %877 = vmatprep.subr.bf16.mxu0 0
    %878 = vmatpush1.bf16.msra.mxu0 0
    %879 = vmatprep.subr.bf16.mxu0 0
    %880 = vmatpush1.bf16.msra.mxu0 0
    %881 = vmatprep.subr.bf16.mxu0 0
    %882 = vmatpush1.bf16.msra.mxu0 0
    %883 = vmatprep.subr.bf16.mxu0 0
    %884 = vmatpush1.bf16.msra.mxu0 0
    %885 = vmatprep.subr.bf16.mxu0 0
    %886 = vmatpush1.bf16.msra.mxu0 0
    %887 = vmatprep.subr.bf16.mxu0 0
    %888 = vmatpush1.bf16.msra.mxu0 0
    %889 = vmatprep.subr.bf16.mxu0 0
    %890 = vmatpush1.bf16.msra.mxu0 0
    %891 = vmatprep.subr.bf16.mxu0 0
    %892 = vmatpush1.bf16.msra.mxu0 0
    %893 = vmatprep.subr.bf16.mxu0 0
    %894 = vmatpush1.bf16.msra.mxu0 0
    %895 = vmatprep.mubr.bf16.mxu0 0
    %896 = vmatmul.mubr.bf16.gmra.mrb[0].mxu0 %v852
    %v897 = vpop.f32.mrb[0].mxu0
    %v898 = vadd.f32 0.0, %v897
    %v899 = vpop.f32.mrb[0].mxu0
    %v900 = vpop.f32.mrb[0].mxu0
    %v901 = vadd.f32 0.0, %v900
    %v902 = vpop.f32.mrb[0].mxu0
    %903 = vmatprep.mubr.bf16.mxu0 0
    %904 = vmatmul.mubr.bf16.gmra.mrb[0].mxu0 %v855
    %v905 = vpop.f32.mrb[0].mxu0
    %v906 = vadd.f32 0.0, %v905
    %v907 = vpop.f32.mrb[0].mxu0
    %v908 = vpop.f32.mrb[0].mxu0
    %v909 = vadd.f32 0.0, %v908
    %v910 = vpop.f32.mrb[0].mxu0
    %911 = vmatprep.mubr.bf16.mxu0 0
    %912 = vmatmul.mubr.bf16.gmra.mrb[0].mxu0 %v858
    %v913 = vpop.f32.mrb[0].mxu0
    %v914 = vadd.f32 0.0, %v913
    %v915 = vpop.f32.mrb[0].mxu0
    %v916 = vpop.f32.mrb[0].mxu0
    %v917 = vadd.f32 0.0, %v916
    %v918 = vpop.f32.mrb[0].mxu0
    %919 = vmatprep.mubr.bf16.mxu0 0
    %920 = vmatmul.mubr.bf16.gmra.mrb[0].mxu0 %v861
    %v921 = vpop.f32.mrb[0].mxu0
    %v922 = vadd.f32 0.0, %v921
    %v923 = vpop.f32.mrb[0].mxu0
    %v924 = vpop.f32.mrb[0].mxu0
    %v925 = vadd.f32 0.0, %v924
    %v926 = vpop.f32.mrb[0].mxu0
    %927 = vdwg.mxu0
    %v928 = vld [vmem:[#allocation3] sm:$0xff]
    %v930 = vcombine.high %v928, %v928
    %v932 = vunpack.c.l.s4 1966171168
    %v933 = vunpack.c.0.s8 %v932
    %v934 = vlaneseq
    %v935 = vshrl.u32 %v934, 7
    %v936 = vsub.s32 %v933, %v935
    %v937 = vrot.slane %v928, %v936
    %v939 = vunpack.c.l.s4 1966171168
    %v940 = vunpack.c.0.s8 %v939
    %v941 = vlaneseq
    %v942 = vshrl.u32 %v941, 7
    %v943 = vsub.s32 %v940, %v942
    %v944 = vrot.slane %v930, %v943
    %v945 = vcombine.high %v937, %v937
    %v946 = vcombine.high %v944, %v944
    %v948 = vunpack.c.l.s4 1966171168
    %v949 = vunpack.c.0.s8 %v948
    %v950 = vlaneseq
    %v951 = vshrl.u32 %v950, 7
    %v952 = vsub.s32 %v949, %v951
    %v953 = vrot.slane %v937, %v952
    %v955 = vunpack.c.l.s4 1966171168
    %v956 = vunpack.c.0.s8 %v955
    %v957 = vlaneseq
    %v958 = vshrl.u32 %v957, 7
    %v959 = vsub.s32 %v956, %v958
    %v960 = vrot.slane %v944, %v959
    %v962 = vunpack.c.l.s4 1966171168
    %v963 = vunpack.c.0.s8 %v962
    %v964 = vlaneseq
    %v965 = vshrl.u32 %v964, 7
    %v966 = vsub.s32 %v963, %v965
    %v967 = vrot.slane %v945, %v966
    %v969 = vunpack.c.l.s4 1966171168
    %v970 = vunpack.c.0.s8 %v969
    %v971 = vlaneseq
    %v972 = vshrl.u32 %v971, 7
    %v973 = vsub.s32 %v970, %v972
    %v974 = vrot.slane %v946, %v973
    %v975 = vcombine.high %v953, %v953
    %v976 = vcombine.high %v960, %v960
    %v977 = vcombine.high %v967, %v967
    %v978 = vcombine.high %v974, %v974
    %v979 = vlaneseq
    %v980 = vshrl.u32 %v979, 7
    %v981 = vsub.s32 0, %v980
    %v982 = vrot.slane %v953, %v981
    %v983 = vlaneseq
    %v984 = vshrl.u32 %v983, 7
    %v985 = vsub.s32 0, %v984
    %v986 = vrot.slane %v967, %v985
    %v987 = vlaneseq
    %v988 = vshrl.u32 %v987, 7
    %v989 = vsub.s32 0, %v988
    %v990 = vrot.slane %v975, %v989
    %v991 = vlaneseq
    %v992 = vshrl.u32 %v991, 7
    %v993 = vsub.s32 0, %v992
    %v994 = vrot.slane %v977, %v993
    %v995 = vlaneseq
    %v996 = vshrl.u32 %v995, 7
    %v997 = vsub.s32 0, %v996
    %v998 = vrot.slane %v960, %v997
    %v999 = vlaneseq
    %v1000 = vshrl.u32 %v999, 7
    %v1001 = vsub.s32 0, %v1000
    %v1002 = vrot.slane %v974, %v1001
    %v1003 = vlaneseq
    %v1004 = vshrl.u32 %v1003, 7
    %v1005 = vsub.s32 0, %v1004
    %v1006 = vrot.slane %v976, %v1005
    %v1007 = vlaneseq
    %v1008 = vshrl.u32 %v1007, 7
    %v1009 = vsub.s32 0, %v1008
    %v1010 = vrot.slane %v978, %v1009
    %v1019 = vadd.f32 %v898, %v982
    %v1020 = vadd.f32 %v901, %v986
    %v1021 = vadd.f32 %v906, %v990
    %v1022 = vadd.f32 %v909, %v994
    %v1023 = vadd.f32 %v914, %v998
    %v1024 = vadd.f32 %v917, %v1002
    %v1025 = vadd.f32 %v922, %v1006
    %v1026 = vadd.f32 %v925, %v1010
    %v1027 = vld [vmem:[%s2] sm:$0xff]
    %v1028 = vld [vmem:[%s17] sm:$0xf]
    %v1029 = vld [vmem:[%s17 + $0x4] sm:$0xf]
    %v1030 = vld [vmem:[%s17 + $0x8] sm:$0xf]
    %v1031 = vld [vmem:[%s17 + $0xc] sm:$0xf]
    %v1032 = vpack.c.bf16 %v1027, %v1027
    %v1037 = vunpack.c.l.b16 %v1028
    %v1038 = vunpack.c.l.b16 %v1029
    %v1039 = vunpack.c.l.b16 %v1030
    %v1040 = vunpack.c.l.b16 %v1031
    %v1041 = vpack.c.b16 %v1038, %v1037
    %v1042 = vpack.c.b16 %v1040, %v1039
    %v1046 = vsel %vm586, %v1032, 0
    %1048 = vmatprep.subr.bf16.mxu0 0
    %1049 = vmatpush1.bf16.msra.mxu0 %v1041
    %1050 = vmatprep.subr.bf16.mxu0 0
    %1051 = vmatpush1.bf16.msra.mxu0 %v1042
    %1052 = vmatprep.subr.bf16.mxu0 0
    %1053 = vmatpush1.bf16.msra.mxu0 0
    %1054 = vmatprep.subr.bf16.mxu0 0
    %1055 = vmatpush1.bf16.msra.mxu0 0
    %1056 = vmatprep.subr.bf16.mxu0 0
    %1057 = vmatpush1.bf16.msra.mxu0 0
    %1058 = vmatprep.subr.bf16.mxu0 0
    %1059 = vmatpush1.bf16.msra.mxu0 0
    %1060 = vmatprep.subr.bf16.mxu0 0
    %1061 = vmatpush1.bf16.msra.mxu0 0
    %1062 = vmatprep.subr.bf16.mxu0 0
    %1063 = vmatpush1.bf16.msra.mxu0 0
    %1064 = vmatprep.subr.bf16.mxu0 0
    %1065 = vmatpush1.bf16.msra.mxu0 0
    %1066 = vmatprep.subr.bf16.mxu0 0
    %1067 = vmatpush1.bf16.msra.mxu0 0
    %1068 = vmatprep.subr.bf16.mxu0 0
    %1069 = vmatpush1.bf16.msra.mxu0 0
    %1070 = vmatprep.subr.bf16.mxu0 0
    %1071 = vmatpush1.bf16.msra.mxu0 0
    %1072 = vmatprep.subr.bf16.mxu0 0
    %1073 = vmatpush1.bf16.msra.mxu0 0
    %1074 = vmatprep.subr.bf16.mxu0 0
    %1075 = vmatpush1.bf16.msra.mxu0 0
    %1076 = vmatprep.subr.bf16.mxu0 0
    %1077 = vmatpush1.bf16.msra.mxu0 0
    %1078 = vmatprep.subr.bf16.mxu0 0
    %1079 = vmatpush1.bf16.msra.mxu0 0
    %1080 = vmatprep.mubr.bf16.mxu0 0
    %1081 = vmatmul.mubr.bf16.gmra.mrb[0].mxu0 %v1046
    %v1082 = vpop.f32.mrb[0].mxu0
    %v1083 = vadd.f32 0.0, %v1082
    %v1084 = vpop.f32.mrb[0].mxu0
    %v1085 = vpop.f32.mrb[0].mxu0
    %v1086 = vpop.f32.mrb[0].mxu0
    %1087 = vdwg.mxu0
    %v1088 = vadd.f32 %v1019, %v1083
    %v1089 = vadd.f32 %v1020, %v1083
    %v1090 = vadd.f32 %v1021, %v1083
    %v1091 = vadd.f32 %v1022, %v1083
    %v1092 = vadd.f32 %v1023, %v1083
    %v1093 = vadd.f32 %v1024, %v1083
    %v1094 = vadd.f32 %v1025, %v1083
    %v1095 = vadd.f32 %v1026, %v1083
    %v1096 = vld [vmem:[%s18] sm:$0x1]
    %v1097 = vld [vmem:[%s19] sm:$0x1]
    %v1098 = vsel %vm586, %v1088, 0.0
    %1099 = vadd.xlane.f32.xlu0 %v1098
    %v1100 = vpop.xlane.xlu0 %1099
    %v1101 = vsel %vm586, %v1089, 0.0
    %1102 = vadd.xlane.f32.xlu0 %v1101
    %v1103 = vpop.xlane.xlu0 %1102
    %v1104 = vsel %vm586, %v1090, 0.0
    %1105 = vadd.xlane.f32.xlu0 %v1104
    %v1106 = vpop.xlane.xlu0 %1105
    %v1107 = vsel %vm586, %v1091, 0.0
    %1108 = vadd.xlane.f32.xlu0 %v1107
    %v1109 = vpop.xlane.xlu0 %1108
    %v1110 = vsel %vm586, %v1092, 0.0
    %1111 = vadd.xlane.f32.xlu0 %v1110
    %v1112 = vpop.xlane.xlu0 %1111
    %v1113 = vsel %vm586, %v1093, 0.0
    %1114 = vadd.xlane.f32.xlu0 %v1113
    %v1115 = vpop.xlane.xlu0 %1114
    %v1116 = vsel %vm586, %v1094, 0.0
    %1117 = vadd.xlane.f32.xlu0 %v1116
    %v1118 = vpop.xlane.xlu0 %1117
    %v1119 = vsel %vm586, %v1095, 0.0
    %1120 = vadd.xlane.f32.xlu0 %v1119
    %v1121 = vpop.xlane.xlu0 %1120
    %v1122 = vmul.f32 %v1100, %v690
    %v1123 = vmul.f32 %v1103, %v690
    %v1124 = vmul.f32 %v1106, %v690
    %v1125 = vmul.f32 %v1109, %v690
    %v1126 = vmul.f32 %v1112, %v690
    %v1127 = vmul.f32 %v1115, %v690
    %v1128 = vmul.f32 %v1118, %v690
    %v1129 = vmul.f32 %v1121, %v690
    %v1130 = vmul.f32 %v1088, %v1088
    %v1131 = vmul.f32 %v1089, %v1089
    %v1132 = vmul.f32 %v1090, %v1090
    %v1133 = vmul.f32 %v1091, %v1091
    %v1134 = vmul.f32 %v1092, %v1092
    %v1135 = vmul.f32 %v1093, %v1093
    %v1136 = vmul.f32 %v1094, %v1094
    %v1137 = vmul.f32 %v1095, %v1095
    %v1138 = vsel %vm586, %v1130, 0.0
    %1139 = vadd.xlane.f32.xlu0 %v1138
    %v1140 = vpop.xlane.xlu0 %1139
    %v1141 = vsel %vm586, %v1131, 0.0
    %1142 = vadd.xlane.f32.xlu0 %v1141
    %v1143 = vpop.xlane.xlu0 %1142
    %v1144 = vsel %vm586, %v1132, 0.0
    %1145 = vadd.xlane.f32.xlu0 %v1144
    %v1146 = vpop.xlane.xlu0 %1145
    %v1147 = vsel %vm586, %v1133, 0.0
    %1148 = vadd.xlane.f32.xlu0 %v1147
    %v1149 = vpop.xlane.xlu0 %1148
    %v1150 = vsel %vm586, %v1134, 0.0
    %1151 = vadd.xlane.f32.xlu0 %v1150
    %v1152 = vpop.xlane.xlu0 %1151
    %v1153 = vsel %vm586, %v1135, 0.0
    %1154 = vadd.xlane.f32.xlu0 %v1153
    %v1155 = vpop.xlane.xlu0 %1154
    %v1156 = vsel %vm586, %v1136, 0.0
    %1157 = vadd.xlane.f32.xlu0 %v1156
    %v1158 = vpop.xlane.xlu0 %1157
    %v1159 = vsel %vm586, %v1137, 0.0
    %1160 = vadd.xlane.f32.xlu0 %v1159
    %v1161 = vpop.xlane.xlu0 %1160
    %v1162 = vmul.f32 %v1140, %v690
    %v1163 = vmul.f32 %v1143, %v690
    %v1164 = vmul.f32 %v1146, %v690
    %v1165 = vmul.f32 %v1149, %v690
    %v1166 = vmul.f32 %v1152, %v690
    %v1167 = vmul.f32 %v1155, %v690
    %v1168 = vmul.f32 %v1158, %v690
    %v1169 = vmul.f32 %v1161, %v690
    %v1170 = vmul.f32 %v1122, %v1122
    %v1171 = vmul.f32 %v1123, %v1123
    %v1172 = vmul.f32 %v1124, %v1124
    %v1173 = vmul.f32 %v1125, %v1125
    %v1174 = vmul.f32 %v1126, %v1126
    %v1175 = vmul.f32 %v1127, %v1127
    %v1176 = vmul.f32 %v1128, %v1128
    %v1177 = vmul.f32 %v1129, %v1129
    %v1178 = vsub.f32 %v1162, %v1170
    %v1179 = vsub.f32 %v1163, %v1171
    %v1180 = vsub.f32 %v1164, %v1172
    %v1181 = vsub.f32 %v1165, %v1173
    %v1182 = vsub.f32 %v1166, %v1174
    %v1183 = vsub.f32 %v1167, %v1175
    %v1184 = vsub.f32 %v1168, %v1176
    %v1185 = vsub.f32 %v1169, %v1177
    %v1186 = vmax.f32 %v1178, 0.0
    %v1187 = vmax.f32 %v1179, 0.0
    %v1188 = vmax.f32 %v1180, 0.0
    %v1189 = vmax.f32 %v1181, 0.0
    %v1190 = vmax.f32 %v1182, 0.0
    %v1191 = vmax.f32 %v1183, 0.0
    %v1192 = vmax.f32 %v1184, 0.0
    %v1193 = vmax.f32 %v1185, 0.0
    %v1194 = vsub.f32 %v1088, %v1122
    %v1195 = vsub.f32 %v1089, %v1123
    %v1196 = vsub.f32 %v1090, %v1124
    %v1197 = vsub.f32 %v1091, %v1125
    %v1198 = vsub.f32 %v1092, %v1126
    %v1199 = vsub.f32 %v1093, %v1127
    %v1200 = vsub.f32 %v1094, %v1128
    %v1201 = vsub.f32 %v1095, %v1129
    %v1202 = vadd.f32 %v1186, 1e-05
    %v1203 = vadd.f32 %v1187, 1e-05
    %v1204 = vadd.f32 %v1188, 1e-05
    %v1205 = vadd.f32 %v1189, 1e-05
    %v1206 = vadd.f32 %v1190, 1e-05
    %v1207 = vadd.f32 %v1191, 1e-05
    %v1208 = vadd.f32 %v1192, 1e-05
    %v1209 = vadd.f32 %v1193, 1e-05
    %v1210 = vrsqrt.pop %v1202
    %v1211 = vrsqrt.pop %v1203
    %v1212 = vrsqrt.pop %v1204
    %v1213 = vrsqrt.pop %v1205
    %v1214 = vrsqrt.pop %v1206
    %v1215 = vrsqrt.pop %v1207
    %v1216 = vrsqrt.pop %v1208
    %v1217 = vrsqrt.pop %v1209
    %v1219 = vlaneseq
    %v1220 = vshrl.u32 %v1219, 7
    %v1221 = vsub.s32 0, %v1220
    %v1222 = vrot.slane %v1096, %v1221
    %v1224 = vmul.f32 %v1210, %v1222
    %v1225 = vmul.f32 %v1211, %v1222
    %v1226 = vmul.f32 %v1212, %v1222
    %v1227 = vmul.f32 %v1213, %v1222
    %v1228 = vmul.f32 %v1214, %v1222
    %v1229 = vmul.f32 %v1215, %v1222
    %v1230 = vmul.f32 %v1216, %v1222
    %v1231 = vmul.f32 %v1217, %v1222
    %v1232 = vmul.f32 %v1194, %v1224
    %v1233 = vmul.f32 %v1195, %v1225
    %v1234 = vmul.f32 %v1196, %v1226
    %v1235 = vmul.f32 %v1197, %v1227
    %v1236 = vmul.f32 %v1198, %v1228
    %v1237 = vmul.f32 %v1199, %v1229
    %v1238 = vmul.f32 %v1200, %v1230
    %v1239 = vmul.f32 %v1201, %v1231
    %v1241 = vlaneseq
    %v1242 = vshrl.u32 %v1241, 7
    %v1243 = vsub.s32 0, %v1242
    %v1244 = vrot.slane %v1097, %v1243
    %v1246 = vadd.f32 %v1232, %v1244
    %v1247 = vadd.f32 %v1233, %v1244
    %v1248 = vadd.f32 %v1234, %v1244
    %v1249 = vadd.f32 %v1235, %v1244
    %v1250 = vadd.f32 %v1236, %v1244
    %v1251 = vadd.f32 %v1237, %v1244
    %v1252 = vadd.f32 %v1238, %v1244
    %v1253 = vadd.f32 %v1239, %v1244
    %v1254 = vmax.f32 %v1246, 0.0
    %v1255 = vmax.f32 %v1247, 0.0
    %v1256 = vmax.f32 %v1248, 0.0
    %v1257 = vmax.f32 %v1249, 0.0
    %v1258 = vmax.f32 %v1250, 0.0
    %v1259 = vmax.f32 %v1251, 0.0
    %v1260 = vmax.f32 %v1252, 0.0
    %v1261 = vmax.f32 %v1253, 0.0
    %v1262 = vld [vmem:[#allocation2] sm:$0xff]
    %v1263 = vlaneseq
    %v1264 = vshrl.u32 %v1263, 7
    %v1265 = vsub.s32 0, %v1264
    %v1266 = vrot.slane %v397, %v1265
    %1268 = vbcast.lane.b32.xlu0 %v1266, 256
    %v1269 = vpop.permute.xlu0 %1268
    %v1270 = vlaneseq
    %v1271 = vshrl.u32 %v1270, 7
    %v1272 = vsub.s32 1, %v1271
    %v1273 = vrot.slane %v397, %v1272
    %1275 = vbcast.lane.b32.xlu0 %v1273, 256
    %v1276 = vpop.permute.xlu0 %1275
    %v1277 = vlaneseq
    %v1278 = vshrl.u32 %v1277, 7
    %v1279 = vsub.s32 2, %v1278
    %v1280 = vrot.slane %v397, %v1279
    %1282 = vbcast.lane.b32.xlu0 %v1280, 256
    %v1283 = vpop.permute.xlu0 %1282
    %v1284 = vlaneseq
    %v1285 = vshrl.u32 %v1284, 7
    %v1286 = vsub.s32 3, %v1285
    %v1287 = vrot.slane %v397, %v1286
    %1289 = vbcast.lane.b32.xlu0 %v1287, 256
    %v1290 = vpop.permute.xlu0 %1289
    %v1291 = vlaneseq
    %v1292 = vshrl.u32 %v1291, 7
    %v1293 = vsub.s32 4, %v1292
    %v1294 = vrot.slane %v397, %v1293
    %1296 = vbcast.lane.b32.xlu0 %v1294, 256
    %v1297 = vpop.permute.xlu0 %1296
    %v1298 = vlaneseq
    %v1299 = vshrl.u32 %v1298, 7
    %v1300 = vsub.s32 5, %v1299
    %v1301 = vrot.slane %v397, %v1300
    %1303 = vbcast.lane.b32.xlu0 %v1301, 256
    %v1304 = vpop.permute.xlu0 %1303
    %v1305 = vlaneseq
    %v1306 = vshrl.u32 %v1305, 7
    %v1307 = vsub.s32 6, %v1306
    %v1308 = vrot.slane %v397, %v1307
    %1310 = vbcast.lane.b32.xlu0 %v1308, 256
    %v1311 = vpop.permute.xlu0 %1310
    %v1312 = vlaneseq
    %v1313 = vshrl.u32 %v1312, 7
    %v1314 = vsub.s32 7, %v1313
    %v1315 = vrot.slane %v397, %v1314
    %1317 = vbcast.lane.b32.xlu0 %v1315, 256
    %v1318 = vpop.permute.xlu0 %1317
    %v1319 = vmul.f32 %v1254, %v1269
    %v1320 = vmul.f32 %v1255, %v1276
    %v1321 = vmul.f32 %v1256, %v1283
    %v1322 = vmul.f32 %v1257, %v1290
    %v1323 = vmul.f32 %v1258, %v1297
    %v1324 = vmul.f32 %v1259, %v1304
    %v1325 = vmul.f32 %v1260, %v1311
    %v1326 = vmul.f32 %v1261, %v1318
    %v1327 = vsel %vm586, %v1319, 0.0
    %v1328 = vrot.slane %v1327, 4
    %v1329 = vadd.f32 %v1327, %v1328
    %v1330 = vrot.slane %v1329, 2
    %v1331 = vadd.f32 %v1329, %v1330
    %v1332 = vrot.slane %v1331, 1
    %v1333 = vadd.f32 %v1331, %v1332
    %v1334 = vsel %vm586, %v1320, 0.0
    %v1335 = vrot.slane %v1334, 4
    %v1336 = vadd.f32 %v1334, %v1335
    %v1337 = vrot.slane %v1336, 2
    %v1338 = vadd.f32 %v1336, %v1337
    %v1339 = vrot.slane %v1338, 1
    %v1340 = vadd.f32 %v1338, %v1339
    %v1341 = vsel %vm586, %v1321, 0.0
    %v1342 = vrot.slane %v1341, 4
    %v1343 = vadd.f32 %v1341, %v1342
    %v1344 = vrot.slane %v1343, 2
    %v1345 = vadd.f32 %v1343, %v1344
    %v1346 = vrot.slane %v1345, 1
    %v1347 = vadd.f32 %v1345, %v1346
    %v1348 = vsel %vm586, %v1322, 0.0
    %v1349 = vrot.slane %v1348, 4
    %v1350 = vadd.f32 %v1348, %v1349
    %v1351 = vrot.slane %v1350, 2
    %v1352 = vadd.f32 %v1350, %v1351
    %v1353 = vrot.slane %v1352, 1
    %v1354 = vadd.f32 %v1352, %v1353
    %v1355 = vsel %vm586, %v1323, 0.0
    %v1356 = vrot.slane %v1355, 4
    %v1357 = vadd.f32 %v1355, %v1356
    %v1358 = vrot.slane %v1357, 2
    %v1359 = vadd.f32 %v1357, %v1358
    %v1360 = vrot.slane %v1359, 1
    %v1361 = vadd.f32 %v1359, %v1360
    %v1362 = vsel %vm586, %v1324, 0.0
    %v1363 = vrot.slane %v1362, 4
    %v1364 = vadd.f32 %v1362, %v1363
    %v1365 = vrot.slane %v1364, 2
    %v1366 = vadd.f32 %v1364, %v1365
    %v1367 = vrot.slane %v1366, 1
    %v1368 = vadd.f32 %v1366, %v1367
    %v1369 = vsel %vm586, %v1325, 0.0
    %v1370 = vrot.slane %v1369, 4
    %v1371 = vadd.f32 %v1369, %v1370
    %v1372 = vrot.slane %v1371, 2
    %v1373 = vadd.f32 %v1371, %v1372
    %v1374 = vrot.slane %v1373, 1
    %v1375 = vadd.f32 %v1373, %v1374
    %v1376 = vsel %vm586, %v1326, 0.0
    %v1377 = vrot.slane %v1376, 4
    %v1378 = vadd.f32 %v1376, %v1377
    %v1379 = vrot.slane %v1378, 2
    %v1380 = vadd.f32 %v1378, %v1379
    %v1381 = vrot.slane %v1380, 1
    %v1382 = vadd.f32 %v1380, %v1381
    %vm1391 = vcmask 1041409
    %v1392 = vsel %vm1391, %v1340, %v1333
    %vm1393 = vcmask 1042434
    %v1394 = vsel %vm1393, %v1347, %v1392
    %vm1395 = vcmask 1043459
    %v1396 = vsel %vm1395, %v1354, %v1394
    %vm1397 = vcmask 1044484
    %v1398 = vsel %vm1397, %v1361, %v1396
    %vm1399 = vcmask 1045509
    %v1400 = vsel %vm1399, %v1368, %v1398
    %vm1401 = vcmask 1046534
    %v1402 = vsel %vm1401, %v1375, %v1400
    %vm1403 = vcmask 1047559
    %v1404 = vsel %vm1403, %v1382, %v1402
    %v1406 = vadd.f32 %v1262, %v1404
    %1407 = vst.msk [vmem:[#allocation2] sm:$0xff] %vm586, %v1406
  $region109: #{net_forward.2} parent=0 // pred_fallthru
    _
  // Predicated region
  $region110: #{net_forward.2} parent=0 // pred_check
    %p1408 = pneg %p83
  $region111: #{net_forward.2} parent=0 // pred_check_branch
    %1410 = sbr.rel (%p1408) target = $region113
  $region112: #{net_forward.2} parent=0 // pred_region
    %v1411 = vld [vmem:[#allocation4] sm:$0xff]
    %v1412 = vld [vmem:[#allocation2] sm:$0xff]
    %v1413 = vld [vmem:[%s20] sm:$0xf]
    %v1414 = vld [vmem:[%s20 + $0x4] sm:$0xf]
    %v1415 = vld [vmem:[%s20 + $0x8] sm:$0xf]
    %v1416 = vld [vmem:[%s20 + $0xc] sm:$0xf]
    %v1417 = vpack.c.bf16 %v1412, %v1412
    %v1422 = vunpack.c.l.b16 %v1413
    %v1423 = vunpack.c.l.b16 %v1414
    %v1424 = vunpack.c.l.b16 %v1415
    %v1425 = vunpack.c.l.b16 %v1416
    %v1426 = vpack.c.b16 %v1423, %v1422
    %v1427 = vpack.c.b16 %v1425, %v1424
    %vm1430 = vcmask 261120
    %v1432 = vsel %vm1430, %v1417, 0
    %1434 = vmatprep.subr.bf16.mxu0 0
    %1435 = vmatpush1.bf16.msra.mxu0 %v1426
    %1436 = vmatprep.subr.bf16.mxu0 0
    %1437 = vmatpush1.bf16.msra.mxu0 %v1427
    %1438 = vmatprep.subr.bf16.mxu0 0
    %1439 = vmatpush1.bf16.msra.mxu0 0
    %1440 = vmatprep.subr.bf16.mxu0 0
    %1441 = vmatpush1.bf16.msra.mxu0 0
    %1442 = vmatprep.subr.bf16.mxu0 0
    %1443 = vmatpush1.bf16.msra.mxu0 0
    %1444 = vmatprep.subr.bf16.mxu0 0
    %1445 = vmatpush1.bf16.msra.mxu0 0
    %1446 = vmatprep.subr.bf16.mxu0 0
    %1447 = vmatpush1.bf16.msra.mxu0 0
    %1448 = vmatprep.subr.bf16.mxu0 0
    %1449 = vmatpush1.bf16.msra.mxu0 0
    %1450 = vmatprep.subr.bf16.mxu0 0
    %1451 = vmatpush1.bf16.msra.mxu0 0
    %1452 = vmatprep.subr.bf16.mxu0 0
    %1453 = vmatpush1.bf16.msra.mxu0 0
    %1454 = vmatprep.subr.bf16.mxu0 0
    %1455 = vmatpush1.bf16.msra.mxu0 0
    %1456 = vmatprep.subr.bf16.mxu0 0
    %1457 = vmatpush1.bf16.msra.mxu0 0
    %1458 = vmatprep.subr.bf16.mxu0 0
    %1459 = vmatpush1.bf16.msra.mxu0 0
    %1460 = vmatprep.subr.bf16.mxu0 0
    %1461 = vmatpush1.bf16.msra.mxu0 0
    %1462 = vmatprep.subr.bf16.mxu0 0
    %1463 = vmatpush1.bf16.msra.mxu0 0
    %1464 = vmatprep.subr.bf16.mxu0 0
    %1465 = vmatpush1.bf16.msra.mxu0 0
    %1466 = vmatprep.mubr.bf16.mxu0 0
    %1467 = vmatmul.mubr.bf16.gmra.mrb[0].mxu0 %v1432
    %v1468 = vpop.f32.mrb[0].mxu0
    %v1469 = vadd.f32 0.0, %v1468
    %v1470 = vpop.f32.mrb[0].mxu0
    %v1471 = vpop.f32.mrb[0].mxu0
    %v1472 = vpop.f32.mrb[0].mxu0
    %1473 = vdwg.mxu0
    %v1474 = vadd.f32 %v1411, %v1469
    %v1475 = vld [vmem:[%s21] sm:$0x1]
    %v1476 = vld [vmem:[%s22] sm:$0x1]
    %v1477 = vsel %vm1430, %v1474, 0.0
    %1478 = vadd.xlane.f32.xlu0 %v1477
    %v1479 = vpop.xlane.xlu0 %1478
    %v1480 = vrcp.pop 32.0
    %v1481 = vmul.f32 %v1479, %v1480
    %v1482 = vmul.f32 %v1474, %v1474
    %v1483 = vsel %vm1430, %v1482, 0.0
    %1484 = vadd.xlane.f32.xlu0 %v1483
    %v1485 = vpop.xlane.xlu0 %1484
    %v1486 = vmul.f32 %v1485, %v1480
    %v1487 = vmul.f32 %v1481, %v1481
    %v1488 = vsub.f32 %v1486, %v1487
    %v1489 = vmax.f32 %v1488, 0.0
    %v1490 = vsub.f32 %v1474, %v1481
    %v1491 = vadd.f32 %v1489, 1e-05
    %v1492 = vrsqrt.pop %v1491
    %v1494 = vlaneseq
    %v1495 = vshrl.u32 %v1494, 7
    %v1496 = vsub.s32 0, %v1495
    %v1497 = vrot.slane %v1475, %v1496
    %v1499 = vmul.f32 %v1492, %v1497
    %v1500 = vmul.f32 %v1490, %v1499
    %v1502 = vlaneseq
    %v1503 = vshrl.u32 %v1502, 7
    %v1504 = vsub.s32 0, %v1503
    %v1505 = vrot.slane %v1476, %v1504
    %v1507 = vadd.f32 %v1500, %v1505
    %v1508 = vmax.f32 %v1507, 0.0
    %v1509 = vld [vmem:[%s23] sm:$0xf]
    %v1510 = vld [vmem:[%s23 + $0x4] sm:$0xf]
    %v1511 = vld [vmem:[%s23 + $0x8] sm:$0xf]
    %v1512 = vld [vmem:[%s23 + $0xc] sm:$0xf]
    %v1513 = vpack.c.bf16 %v1508, %v1508
    %v1518 = vunpack.c.l.b16 %v1509
    %v1519 = vunpack.c.l.b16 %v1510
    %v1520 = vunpack.c.l.b16 %v1511
    %v1521 = vunpack.c.l.b16 %v1512
    %v1522 = vpack.c.b16 %v1519, %v1518
    %v1523 = vpack.c.b16 %v1521, %v1520
    %v1527 = vsel %vm1430, %v1513, 0
    %1529 = vmatprep.subr.bf16.mxu0 0
    %1530 = vmatpush1.bf16.msra.mxu0 %v1522
    %1531 = vmatprep.subr.bf16.mxu0 0
    %1532 = vmatpush1.bf16.msra.mxu0 %v1523
    %1533 = vmatprep.subr.bf16.mxu0 0
    %1534 = vmatpush1.bf16.msra.mxu0 0
    %1535 = vmatprep.subr.bf16.mxu0 0
    %1536 = vmatpush1.bf16.msra.mxu0 0
    %1537 = vmatprep.subr.bf16.mxu0 0
    %1538 = vmatpush1.bf16.msra.mxu0 0
    %1539 = vmatprep.subr.bf16.mxu0 0
    %1540 = vmatpush1.bf16.msra.mxu0 0
    %1541 = vmatprep.subr.bf16.mxu0 0
    %1542 = vmatpush1.bf16.msra.mxu0 0
    %1543 = vmatprep.subr.bf16.mxu0 0
    %1544 = vmatpush1.bf16.msra.mxu0 0
    %1545 = vmatprep.subr.bf16.mxu0 0
    %1546 = vmatpush1.bf16.msra.mxu0 0
    %1547 = vmatprep.subr.bf16.mxu0 0
    %1548 = vmatpush1.bf16.msra.mxu0 0
    %1549 = vmatprep.subr.bf16.mxu0 0
    %1550 = vmatpush1.bf16.msra.mxu0 0
    %1551 = vmatprep.subr.bf16.mxu0 0
    %1552 = vmatpush1.bf16.msra.mxu0 0
    %1553 = vmatprep.subr.bf16.mxu0 0
    %1554 = vmatpush1.bf16.msra.mxu0 0
    %1555 = vmatprep.subr.bf16.mxu0 0
    %1556 = vmatpush1.bf16.msra.mxu0 0
    %1557 = vmatprep.subr.bf16.mxu0 0
    %1558 = vmatpush1.bf16.msra.mxu0 0
    %1559 = vmatprep.subr.bf16.mxu0 0
    %1560 = vmatpush1.bf16.msra.mxu0 0
    %1561 = vmatprep.mubr.bf16.mxu0 0
    %1562 = vmatmul.mubr.bf16.gmra.mrb[0].mxu0 %v1527
    %v1563 = vpop.f32.mrb[0].mxu0
    %v1564 = vadd.f32 0.0, %v1563
    %v1565 = vpop.f32.mrb[0].mxu0
    %v1566 = vpop.f32.mrb[0].mxu0
    %v1567 = vpop.f32.mrb[0].mxu0
    %1568 = vdwg.mxu0
    %v1569 = vld [vmem:[%s24] sm:$0x1]
    %v1570 = vld [vmem:[%s25] sm:$0x1]
    %v1571 = vsel %vm1430, %v1564, 0.0
    %1572 = vadd.xlane.f32.xlu0 %v1571
    %v1573 = vpop.xlane.xlu0 %1572
    %v1574 = vmul.f32 %v1573, %v1480
    %v1575 = vmul.f32 %v1564, %v1564
    %v1576 = vsel %vm1430, %v1575, 0.0
    %1577 = vadd.xlane.f32.xlu0 %v1576
    %v1578 = vpop.xlane.xlu0 %1577
    %v1579 = vmul.f32 %v1578, %v1480
    %v1580 = vmul.f32 %v1574, %v1574
    %v1581 = vsub.f32 %v1579, %v1580
    %v1582 = vmax.f32 %v1581, 0.0
    %v1583 = vsub.f32 %v1564, %v1574
    %v1584 = vadd.f32 %v1582, 1e-05
    %v1585 = vrsqrt.pop %v1584
    %v1587 = vlaneseq
    %v1588 = vshrl.u32 %v1587, 7
    %v1589 = vsub.s32 0, %v1588
    %v1590 = vrot.slane %v1569, %v1589
    %v1592 = vmul.f32 %v1585, %v1590
    %v1593 = vmul.f32 %v1583, %v1592
    %v1595 = vlaneseq
    %v1596 = vshrl.u32 %v1595, 7
    %v1597 = vsub.s32 0, %v1596
    %v1598 = vrot.slane %v1570, %v1597
    %v1600 = vadd.f32 %v1593, %v1598
    %v1601 = vld [vmem:[%s1] sm:$0xff]
    %v1602 = vadd.f32 %v1600, %v1601
    %1603 = vst.msk [vmem:[%s26] sm:$0xff] %vm1430, %v1602
  $region113: #{net_forward.2} parent=0 // pred_fallthru
    _
  // Predicated region
  $region114: #{net_forward.2} parent=0 // pred_check
    _
  $region115: #{net_forward.2} parent=0 // pred_check_branch
    %1605 = sbr.rel (0) target = $region117
  $region116: #{net_forward.2} parent=0 // pred_region
    _
  $region117: #{net_forward.2} parent=0 // pred_fallthru
    _
  // Predicated region
  $region118: #{net_forward.2} parent=0 // pred_check
    _
  $region119: #{net_forward.2} parent=0 // pred_check_branch
    %1607 = sbr.rel (0) target = $region121
  $region120: #{net_forward.2} parent=0 // pred_region
    _
  $region121: #{net_forward.2} parent=0 // pred_fallthru
    _

</llo_original>
